<compile_context>
chip_gen: v7x
topology: tpu7x:2x2x1
jax: 0.10.0
libtpu: 0.0.40
codegen_flags: <defaults>
</compile_context>

<pallas_src>
import functools

import jax
import jax.numpy as jnp
from jax.experimental import pallas as pl
from jax.experimental.pallas import tpu as pltpu

N_EMBD = 384
HIDDEN = 4 * N_EMBD  # 1536


def _max_tm_for_device():
    """Row-tile cap per TPU generation.

    v5e: a 512-row step is already ~6 us of MXU work -> overhead fully hidden;
         bigger tiles only add VMEM pressure.
    v6e/v7x: 1024 rows amortizes the ~0.35 us per-step pipeline overhead; with
         a ~48 MiB scoped VMEM limit it still leaves headroom on v7x (64 MiB).
    """
    try:
        kind = jax.devices()[0].device_kind.lower()
    except Exception:
        return 1024
    if "v5e" in kind or "v5 lite" in kind or "lite" in kind:
        return 512
    return 1024


def _pick_tm(m, max_tm):
    """Power-of-two row-tile bucket (caps jit/Mosaic recompiles).

    Targets >=2 grid steps whenever M allows it so dimension_semantics can
    shard rows across both v7x TensorCores; Pallas masks the ragged tail tile.
    """
    target = max(8, m // 2)
    tm = 8
    while tm * 2 <= target and tm * 2 <= max_tm:
        tm *= 2
    return tm


def ffn_kernel(x_ref, w1_ref, b1_ref, w2_ref, b2_ref, o_ref):
    # x_ref:  (tm, C)  f32 row tile of the input
    # w1_ref: (C, H)   bf16 first Linear weight (stored (in, out) layout)
    # b1_ref: (1, H)   f32
    # w2_ref: (H, C)   bf16
    # b2_ref: (1, C)   f32
    x = x_ref[...].astype(w1_ref.dtype)  # bf16 operands -> full MXU rate
    # Fused bias + ReLU + bf16 cast: only the bf16 hidden tile is materialized
    # (relieves the single vst slot next to the MXU on v6e/v7x).
    h = jnp.maximum(
        jnp.dot(x, w1_ref[...], preferred_element_type=jnp.float32) + b1_ref[...],
        0.0,
    ).astype(w2_ref.dtype)
    out = jnp.dot(h, w2_ref[...], preferred_element_type=jnp.float32) + b2_ref[...]
    o_ref[...] = out.astype(o_ref.dtype)


@functools.partial(jax.jit, static_argnames=("tm",))
def _feedforward_impl(x, w1, b1, w2, b2, *, tm):
    B, T, C = x.shape
    M = B * T
    x2d = x.reshape(M, C)

    # Weights should already be bf16 (init_params); this is a trace-time
    # fallback only -- storing f32 weights re-pays a ~13.5 MiB convert per call.
    if w1.dtype != jnp.bfloat16:
        w1 = w1.astype(jnp.bfloat16)
    if w2.dtype != jnp.bfloat16:
        w2 = w2.astype(jnp.bfloat16)

    grid = (pl.cdiv(M, tm),)

    flops = 4 * M * N_EMBD * HIDDEN  # two matmuls, 2*M*K*N each
    bytes_accessed = (
        M * C * 4                    # x in (f32)
        + M * C * 4                  # out (f32)
        + w1.size * 2 + w2.size * 2  # bf16 weights
        + b1.size * 4 + b2.size * 4
    )

    # 48 MiB scoped VMEM for the 1024-row tile (fits v7x's 64 MiB physical),
    # 32 MiB otherwise.
    vmem_limit = (48 if tm >= 1024 else 32) * 1024 * 1024

    out2d = pl.pallas_call(
        ffn_kernel,
        out_shape=jax.ShapeDtypeStruct((M, C), x.dtype),
        grid_spec=pltpu.PrefetchScalarGridSpec(
            num_scalar_prefetch=0,
            grid=grid,
            in_specs=[
                # x row-tile: double-buffered (default) over the M grid axis.
                pl.BlockSpec((tm, C), lambda i: (i, 0)),
                # Resident weights/biases: constant index_map -> single buffer.
                pl.BlockSpec((C, HIDDEN), lambda i: (0, 0),
                             pipeline_mode=pl.Buffered(1)),
                pl.BlockSpec((1, HIDDEN), lambda i: (0, 0),
                             pipeline_mode=pl.Buffered(1)),
                pl.BlockSpec((HIDDEN, C), lambda i: (0, 0),
                             pipeline_mode=pl.Buffered(1)),
                pl.BlockSpec((1, C), lambda i: (0, 0),
                             pipeline_mode=pl.Buffered(1)),
            ],
            out_specs=pl.BlockSpec((tm, C), lambda i: (i, 0)),  # 384 = 3*128 lanes
        ),
        compiler_params=pltpu.CompilerParams(
            dimension_semantics=("parallel",),   # shard row tiles across v7x TCs
            vmem_limit_bytes=vmem_limit,
        ),
        cost_estimate=pl.CostEstimate(
            flops=flops, transcendentals=0, bytes_accessed=bytes_accessed),
    )(x2d, w1, b1, w2, b2)

    return out2d.reshape(B, T, C)


def feedforward(x, w1, b1, w2, b2, *, tm=None):
    """x: (B, T, C) float32 -> (B, T, C) float32 (eval-mode dropout = identity).

    Weights are bf16 operands with f32 accumulation (deliberate precision
    change vs. a pure-f32 PyTorch FeedForward).
    """
    B, T, _ = x.shape
    M = B * T
    if tm is None:
        tm = _pick_tm(M, _max_tm_for_device())
    return _feedforward_impl(x, w1, b1, w2, b2, tm=tm)


def init_params(key):
    """PyTorch-nn.Linear-style init (uniform +/- 1/sqrt(fan_in)).

    Weights are stored in bf16 (kernel operand dtype) so no per-call convert is
    needed; biases stay f32 and are added to the f32 accumulators.
    """
    k1, k2, k3, k4 = jax.random.split(key, 4)
    bound1 = 1.0 / (N_EMBD ** 0.5)
    bound2 = 1.0 / (HIDDEN ** 0.5)
    # Stored as (in_features, out_features) so the kernel does x @ W directly.
    w1 = jax.random.uniform(k1, (N_EMBD, HIDDEN), jnp.float32, -bound1, bound1)
    b1 = jax.random.uniform(k2, (1, HIDDEN), jnp.float32, -bound1, bound1)
    w2 = jax.random.uniform(k3, (HIDDEN, N_EMBD), jnp.float32, -bound2, bound2)
    b2 = jax.random.uniform(k4, (1, N_EMBD), jnp.float32, -bound2, bound2)
    return w1.astype(jnp.bfloat16), b1, w2.astype(jnp.bfloat16), b2


if __name__ == "__main__":
    key = jax.random.PRNGKey(0)
    kx, kp = jax.random.split(key)

    # Matches Config: batch_size=8, block_size=16, n_embd=384 -> M = 128 rows.
    B, T = 8, 16
    x = jax.random.normal(kx, (B, T, N_EMBD), jnp.float32)
    w1, b1, w2, b2 = init_params(kp)

    out = feedforward(x, w1, b1, w2, b2)
    out = jax.block_until_ready(out)
    assert out.shape == (B, T, N_EMBD)

    # Cross-check against a plain-JAX reference using the same bf16-operand /
    # f32-accumulate recipe as the kernel (eval-mode dropout = identity).
    x2d = x.reshape(-1, N_EMBD).astype(jnp.bfloat16)
    h = jnp.maximum(
        jnp.dot(x2d, w1, preferred_element_type=jnp.float32) + b1, 0.0
    ).astype(jnp.bfloat16)
    ref = jnp.dot(h, w2, preferred_element_type=jnp.float32) + b2
    ref = ref.reshape(B, T, N_EMBD)
    assert jnp.allclose(out, ref, atol=1e-2, rtol=1e-2), (
        float(jnp.max(jnp.abs(out - ref))))

    print("KERNEL_OK")
</pallas_src>

<mosaic_0001>
module attributes {stable_mosaic.version = 11 : i64} {
  func.func @ffn_kernel(%arg0: i32, %arg1: memref<64x384xf32, #tpu.memory_space<vmem>>, %arg2: memref<384x1536xbf16, #tpu.memory_space<vmem>>, %arg3: memref<1x1536xf32, #tpu.memory_space<vmem>>, %arg4: memref<1536x384xbf16, #tpu.memory_space<vmem>>, %arg5: memref<1x384xf32, #tpu.memory_space<vmem>>, %arg6: memref<64x384xf32, #tpu.memory_space<vmem>>) attributes {dimension_semantics = [#tpu.dimension_semantics<parallel>], iteration_bounds = array<i64: 2>, scalar_prefetch = 0 : i64, scratch_operands = 0 : i64, tpu.core_type = #tpu.core_type<tc>, window_params = [{transform_indices = @transform_0, window_bounds = array<i64: 64, 384>}, {pipeline_mode = #tpu.pipeline_mode<synchronous>, transform_indices = @transform_1, window_bounds = array<i64: 384, 1536>}, {pipeline_mode = #tpu.pipeline_mode<synchronous>, transform_indices = @transform_2, window_bounds = array<i64: 1, 1536>}, {pipeline_mode = #tpu.pipeline_mode<synchronous>, transform_indices = @transform_3, window_bounds = array<i64: 1536, 384>}, {pipeline_mode = #tpu.pipeline_mode<synchronous>, transform_indices = @transform_4, window_bounds = array<i64: 1, 384>}, {transform_indices = @transform_5, window_bounds = array<i64: 64, 384>}]} {
    %c0 = arith.constant 0 : index
    %c0_0 = arith.constant 0 : index
    %0 = vector.load %arg1[%c0, %c0_0] : memref<64x384xf32, #tpu.memory_space<vmem>>, vector<64x384xf32>
    %1 = arith.truncf %0 : vector<64x384xf32> to vector<64x384xbf16>
    %c0_1 = arith.constant 0 : index
    %c0_2 = arith.constant 0 : index
    %2 = vector.load %arg2[%c0_1, %c0_2] : memref<384x1536xbf16, #tpu.memory_space<vmem>>, vector<384x1536xbf16>
    %cst = arith.constant dense<0.000000e+00> : vector<64x1536xf32>
    %3 = tpu.matmul %1, %2, %cst {dimension_numbers = #tpu.dot_dimension_numbers<[1], [0], [0], [1], [0, 0, 1, 1], [], []>} : vector<64x384xbf16>, vector<384x1536xbf16>, vector<64x1536xf32> -> vector<64x1536xf32>
    %c0_3 = arith.constant 0 : index
    %c0_4 = arith.constant 0 : index
    %4 = vector.load %arg3[%c0_3, %c0_4] : memref<1x1536xf32, #tpu.memory_space<vmem>>, vector<1x1536xf32>
    %5 = vector.broadcast %4 : vector<1x1536xf32> to vector<64x1536xf32>
    %6 = arith.addf %3, %5 : vector<64x1536xf32>
    %cst_5 = arith.constant 0.000000e+00 : f32
    %7 = vector.broadcast %cst_5 : f32 to vector<64x1536xf32>
    %8 = arith.maximumf %6, %7 : vector<64x1536xf32>
    %9 = arith.truncf %8 : vector<64x1536xf32> to vector<64x1536xbf16>
    %c0_6 = arith.constant 0 : index
    %c0_7 = arith.constant 0 : index
    %10 = vector.load %arg4[%c0_6, %c0_7] : memref<1536x384xbf16, #tpu.memory_space<vmem>>, vector<1536x384xbf16>
    %cst_8 = arith.constant dense<0.000000e+00> : vector<64x384xf32>
    %11 = tpu.matmul %9, %10, %cst_8 {dimension_numbers = #tpu.dot_dimension_numbers<[1], [0], [0], [1], [0, 0, 1, 1], [], []>} : vector<64x1536xbf16>, vector<1536x384xbf16>, vector<64x384xf32> -> vector<64x384xf32>
    %c0_9 = arith.constant 0 : index
    %c0_10 = arith.constant 0 : index
    %12 = vector.load %arg5[%c0_9, %c0_10] : memref<1x384xf32, #tpu.memory_space<vmem>>, vector<1x384xf32>
    %13 = vector.broadcast %12 : vector<1x384xf32> to vector<64x384xf32>
    %14 = arith.addf %11, %13 : vector<64x384xf32>
    %c0_11 = arith.constant 0 : index
    %c0_12 = arith.constant 0 : index
    %15 = vector.load %arg6[%c0_11, %c0_12] : memref<64x384xf32, #tpu.memory_space<vmem>>, vector<64x384xf32>
    tpu.vector_store %arg6[%c0_11, %c0_12], %14 {strides = array<i32>} : memref<64x384xf32, #tpu.memory_space<vmem>>, vector<64x384xf32>,
    return
  }
  func.func @transform_0(%arg0: i32) -> (i32, i32) {
    %c0_i32 = arith.constant 0 : i32
    %c0_i32_0 = arith.constant 0 : i32
    return %arg0, %c0_i32 : i32, i32
  }
  func.func @transform_1(%arg0: i32) -> (i32, i32) {
    %c0_i32 = arith.constant 0 : i32
    %c0_i32_0 = arith.constant 0 : i32
    %c0_i32_1 = arith.constant 0 : i32
    return %c0_i32, %c0_i32_0 : i32, i32
  }
  func.func @transform_2(%arg0: i32) -> (i32, i32) {
    %c0_i32 = arith.constant 0 : i32
    %c0_i32_0 = arith.constant 0 : i32
    %c0_i32_1 = arith.constant 0 : i32
    return %c0_i32, %c0_i32_0 : i32, i32
  }
  func.func @transform_3(%arg0: i32) -> (i32, i32) {
    %c0_i32 = arith.constant 0 : i32
    %c0_i32_0 = arith.constant 0 : i32
    %c0_i32_1 = arith.constant 0 : i32
    return %c0_i32, %c0_i32_0 : i32, i32
  }
  func.func @transform_4(%arg0: i32) -> (i32, i32) {
    %c0_i32 = arith.constant 0 : i32
    %c0_i32_0 = arith.constant 0 : i32
    %c0_i32_1 = arith.constant 0 : i32
    return %c0_i32, %c0_i32_0 : i32, i32
  }
  func.func @transform_5(%arg0: i32) -> (i32, i32) {
    %c0_i32 = arith.constant 0 : i32
    %c0_i32_0 = arith.constant 0 : i32
    return %arg0, %c0_i32 : i32, i32
  }
}

</mosaic_0001>

<llo_original>
// kernel: _feedforward_impl.1
$region0: #{_feedforward_impl.1}
  #allocation0 [shape = 'u32[]', space=smem, size = 0x4, offset = 0x4, fixed_abs, tag = 'smem constant byte address 0x4 - core index']
  #allocation1 [shape = 'u32[144,128]{1,0:T(1,128)}', space=vmem, size = 0x12000, scoped, tag = 'internal scratch']
  %s0 = inlined_call_operand.hbm [shape: f32[128,384], index: 0, kind: input, shape index: {}]
  %s1 = inlined_call_operand.hbm [shape: bf16[384,1536], index: 1, kind: input, shape index: {}]
  %s2 = inlined_call_operand.hbm [shape: f32[1,1536], index: 2, kind: input, shape index: {}]
  %s3 = inlined_call_operand.hbm [shape: bf16[1536,384], index: 3, kind: input, shape index: {}]
  %s4 = inlined_call_operand.hbm [shape: f32[1,384], index: 4, kind: input, shape index: {}]
  %s5 = inlined_call_operand.hbm [shape: f32[128,384], index: 5, kind: output, shape index: {}]
  %s6 = sld [smem:[#allocation0]]
  $region73: #{_feedforward_impl.1} parent=0
    _
  %s8 = ssub.s32 1, %s6
  %s9 = scalar_select 0, %s8, %s6
  $region1: #{_feedforward_impl.1} parent=0
    #allocation2 [shape = 'u8[196608]{0}', space=vmem, size = 0x30000, scoped, tag = 'input window, operand 0']
    #allocation3 [shape = 's32[2]{0}', space=sflag, size = 0x8, scoped, tag = 'scoped memory for _feedforward_impl.1']
    #allocation4 [shape = 's32[2]{0}', space=sflag, size = 0x8, scoped, tag = 'scoped memory for _feedforward_impl.1']
    #allocation5 [shape = 'u8[1179648]{0}', space=vmem, size = 0x120000, scoped, tag = 'input window, operand 1, single buffered']
    #allocation6 [shape = 's32[1]{0}', space=sflag, size = 0x4, scoped, tag = 'scoped memory for _feedforward_impl.1']
    #allocation7 [shape = 'u8[6144]{0}', space=vmem, size = 0x1800, scoped, tag = 'input window, operand 2, single buffered']
    #allocation8 [shape = 'u8[1179648]{0}', space=vmem, size = 0x120000, scoped, tag = 'input window, operand 3, single buffered']
    #allocation9 [shape = 's32[1]{0}', space=sflag, size = 0x4, scoped, tag = 'scoped memory for _feedforward_impl.1']
    #allocation10 [shape = 'u8[1536]{0}', space=vmem, size = 0x800, scoped, tag = 'input window, operand 4, single buffered']
    #allocation11 [shape = 'u8[196608]{0}', space=vmem, size = 0x30000, scoped, tag = 'output window, operand 0']
    %10 = vsyncpa [#allocation3], 0
    %s11 = scalar_lea.sflag [#allocation3], 1
    %12 = vsyncpa %s11, 0
    %13 = vsyncpa [#allocation6], 0
    %14 = vsyncpa [#allocation9], 0
    %15 = vsyncpa [#allocation4], 0
    %s16 = scalar_lea.sflag [#allocation4], 1
    %17 = vsyncpa %s16, 0
    loop: start=0, step=1, limit=4
    $region2: #{_feedforward_impl.1} parent=1 // loop_pre_header
      _
    $region3: #{_feedforward_impl.1} parent=1 // loop_header
      %s19 = sphi 0, %s23
      %p20 = scmp.ge.s32.totalorder %s19, 4
      %s29 = sphi 0, %s31
      %s32 = sphi 0, %s29
      %s33 = sphi 0, %s32
      %s49 = sphi 0, %s33
      %s53 = sphi 0, %s53
      %s55 = sphi 0, %s53
      %s56 = sphi 0, %s55
      %s70 = sphi 0, %s56
      %s74 = sphi 0, %s74
      %s76 = sphi 0, %s74
      %s77 = sphi 0, %s76
      %s91 = sphi 0, %s77
      %s95 = sphi 0, %s95
      %s97 = sphi 0, %s95
      %s98 = sphi 0, %s97
      %s112 = sphi 0, %s98
      %s116 = sphi 0, %s116
      %s118 = sphi 0, %s116
      %s119 = sphi 0, %s118
      %s133 = sphi 0, %s119
      %s139 = sphi 0, %s141
      %s142 = sphi 0, %s139
      %s143 = sphi 0, %s142
      %s159 = sphi 0, %s143
    $region4: #{_feedforward_impl.1} parent=1 // loop_header_branch
      %22 = sbr.rel (%p20) target = $region8
    $region5: #{_feedforward_impl.1} parent=1 // loop_body
      %s24 = ssub.s32 %s19, 1
      %s25 = ssub.s32 %s19, 2
      %s26 = sadd.s32 %s19, 1
      %s27 = ssub.s32 %s19, %s26
      %p28 = scmp.eq.s32.totalorder %s27, 0
      %s30 = sadd.s32 %s29, 1
      %s31 = scalar_select %p28, %s29, %s30
      %p34 = pneg %p28
      %p35 = scmp.eq.s32.totalorder %s19, 1
      %p36 = por %p34, %p35
      %p37 = scmp.ne.s32.totalorder %s29, %s32
      %p38 = scmp.eq.s32.totalorder %s19, 0
      %p39 = por %p37, %p38
      %p40 = scmp.ne.s32.totalorder %s29, %s32
      %p41 = scmp.eq.s32.totalorder %s24, 1
      %p42 = por %p40, %p41
      %p43 = scmp.ne.s32.totalorder %s32, %s33
      %p44 = scmp.eq.s32.totalorder %s24, 0
      %p45 = por %p43, %p44
      %p46 = scmp.ne.s32.totalorder %s32, %s33
      %p47 = scmp.eq.s32.totalorder %s25, 1
      %p48 = por %p46, %p47
      %p50 = scmp.ne.s32.totalorder %s33, %s49
      %p51 = scmp.eq.s32.totalorder %s25, 0
      %p52 = por %p50, %p51
      %s54 = sadd.s32 %s53, 1
      %p57 = scmp.eq.s32.totalorder %s19, 1
      %p58 = scmp.ne.s32.totalorder %s53, %s55
      %p59 = scmp.eq.s32.totalorder %s19, 0
      %p60 = por %p58, %p59
      %p61 = scmp.ne.s32.totalorder %s53, %s55
      %p62 = scmp.eq.s32.totalorder %s24, 1
      %p63 = por %p61, %p62
      %p64 = scmp.ne.s32.totalorder %s55, %s56
      %p65 = scmp.eq.s32.totalorder %s24, 0
      %p66 = por %p64, %p65
      %p67 = scmp.ne.s32.totalorder %s55, %s56
      %p68 = scmp.eq.s32.totalorder %s25, 1
      %p69 = por %p67, %p68
      %p71 = scmp.ne.s32.totalorder %s56, %s70
      %p72 = scmp.eq.s32.totalorder %s25, 0
      %p73 = por %p71, %p72
      %s75 = sadd.s32 %s74, 1
      %p78 = scmp.eq.s32.totalorder %s19, 1
      %p79 = scmp.ne.s32.totalorder %s74, %s76
      %p80 = scmp.eq.s32.totalorder %s19, 0
      %p81 = por %p79, %p80
      %p82 = scmp.ne.s32.totalorder %s74, %s76
      %p83 = scmp.eq.s32.totalorder %s24, 1
      %p84 = por %p82, %p83
      %p85 = scmp.ne.s32.totalorder %s76, %s77
      %p86 = scmp.eq.s32.totalorder %s24, 0
      %p87 = por %p85, %p86
      %p88 = scmp.ne.s32.totalorder %s76, %s77
      %p89 = scmp.eq.s32.totalorder %s25, 1
      %p90 = por %p88, %p89
      %p92 = scmp.ne.s32.totalorder %s77, %s91
      %p93 = scmp.eq.s32.totalorder %s25, 0
      %p94 = por %p92, %p93
      %s96 = sadd.s32 %s95, 1
      %p99 = scmp.eq.s32.totalorder %s19, 1
      %p100 = scmp.ne.s32.totalorder %s95, %s97
      %p101 = scmp.eq.s32.totalorder %s19, 0
      %p102 = por %p100, %p101
      %p103 = scmp.ne.s32.totalorder %s95, %s97
      %p104 = scmp.eq.s32.totalorder %s24, 1
      %p105 = por %p103, %p104
      %p106 = scmp.ne.s32.totalorder %s97, %s98
      %p107 = scmp.eq.s32.totalorder %s24, 0
      %p108 = por %p106, %p107
      %p109 = scmp.ne.s32.totalorder %s97, %s98
      %p110 = scmp.eq.s32.totalorder %s25, 1
      %p111 = por %p109, %p110
      %p113 = scmp.ne.s32.totalorder %s98, %s112
      %p114 = scmp.eq.s32.totalorder %s25, 0
      %p115 = por %p113, %p114
      %s117 = sadd.s32 %s116, 1
      %p120 = scmp.eq.s32.totalorder %s19, 1
      %p121 = scmp.ne.s32.totalorder %s116, %s118
      %p122 = scmp.eq.s32.totalorder %s19, 0
      %p123 = por %p121, %p122
      %p124 = scmp.ne.s32.totalorder %s116, %s118
      %p125 = scmp.eq.s32.totalorder %s24, 1
      %p126 = por %p124, %p125
      %p127 = scmp.ne.s32.totalorder %s118, %s119
      %p128 = scmp.eq.s32.totalorder %s24, 0
      %p129 = por %p127, %p128
      %p130 = scmp.ne.s32.totalorder %s118, %s119
      %p131 = scmp.eq.s32.totalorder %s25, 1
      %p132 = por %p130, %p131
      %p134 = scmp.ne.s32.totalorder %s119, %s133
      %p135 = scmp.eq.s32.totalorder %s25, 0
      %p136 = por %p134, %p135
      %s137 = ssub.s32 %s19, %s26
      %p138 = scmp.eq.s32.totalorder %s137, 0
      %s140 = sadd.s32 %s139, 1
      %s141 = scalar_select %p138, %s139, %s140
      %p144 = pneg %p138
      %p145 = scmp.eq.s32.totalorder %s19, 1
      %p146 = por %p144, %p145
      %p147 = scmp.ne.s32.totalorder %s139, %s142
      %p148 = scmp.eq.s32.totalorder %s19, 0
      %p149 = por %p147, %p148
      %p150 = scmp.ne.s32.totalorder %s139, %s142
      %p151 = scmp.eq.s32.totalorder %s24, 1
      %p152 = por %p150, %p151
      %p153 = scmp.ne.s32.totalorder %s142, %s143
      %p154 = scmp.eq.s32.totalorder %s24, 0
      %p155 = por %p153, %p154
      %p156 = scmp.ne.s32.totalorder %s142, %s143
      %p157 = scmp.eq.s32.totalorder %s25, 1
      %p158 = por %p156, %p157
      %p160 = scmp.ne.s32.totalorder %s143, %s159
      %p161 = scmp.eq.s32.totalorder %s25, 0
      %p162 = por %p160, %p161
      %p163 = scmp.le.s32.totalorder 1, %s19
      %p164 = scmp.lt.s32.totalorder %s19, 3
      %p165 = pnand %p163, %p164
      %p166 = pneg %p165
      // Predicated region
      $region9: #{_feedforward_impl.1} parent=5 // pred_check
        _
      $region10: #{_feedforward_impl.1} parent=5 // pred_check_branch
        %168 = sbr.rel (%p165) target = $region12
      $region11: #{_feedforward_impl.1} parent=5 // pred_region
        %s169 = ssub.s32 %s19, 1
        // Predicated region
        $region13: #{_feedforward_impl.1} parent=11 // pred_check
          %p170 = pneg %p66
        $region14: #{_feedforward_impl.1} parent=11 // pred_check_branch
          %172 = sbr.rel (%p170) target = $region16
        $region15: #{_feedforward_impl.1} parent=11 // pred_region
          %s174 = ssub.s32 36864, 36864
          %175 = vsyncadd [#allocation6], %s174
          %s176 = sshll.u32 [#allocation5], 4
          %s177 = int_to_ptr.vmem [resolvable:$true] %s176
          %182 = dma.hbm_to_vmem [thread:$0]  %s1, 36864, %s177, [#allocation6], 768, 768, 48
        $region16: #{_feedforward_impl.1} parent=11 // pred_fallthru
          _
        // Predicated region
        $region17: #{_feedforward_impl.1} parent=11 // pred_check
          %p183 = pneg %p87
        $region18: #{_feedforward_impl.1} parent=11 // pred_check_branch
          %185 = sbr.rel (%p183) target = $region20
        $region19: #{_feedforward_impl.1} parent=11 // pred_region
          %s187 = ssub.s32 192, 192
          %188 = vsyncadd [#allocation6], %s187
          %s190 = sshll.u32 [#allocation7], 4
          %s191 = int_to_ptr.vmem [resolvable:$true] %s190
          %193 = dma.hbm_to_vmem [thread:$0]  %s2, 192, %s191, [#allocation6]
        $region20: #{_feedforward_impl.1} parent=11 // pred_fallthru
          _
        // Predicated region
        $region21: #{_feedforward_impl.1} parent=11 // pred_check
          %p194 = pneg %p108
        $region22: #{_feedforward_impl.1} parent=11 // pred_check_branch
          %196 = sbr.rel (%p194) target = $region24
        $region23: #{_feedforward_impl.1} parent=11 // pred_region
          %s198 = ssub.s32 36864, 36864
          %199 = vsyncadd [#allocation9], %s198
          %s200 = sshll.u32 [#allocation8], 4
          %s201 = int_to_ptr.vmem [resolvable:$true] %s200
          %206 = dma.hbm_to_vmem [thread:$0]  %s3, 36864, %s201, [#allocation9], 192, 192, 12
        $region24: #{_feedforward_impl.1} parent=11 // pred_fallthru
          _
        // Predicated region
        $region25: #{_feedforward_impl.1} parent=11 // pred_check
          %p207 = pneg %p129
        $region26: #{_feedforward_impl.1} parent=11 // pred_check_branch
          %209 = sbr.rel (%p207) target = $region28
        $region27: #{_feedforward_impl.1} parent=11 // pred_region
          %s211 = ssub.s32 48, 48
          %212 = vsyncadd [#allocation9], %s211
          %s214 = sshll.u32 [#allocation10], 4
          %s215 = int_to_ptr.vmem [resolvable:$true] %s214
          %217 = dma.hbm_to_vmem [thread:$0]  %s4, 48, %s215, [#allocation9]
        $region28: #{_feedforward_impl.1} parent=11 // pred_fallthru
          _
      $region12: #{_feedforward_impl.1} parent=5 // pred_fallthru
        _
      %p218 = scmp.lt.s32.totalorder %s19, 2
      // Predicated region
      $region29: #{_feedforward_impl.1} parent=5 // pred_check
        %p219 = pneg %p218
      $region30: #{_feedforward_impl.1} parent=5 // pred_check_branch
        %221 = sbr.rel (%p219) target = $region32
      $region31: #{_feedforward_impl.1} parent=5 // pred_region
        // Predicated region
        $region33: #{_feedforward_impl.1} parent=31 // pred_check
          %p222 = pneg %p39
        $region34: #{_feedforward_impl.1} parent=31 // pred_check_branch
          %224 = sbr.rel (%p222) target = $region36
        $region35: #{_feedforward_impl.1} parent=31 // pred_region
          %s225 = sand.u32 %s29, 1
          %s226 = scalar_lea.sflag [#allocation3], %s225
          %s227 = sand.u32 %s29, 1
          %s228 = smul.addr %s227, 192
          %s229 = scalar_lea.vmem [#allocation2], %s228
          %s230 = smul.u32 8, %s19
          %s232 = ssub.s32 3072, 3072
          %233 = vsyncadd %s226, %s232
          %s234 = smul.addr %s230, 3
          %s235 = smul.addr %s234, 128
          %s236 = scalar_lea.hbm %s0, %s235
          %s237 = sshll.u32 %s229, 4
          %s238 = int_to_ptr.vmem [resolvable:$true] %s237
          %243 = dma.hbm_to_vmem [thread:$0]  %s236, 3072, %s238, %s226, 384, 384, 24
        $region36: #{_feedforward_impl.1} parent=31 // pred_fallthru
          _
      $region32: #{_feedforward_impl.1} parent=5 // pred_fallthru
        _
      %p244 = scmp.le.s32.totalorder 1, %s19
      %p245 = scmp.lt.s32.totalorder %s19, 3
      %p246 = pnand %p244, %p245
      %p247 = pneg %p246
      // Predicated region
      $region37: #{_feedforward_impl.1} parent=5 // pred_check
        _
      $region38: #{_feedforward_impl.1} parent=5 // pred_check_branch
        %249 = sbr.rel (%p246) target = $region40
      $region39: #{_feedforward_impl.1} parent=5 // pred_region
        %s250 = ssub.s32 %s19, 1
        %s251 = sand.u32 %s32, 1
        %s252 = scalar_lea.sflag [#allocation3], %s251
        %s253 = sand.u32 %s32, 1
        %s254 = smul.addr %s253, 192
        %s255 = scalar_lea.vmem [#allocation2], %s254
        // Predicated region
        $region41: #{_feedforward_impl.1} parent=39 // pred_check
          %p256 = pneg %p45
        $region42: #{_feedforward_impl.1} parent=39 // pred_check_branch
          %258 = sbr.rel (%p256) target = $region44
        $region43: #{_feedforward_impl.1} parent=39 // pred_region
          %259 = dma.done %s252, 3072
        $region44: #{_feedforward_impl.1} parent=39 // pred_fallthru
          _
        // Predicated region
        $region45: #{_feedforward_impl.1} parent=39 // pred_check
          %p260 = pneg %p66
        $region46: #{_feedforward_impl.1} parent=39 // pred_check_branch
          %262 = sbr.rel (%p260) target = $region48
        $region47: #{_feedforward_impl.1} parent=39 // pred_region
          %263 = dma.done [#allocation6], 36864
        $region48: #{_feedforward_impl.1} parent=39 // pred_fallthru
          _
        // Predicated region
        $region49: #{_feedforward_impl.1} parent=39 // pred_check
          %p264 = pneg %p87
        $region50: #{_feedforward_impl.1} parent=39 // pred_check_branch
          %266 = sbr.rel (%p264) target = $region52
        $region51: #{_feedforward_impl.1} parent=39 // pred_region
          %267 = dma.done [#allocation6], 192
        $region52: #{_feedforward_impl.1} parent=39 // pred_fallthru
          _
        // Predicated region
        $region53: #{_feedforward_impl.1} parent=39 // pred_check
          %p268 = pneg %p108
        $region54: #{_feedforward_impl.1} parent=39 // pred_check_branch
          %270 = sbr.rel (%p268) target = $region56
        $region55: #{_feedforward_impl.1} parent=39 // pred_region
          %271 = dma.done [#allocation9], 36864
        $region56: #{_feedforward_impl.1} parent=39 // pred_fallthru
          _
        // Predicated region
        $region57: #{_feedforward_impl.1} parent=39 // pred_check
          %p272 = pneg %p129
        $region58: #{_feedforward_impl.1} parent=39 // pred_check_branch
          %274 = sbr.rel (%p272) target = $region60
        $region59: #{_feedforward_impl.1} parent=39 // pred_region
          %275 = dma.done [#allocation9], 48
        $region60: #{_feedforward_impl.1} parent=39 // pred_fallthru
          _
        %s276 = sand.u32 %s32, 1
        %s277 = scalar_lea.sflag [#allocation3], %s276
        %s278 = sand.u32 %s32, 1
        %s279 = smul.addr %s278, 192
        %s280 = scalar_lea.vmem [#allocation2], %s279
        %p281 = pneg %p45
        %p282 = pneg %p42
        %p283 = pneg %p66
        %p284 = pneg %p63
        %p285 = pneg %p87
        %p286 = pneg %p84
        %p287 = pneg %p108
        %p288 = pneg %p105
        %p289 = pneg %p129
        %p290 = pneg %p126
        %p291 = pneg %p155
        %p292 = pneg %p152
        %s293 = sand.u32 %s142, 1
        %s294 = scalar_lea.sflag [#allocation4], %s293
        %s295 = sand.u32 %s142, 1
        %s296 = smul.addr %s295, 192
        %s297 = scalar_lea.vmem [#allocation11], %s296
        %s298 = smul.u32 8, %s24
        %s299 = smul.u32 8, %s24
        %v301 = vld [vmem:[%s255] sm:$0xff]
        %v302 = vld [vmem:[%s255 + $0x8] sm:$0xff]
        %v303 = vld [vmem:[%s255 + $0x10] sm:$0xff]
        %v304 = vld [vmem:[%s255 + $0x18] sm:$0xff]
        %v305 = vld [vmem:[%s255 + $0x20] sm:$0xff]
        %v306 = vld [vmem:[%s255 + $0x28] sm:$0xff]
        %v307 = vld [vmem:[%s255 + $0x30] sm:$0xff]
        %v308 = vld [vmem:[%s255 + $0x38] sm:$0xff]
        %v309 = vld [vmem:[%s255 + $0x40] sm:$0xff]
        %v310 = vld [vmem:[%s255 + $0x48] sm:$0xff]
        %v311 = vld [vmem:[%s255 + $0x50] sm:$0xff]
        %v312 = vld [vmem:[%s255 + $0x58] sm:$0xff]
        %v313 = vld [vmem:[%s255 + $0x60] sm:$0xff]
        %v314 = vld [vmem:[%s255 + $0x68] sm:$0xff]
        %v315 = vld [vmem:[%s255 + $0x70] sm:$0xff]
        %v316 = vld [vmem:[%s255 + $0x78] sm:$0xff]
        %v317 = vld [vmem:[%s255 + $0x80] sm:$0xff]
        %v318 = vld [vmem:[%s255 + $0x88] sm:$0xff]
        %v319 = vld [vmem:[%s255 + $0x90] sm:$0xff]
        %v320 = vld [vmem:[%s255 + $0x98] sm:$0xff]
        %v321 = vld [vmem:[%s255 + $0xa0] sm:$0xff]
        %v322 = vld [vmem:[%s255 + $0xa8] sm:$0xff]
        %v323 = vld [vmem:[%s255 + $0xb0] sm:$0xff]
        %v324 = vld [vmem:[%s255 + $0xb8] sm:$0xff]
        %v325 = vpack.c.bf16 %v304, %v301
        %v326 = vpack.c.bf16 %v305, %v302
        %v327 = vpack.c.bf16 %v306, %v303
        %v328 = vpack.c.bf16 %v310, %v307
        %v329 = vpack.c.bf16 %v311, %v308
        %v330 = vpack.c.bf16 %v312, %v309
        %v331 = vpack.c.bf16 %v316, %v313
        %v332 = vpack.c.bf16 %v317, %v314
        %v333 = vpack.c.bf16 %v318, %v315
        %v334 = vpack.c.bf16 %v322, %v319
        %v335 = vpack.c.bf16 %v323, %v320
        %v336 = vpack.c.bf16 %v324, %v321
        %v337 = vld [vmem:[#allocation5] sm:$0xff]
        %v338 = vld [vmem:[#allocation5 + $0x8] sm:$0xff]
        %v339 = vld [vmem:[#allocation5 + $0x10] sm:$0xff]
        %v340 = vld [vmem:[#allocation5 + $0x18] sm:$0xff]
        %v341 = vld [vmem:[#allocation5 + $0x20] sm:$0xff]
        %v342 = vld [vmem:[#allocation5 + $0x28] sm:$0xff]
        %v343 = vld [vmem:[#allocation5 + $0x30] sm:$0xff]
        %v344 = vld [vmem:[#allocation5 + $0x38] sm:$0xff]
        %v345 = vld [vmem:[#allocation5 + $0x40] sm:$0xff]
        %v346 = vld [vmem:[#allocation5 + $0x48] sm:$0xff]
        %v347 = vld [vmem:[#allocation5 + $0x50] sm:$0xff]
        %v348 = vld [vmem:[#allocation5 + $0x58] sm:$0xff]
        %v349 = vld [vmem:[#allocation5 + $0x60] sm:$0xff]
        %v350 = vld [vmem:[#allocation5 + $0x68] sm:$0xff]
        %v351 = vld [vmem:[#allocation5 + $0x70] sm:$0xff]
        %v352 = vld [vmem:[#allocation5 + $0x78] sm:$0xff]
        %v353 = vld [vmem:[#allocation5 + $0x80] sm:$0xff]
        %v354 = vld [vmem:[#allocation5 + $0x88] sm:$0xff]
        %v355 = vld [vmem:[#allocation5 + $0x90] sm:$0xff]
        %v356 = vld [vmem:[#allocation5 + $0x98] sm:$0xff]
        %v357 = vld [vmem:[#allocation5 + $0xa0] sm:$0xff]
        %v358 = vld [vmem:[#allocation5 + $0xa8] sm:$0xff]
        %v359 = vld [vmem:[#allocation5 + $0xb0] sm:$0xff]
        %v360 = vld [vmem:[#allocation5 + $0xb8] sm:$0xff]
        %v361 = vld [vmem:[#allocation5 + $0xc0] sm:$0xff]
        %v362 = vld [vmem:[#allocation5 + $0xc8] sm:$0xff]
        %v363 = vld [vmem:[#allocation5 + $0xd0] sm:$0xff]
        %v364 = vld [vmem:[#allocation5 + $0xd8] sm:$0xff]
        %v365 = vld [vmem:[#allocation5 + $0xe0] sm:$0xff]
        %v366 = vld [vmem:[#allocation5 + $0xe8] sm:$0xff]
        %v367 = vld [vmem:[#allocation5 + $0xf0] sm:$0xff]
        %v368 = vld [vmem:[#allocation5 + $0xf8] sm:$0xff]
        %v369 = vld [vmem:[#allocation5 + $0x100] sm:$0xff]
        %v370 = vld [vmem:[#allocation5 + $0x108] sm:$0xff]
        %v371 = vld [vmem:[#allocation5 + $0x110] sm:$0xff]
        %v372 = vld [vmem:[#allocation5 + $0x118] sm:$0xff]
        %v373 = vld [vmem:[#allocation5 + $0x120] sm:$0xff]
        %v374 = vld [vmem:[#allocation5 + $0x128] sm:$0xff]
        %v375 = vld [vmem:[#allocation5 + $0x130] sm:$0xff]
        %v376 = vld [vmem:[#allocation5 + $0x138] sm:$0xff]
        %v377 = vld [vmem:[#allocation5 + $0x140] sm:$0xff]
        %v378 = vld [vmem:[#allocation5 + $0x148] sm:$0xff]
        %v379 = vld [vmem:[#allocation5 + $0x150] sm:$0xff]
        %v380 = vld [vmem:[#allocation5 + $0x158] sm:$0xff]
        %v381 = vld [vmem:[#allocation5 + $0x160] sm:$0xff]
        %v382 = vld [vmem:[#allocation5 + $0x168] sm:$0xff]
        %v383 = vld [vmem:[#allocation5 + $0x170] sm:$0xff]
        %v384 = vld [vmem:[#allocation5 + $0x178] sm:$0xff]
        %v385 = vld [vmem:[#allocation5 + $0x180] sm:$0xff]
        %v386 = vld [vmem:[#allocation5 + $0x188] sm:$0xff]
        %v387 = vld [vmem:[#allocation5 + $0x190] sm:$0xff]
        %v388 = vld [vmem:[#allocation5 + $0x198] sm:$0xff]
        %v389 = vld [vmem:[#allocation5 + $0x1a0] sm:$0xff]
        %v390 = vld [vmem:[#allocation5 + $0x1a8] sm:$0xff]
        %v391 = vld [vmem:[#allocation5 + $0x1b0] sm:$0xff]
        %v392 = vld [vmem:[#allocation5 + $0x1b8] sm:$0xff]
        %v393 = vld [vmem:[#allocation5 + $0x1c0] sm:$0xff]
        %v394 = vld [vmem:[#allocation5 + $0x1c8] sm:$0xff]
        %v395 = vld [vmem:[#allocation5 + $0x1d0] sm:$0xff]
        %v396 = vld [vmem:[#allocation5 + $0x1d8] sm:$0xff]
        %v397 = vld [vmem:[#allocation5 + $0x1e0] sm:$0xff]
        %v398 = vld [vmem:[#allocation5 + $0x1e8] sm:$0xff]
        %v399 = vld [vmem:[#allocation5 + $0x1f0] sm:$0xff]
        %v400 = vld [vmem:[#allocation5 + $0x1f8] sm:$0xff]
        %v401 = vld [vmem:[#allocation5 + $0x200] sm:$0xff]
        %v402 = vld [vmem:[#allocation5 + $0x208] sm:$0xff]
        %v403 = vld [vmem:[#allocation5 + $0x210] sm:$0xff]
        %v404 = vld [vmem:[#allocation5 + $0x218] sm:$0xff]
        %v405 = vld [vmem:[#allocation5 + $0x220] sm:$0xff]
        %v406 = vld [vmem:[#allocation5 + $0x228] sm:$0xff]
        %v407 = vld [vmem:[#allocation5 + $0x230] sm:$0xff]
        %v408 = vld [vmem:[#allocation5 + $0x238] sm:$0xff]
        %v409 = vld [vmem:[#allocation5 + $0x240] sm:$0xff]
        %v410 = vld [vmem:[#allocation5 + $0x248] sm:$0xff]
        %v411 = vld [vmem:[#allocation5 + $0x250] sm:$0xff]
        %v412 = vld [vmem:[#allocation5 + $0x258] sm:$0xff]
        %v413 = vld [vmem:[#allocation5 + $0x260] sm:$0xff]
        %v414 = vld [vmem:[#allocation5 + $0x268] sm:$0xff]
        %v415 = vld [vmem:[#allocation5 + $0x270] sm:$0xff]
        %v416 = vld [vmem:[#allocation5 + $0x278] sm:$0xff]
        %v417 = vld [vmem:[#allocation5 + $0x280] sm:$0xff]
        %v418 = vld [vmem:[#allocation5 + $0x288] sm:$0xff]
        %v419 = vld [vmem:[#allocation5 + $0x290] sm:$0xff]
        %v420 = vld [vmem:[#allocation5 + $0x298] sm:$0xff]
        %v421 = vld [vmem:[#allocation5 + $0x2a0] sm:$0xff]
        %v422 = vld [vmem:[#allocation5 + $0x2a8] sm:$0xff]
        %v423 = vld [vmem:[#allocation5 + $0x2b0] sm:$0xff]
        %v424 = vld [vmem:[#allocation5 + $0x2b8] sm:$0xff]
        %v425 = vld [vmem:[#allocation5 + $0x2c0] sm:$0xff]
        %v426 = vld [vmem:[#allocation5 + $0x2c8] sm:$0xff]
        %v427 = vld [vmem:[#allocation5 + $0x2d0] sm:$0xff]
        %v428 = vld [vmem:[#allocation5 + $0x2d8] sm:$0xff]
        %v429 = vld [vmem:[#allocation5 + $0x2e0] sm:$0xff]
        %v430 = vld [vmem:[#allocation5 + $0x2e8] sm:$0xff]
        %v431 = vld [vmem:[#allocation5 + $0x2f0] sm:$0xff]
        %v432 = vld [vmem:[#allocation5 + $0x2f8] sm:$0xff]
        %v433 = vld [vmem:[#allocation5 + $0x300] sm:$0xff]
        %v434 = vld [vmem:[#allocation5 + $0x308] sm:$0xff]
        %v435 = vld [vmem:[#allocation5 + $0x310] sm:$0xff]
        %v436 = vld [vmem:[#allocation5 + $0x318] sm:$0xff]
        %v437 = vld [vmem:[#allocation5 + $0x320] sm:$0xff]
        %v438 = vld [vmem:[#allocation5 + $0x328] sm:$0xff]
        %v439 = vld [vmem:[#allocation5 + $0x330] sm:$0xff]
        %v440 = vld [vmem:[#allocation5 + $0x338] sm:$0xff]
        %v441 = vld [vmem:[#allocation5 + $0x340] sm:$0xff]
        %v442 = vld [vmem:[#allocation5 + $0x348] sm:$0xff]
        %v443 = vld [vmem:[#allocation5 + $0x350] sm:$0xff]
        %v444 = vld [vmem:[#allocation5 + $0x358] sm:$0xff]
        %v445 = vld [vmem:[#allocation5 + $0x360] sm:$0xff]
        %v446 = vld [vmem:[#allocation5 + $0x368] sm:$0xff]
        %v447 = vld [vmem:[#allocation5 + $0x370] sm:$0xff]
        %v448 = vld [vmem:[#allocation5 + $0x378] sm:$0xff]
        %v449 = vld [vmem:[#allocation5 + $0x380] sm:$0xff]
        %v450 = vld [vmem:[#allocation5 + $0x388] sm:$0xff]
        %v451 = vld [vmem:[#allocation5 + $0x390] sm:$0xff]
        %v452 = vld [vmem:[#allocation5 + $0x398] sm:$0xff]
        %v453 = vld [vmem:[#allocation5 + $0x3a0] sm:$0xff]
        %v454 = vld [vmem:[#allocation5 + $0x3a8] sm:$0xff]
        %v455 = vld [vmem:[#allocation5 + $0x3b0] sm:$0xff]
        %v456 = vld [vmem:[#allocation5 + $0x3b8] sm:$0xff]
        %v457 = vld [vmem:[#allocation5 + $0x3c0] sm:$0xff]
        %v458 = vld [vmem:[#allocation5 + $0x3c8] sm:$0xff]
        %v459 = vld [vmem:[#allocation5 + $0x3d0] sm:$0xff]
        %v460 = vld [vmem:[#allocation5 + $0x3d8] sm:$0xff]
        %v461 = vld [vmem:[#allocation5 + $0x3e0] sm:$0xff]
        %v462 = vld [vmem:[#allocation5 + $0x3e8] sm:$0xff]
        %v463 = vld [vmem:[#allocation5 + $0x3f0] sm:$0xff]
        %v464 = vld [vmem:[#allocation5 + $0x3f8] sm:$0xff]
        %v465 = vld [vmem:[#allocation5 + $0x400] sm:$0xff]
        %v466 = vld [vmem:[#allocation5 + $0x408] sm:$0xff]
        %v467 = vld [vmem:[#allocation5 + $0x410] sm:$0xff]
        %v468 = vld [vmem:[#allocation5 + $0x418] sm:$0xff]
        %v469 = vld [vmem:[#allocation5 + $0x420] sm:$0xff]
        %v470 = vld [vmem:[#allocation5 + $0x428] sm:$0xff]
        %v471 = vld [vmem:[#allocation5 + $0x430] sm:$0xff]
        %v472 = vld [vmem:[#allocation5 + $0x438] sm:$0xff]
        %v473 = vld [vmem:[#allocation5 + $0x440] sm:$0xff]
        %v474 = vld [vmem:[#allocation5 + $0x448] sm:$0xff]
        %v475 = vld [vmem:[#allocation5 + $0x450] sm:$0xff]
        %v476 = vld [vmem:[#allocation5 + $0x458] sm:$0xff]
        %v477 = vld [vmem:[#allocation5 + $0x460] sm:$0xff]
        %v478 = vld [vmem:[#allocation5 + $0x468] sm:$0xff]
        %v479 = vld [vmem:[#allocation5 + $0x470] sm:$0xff]
        %v480 = vld [vmem:[#allocation5 + $0x478] sm:$0xff]
        %v481 = vld [vmem:[#allocation5 + $0x480] sm:$0xff]
        %v482 = vld [vmem:[#allocation5 + $0x488] sm:$0xff]
        %v483 = vld [vmem:[#allocation5 + $0x490] sm:$0xff]
        %v484 = vld [vmem:[#allocation5 + $0x498] sm:$0xff]
        %v485 = vld [vmem:[#allocation5 + $0x4a0] sm:$0xff]
        %v486 = vld [vmem:[#allocation5 + $0x4a8] sm:$0xff]
        %v487 = vld [vmem:[#allocation5 + $0x4b0] sm:$0xff]
        %v488 = vld [vmem:[#allocation5 + $0x4b8] sm:$0xff]
        %v489 = vld [vmem:[#allocation5 + $0x4c0] sm:$0xff]
        %v490 = vld [vmem:[#allocation5 + $0x4c8] sm:$0xff]
        %v491 = vld [vmem:[#allocation5 + $0x4d0] sm:$0xff]
        %v492 = vld [vmem:[#allocation5 + $0x4d8] sm:$0xff]
        %v493 = vld [vmem:[#allocation5 + $0x4e0] sm:$0xff]
        %v494 = vld [vmem:[#allocation5 + $0x4e8] sm:$0xff]
        %v495 = vld [vmem:[#allocation5 + $0x4f0] sm:$0xff]
        %v496 = vld [vmem:[#allocation5 + $0x4f8] sm:$0xff]
        %v497 = vld [vmem:[#allocation5 + $0x500] sm:$0xff]
        %v498 = vld [vmem:[#allocation5 + $0x508] sm:$0xff]
        %v499 = vld [vmem:[#allocation5 + $0x510] sm:$0xff]
        %v500 = vld [vmem:[#allocation5 + $0x518] sm:$0xff]
        %v501 = vld [vmem:[#allocation5 + $0x520] sm:$0xff]
        %v502 = vld [vmem:[#allocation5 + $0x528] sm:$0xff]
        %v503 = vld [vmem:[#allocation5 + $0x530] sm:$0xff]
        %v504 = vld [vmem:[#allocation5 + $0x538] sm:$0xff]
        %v505 = vld [vmem:[#allocation5 + $0x540] sm:$0xff]
        %v506 = vld [vmem:[#allocation5 + $0x548] sm:$0xff]
        %v507 = vld [vmem:[#allocation5 + $0x550] sm:$0xff]
        %v508 = vld [vmem:[#allocation5 + $0x558] sm:$0xff]
        %v509 = vld [vmem:[#allocation5 + $0x560] sm:$0xff]
        %v510 = vld [vmem:[#allocation5 + $0x568] sm:$0xff]
        %v511 = vld [vmem:[#allocation5 + $0x570] sm:$0xff]
        %v512 = vld [vmem:[#allocation5 + $0x578] sm:$0xff]
        %v513 = vld [vmem:[#allocation5 + $0x580] sm:$0xff]
        %v514 = vld [vmem:[#allocation5 + $0x588] sm:$0xff]
        %v515 = vld [vmem:[#allocation5 + $0x590] sm:$0xff]
        %v516 = vld [vmem:[#allocation5 + $0x598] sm:$0xff]
        %v517 = vld [vmem:[#allocation5 + $0x5a0] sm:$0xff]
        %v518 = vld [vmem:[#allocation5 + $0x5a8] sm:$0xff]
        %v519 = vld [vmem:[#allocation5 + $0x5b0] sm:$0xff]
        %v520 = vld [vmem:[#allocation5 + $0x5b8] sm:$0xff]
        %v521 = vld [vmem:[#allocation5 + $0x5c0] sm:$0xff]
        %v522 = vld [vmem:[#allocation5 + $0x5c8] sm:$0xff]
        %v523 = vld [vmem:[#allocation5 + $0x5d0] sm:$0xff]
        %v524 = vld [vmem:[#allocation5 + $0x5d8] sm:$0xff]
        %v525 = vld [vmem:[#allocation5 + $0x5e0] sm:$0xff]
        %v526 = vld [vmem:[#allocation5 + $0x5e8] sm:$0xff]
        %v527 = vld [vmem:[#allocation5 + $0x5f0] sm:$0xff]
        %v528 = vld [vmem:[#allocation5 + $0x5f8] sm:$0xff]
        %v529 = vld [vmem:[#allocation5 + $0x600] sm:$0xff]
        %v530 = vld [vmem:[#allocation5 + $0x608] sm:$0xff]
        %v531 = vld [vmem:[#allocation5 + $0x610] sm:$0xff]
        %v532 = vld [vmem:[#allocation5 + $0x618] sm:$0xff]
        %v533 = vld [vmem:[#allocation5 + $0x620] sm:$0xff]
        %v534 = vld [vmem:[#allocation5 + $0x628] sm:$0xff]
        %v535 = vld [vmem:[#allocation5 + $0x630] sm:$0xff]
        %v536 = vld [vmem:[#allocation5 + $0x638] sm:$0xff]
        %v537 = vld [vmem:[#allocation5 + $0x640] sm:$0xff]
        %v538 = vld [vmem:[#allocation5 + $0x648] sm:$0xff]
        %v539 = vld [vmem:[#allocation5 + $0x650] sm:$0xff]
        %v540 = vld [vmem:[#allocation5 + $0x658] sm:$0xff]
        %v541 = vld [vmem:[#allocation5 + $0x660] sm:$0xff]
        %v542 = vld [vmem:[#allocation5 + $0x668] sm:$0xff]
        %v543 = vld [vmem:[#allocation5 + $0x670] sm:$0xff]
        %v544 = vld [vmem:[#allocation5 + $0x678] sm:$0xff]
        %v545 = vld [vmem:[#allocation5 + $0x680] sm:$0xff]
        %v546 = vld [vmem:[#allocation5 + $0x688] sm:$0xff]
        %v547 = vld [vmem:[#allocation5 + $0x690] sm:$0xff]
        %v548 = vld [vmem:[#allocation5 + $0x698] sm:$0xff]
        %v549 = vld [vmem:[#allocation5 + $0x6a0] sm:$0xff]
        %v550 = vld [vmem:[#allocation5 + $0x6a8] sm:$0xff]
        %v551 = vld [vmem:[#allocation5 + $0x6b0] sm:$0xff]
        %v552 = vld [vmem:[#allocation5 + $0x6b8] sm:$0xff]
        %v553 = vld [vmem:[#allocation5 + $0x6c0] sm:$0xff]
        %v554 = vld [vmem:[#allocation5 + $0x6c8] sm:$0xff]
        %v555 = vld [vmem:[#allocation5 + $0x6d0] sm:$0xff]
        %v556 = vld [vmem:[#allocation5 + $0x6d8] sm:$0xff]
        %v557 = vld [vmem:[#allocation5 + $0x6e0] sm:$0xff]
        %v558 = vld [vmem:[#allocation5 + $0x6e8] sm:$0xff]
        %v559 = vld [vmem:[#allocation5 + $0x6f0] sm:$0xff]
        %v560 = vld [vmem:[#allocation5 + $0x6f8] sm:$0xff]
        %v561 = vld [vmem:[#allocation5 + $0x700] sm:$0xff]
        %v562 = vld [vmem:[#allocation5 + $0x708] sm:$0xff]
        %v563 = vld [vmem:[#allocation5 + $0x710] sm:$0xff]
        %v564 = vld [vmem:[#allocation5 + $0x718] sm:$0xff]
        %v565 = vld [vmem:[#allocation5 + $0x720] sm:$0xff]
        %v566 = vld [vmem:[#allocation5 + $0x728] sm:$0xff]
        %v567 = vld [vmem:[#allocation5 + $0x730] sm:$0xff]
        %v568 = vld [vmem:[#allocation5 + $0x738] sm:$0xff]
        %v569 = vld [vmem:[#allocation5 + $0x740] sm:$0xff]
        %v570 = vld [vmem:[#allocation5 + $0x748] sm:$0xff]
        %v571 = vld [vmem:[#allocation5 + $0x750] sm:$0xff]
        %v572 = vld [vmem:[#allocation5 + $0x758] sm:$0xff]
        %v573 = vld [vmem:[#allocation5 + $0x760] sm:$0xff]
        %v574 = vld [vmem:[#allocation5 + $0x768] sm:$0xff]
        %v575 = vld [vmem:[#allocation5 + $0x770] sm:$0xff]
        %v576 = vld [vmem:[#allocation5 + $0x778] sm:$0xff]
        %v577 = vld [vmem:[#allocation5 + $0x780] sm:$0xff]
        %v578 = vld [vmem:[#allocation5 + $0x788] sm:$0xff]
        %v579 = vld [vmem:[#allocation5 + $0x790] sm:$0xff]
        %v580 = vld [vmem:[#allocation5 + $0x798] sm:$0xff]
        %v581 = vld [vmem:[#allocation5 + $0x7a0] sm:$0xff]
        %v582 = vld [vmem:[#allocation5 + $0x7a8] sm:$0xff]
        %v583 = vld [vmem:[#allocation5 + $0x7b0] sm:$0xff]
        %v584 = vld [vmem:[#allocation5 + $0x7b8] sm:$0xff]
        %v585 = vld [vmem:[#allocation5 + $0x7c0] sm:$0xff]
        %v586 = vld [vmem:[#allocation5 + $0x7c8] sm:$0xff]
        %v587 = vld [vmem:[#allocation5 + $0x7d0] sm:$0xff]
        %v588 = vld [vmem:[#allocation5 + $0x7d8] sm:$0xff]
        %v589 = vld [vmem:[#allocation5 + $0x7e0] sm:$0xff]
        %v590 = vld [vmem:[#allocation5 + $0x7e8] sm:$0xff]
        %v591 = vld [vmem:[#allocation5 + $0x7f0] sm:$0xff]
        %v592 = vld [vmem:[#allocation5 + $0x7f8] sm:$0xff]
        %v593 = vld [vmem:[#allocation5 + $0x800] sm:$0xff]
        %v594 = vld [vmem:[#allocation5 + $0x808] sm:$0xff]
        %v595 = vld [vmem:[#allocation5 + $0x810] sm:$0xff]
        %v596 = vld [vmem:[#allocation5 + $0x818] sm:$0xff]
        %v597 = vld [vmem:[#allocation5 + $0x820] sm:$0xff]
        %v598 = vld [vmem:[#allocation5 + $0x828] sm:$0xff]
        %v599 = vld [vmem:[#allocation5 + $0x830] sm:$0xff]
        %v600 = vld [vmem:[#allocation5 + $0x838] sm:$0xff]
        %v601 = vld [vmem:[#allocation5 + $0x840] sm:$0xff]
        %v602 = vld [vmem:[#allocation5 + $0x848] sm:$0xff]
        %v603 = vld [vmem:[#allocation5 + $0x850] sm:$0xff]
        %v604 = vld [vmem:[#allocation5 + $0x858] sm:$0xff]
        %v605 = vld [vmem:[#allocation5 + $0x860] sm:$0xff]
        %v606 = vld [vmem:[#allocation5 + $0x868] sm:$0xff]
        %v607 = vld [vmem:[#allocation5 + $0x870] sm:$0xff]
        %v608 = vld [vmem:[#allocation5 + $0x878] sm:$0xff]
        %v609 = vld [vmem:[#allocation5 + $0x880] sm:$0xff]
        %v610 = vld [vmem:[#allocation5 + $0x888] sm:$0xff]
        %v611 = vld [vmem:[#allocation5 + $0x890] sm:$0xff]
        %v612 = vld [vmem:[#allocation5 + $0x898] sm:$0xff]
        %v613 = vld [vmem:[#allocation5 + $0x8a0] sm:$0xff]
        %v614 = vld [vmem:[#allocation5 + $0x8a8] sm:$0xff]
        %v615 = vld [vmem:[#allocation5 + $0x8b0] sm:$0xff]
        %v616 = vld [vmem:[#allocation5 + $0x8b8] sm:$0xff]
        %v617 = vld [vmem:[#allocation5 + $0x8c0] sm:$0xff]
        %v618 = vld [vmem:[#allocation5 + $0x8c8] sm:$0xff]
        %v619 = vld [vmem:[#allocation5 + $0x8d0] sm:$0xff]
        %v620 = vld [vmem:[#allocation5 + $0x8d8] sm:$0xff]
        %v621 = vld [vmem:[#allocation5 + $0x8e0] sm:$0xff]
        %v622 = vld [vmem:[#allocation5 + $0x8e8] sm:$0xff]
        %v623 = vld [vmem:[#allocation5 + $0x8f0] sm:$0xff]
        %v624 = vld [vmem:[#allocation5 + $0x8f8] sm:$0xff]
        %v625 = vld [vmem:[#allocation7] sm:$0xff]
        %v626 = vld [vmem:[#allocation7 + $0x8] sm:$0xf]
        %v629 = vlaneseq
        %v630 = vshrl.u32 %v629, 7
        %v631 = vsub.s32 0, %v630
        %v632 = vrot.slane %v625, %v631
        %v633 = vlaneseq
        %v634 = vshrl.u32 %v633, 7
        %v635 = vsub.s32 1, %v634
        %v636 = vrot.slane %v625, %v635
        %v637 = vlaneseq
        %v638 = vshrl.u32 %v637, 7
        %v639 = vsub.s32 2, %v638
        %v640 = vrot.slane %v625, %v639
        %v641 = vlaneseq
        %v642 = vshrl.u32 %v641, 7
        %v643 = vsub.s32 3, %v642
        %v644 = vrot.slane %v625, %v643
        %v645 = vlaneseq
        %v646 = vshrl.u32 %v645, 7
        %v647 = vsub.s32 4, %v646
        %v648 = vrot.slane %v625, %v647
        %v649 = vlaneseq
        %v650 = vshrl.u32 %v649, 7
        %v651 = vsub.s32 5, %v650
        %v652 = vrot.slane %v625, %v651
        %v653 = vlaneseq
        %v654 = vshrl.u32 %v653, 7
        %v655 = vsub.s32 6, %v654
        %v656 = vrot.slane %v625, %v655
        %v657 = vlaneseq
        %v658 = vshrl.u32 %v657, 7
        %v659 = vsub.s32 7, %v658
        %v660 = vrot.slane %v625, %v659
        %v661 = vlaneseq
        %v662 = vshrl.u32 %v661, 7
        %v663 = vsub.s32 0, %v662
        %v664 = vrot.slane %v626, %v663
        %v665 = vlaneseq
        %v666 = vshrl.u32 %v665, 7
        %v667 = vsub.s32 1, %v666
        %v668 = vrot.slane %v626, %v667
        %v669 = vlaneseq
        %v670 = vshrl.u32 %v669, 7
        %v671 = vsub.s32 2, %v670
        %v672 = vrot.slane %v626, %v671
        %v673 = vlaneseq
        %v674 = vshrl.u32 %v673, 7
        %v675 = vsub.s32 3, %v674
        %v676 = vrot.slane %v626, %v675
        %v977 = vunpack.c.l.b16 %v337
        %v978 = vunpack.c.h.b16 %v337
        %v979 = vunpack.c.l.b16 %v338
        %v980 = vunpack.c.h.b16 %v338
        %v981 = vunpack.c.l.b16 %v339
        %v982 = vunpack.c.h.b16 %v339
        %v983 = vunpack.c.l.b16 %v340
        %v984 = vunpack.c.h.b16 %v340
        %v985 = vunpack.c.l.b16 %v341
        %v986 = vunpack.c.h.b16 %v341
        %v987 = vunpack.c.l.b16 %v342
        %v988 = vunpack.c.h.b16 %v342
        %v989 = vunpack.c.l.b16 %v343
        %v990 = vunpack.c.h.b16 %v343
        %v991 = vunpack.c.l.b16 %v344
        %v992 = vunpack.c.h.b16 %v344
        %v993 = vunpack.c.l.b16 %v345
        %v994 = vunpack.c.h.b16 %v345
        %v995 = vunpack.c.l.b16 %v346
        %v996 = vunpack.c.h.b16 %v346
        %v997 = vunpack.c.l.b16 %v347
        %v998 = vunpack.c.h.b16 %v347
        %v999 = vunpack.c.l.b16 %v348
        %v1000 = vunpack.c.h.b16 %v348
        %v1001 = vunpack.c.l.b16 %v349
        %v1002 = vunpack.c.h.b16 %v349
        %v1003 = vunpack.c.l.b16 %v350
        %v1004 = vunpack.c.h.b16 %v350
        %v1005 = vunpack.c.l.b16 %v351
        %v1006 = vunpack.c.h.b16 %v351
        %v1007 = vunpack.c.l.b16 %v352
        %v1008 = vunpack.c.h.b16 %v352
        %v1009 = vunpack.c.l.b16 %v353
        %v1010 = vunpack.c.h.b16 %v353
        %v1011 = vunpack.c.l.b16 %v354
        %v1012 = vunpack.c.h.b16 %v354
        %v1013 = vunpack.c.l.b16 %v355
        %v1014 = vunpack.c.h.b16 %v355
        %v1015 = vunpack.c.l.b16 %v356
        %v1016 = vunpack.c.h.b16 %v356
        %v1017 = vunpack.c.l.b16 %v357
        %v1018 = vunpack.c.h.b16 %v357
        %v1019 = vunpack.c.l.b16 %v358
        %v1020 = vunpack.c.h.b16 %v358
        %v1021 = vunpack.c.l.b16 %v359
        %v1022 = vunpack.c.h.b16 %v359
        %v1023 = vunpack.c.l.b16 %v360
        %v1024 = vunpack.c.h.b16 %v360
        %v1025 = vunpack.c.l.b16 %v361
        %v1026 = vunpack.c.h.b16 %v361
        %v1027 = vunpack.c.l.b16 %v362
        %v1028 = vunpack.c.h.b16 %v362
        %v1029 = vunpack.c.l.b16 %v363
        %v1030 = vunpack.c.h.b16 %v363
        %v1031 = vunpack.c.l.b16 %v364
        %v1032 = vunpack.c.h.b16 %v364
        %v1033 = vunpack.c.l.b16 %v365
        %v1034 = vunpack.c.h.b16 %v365
        %v1035 = vunpack.c.l.b16 %v366
        %v1036 = vunpack.c.h.b16 %v366
        %v1037 = vunpack.c.l.b16 %v367
        %v1038 = vunpack.c.h.b16 %v367
        %v1039 = vunpack.c.l.b16 %v368
        %v1040 = vunpack.c.h.b16 %v368
        %v1041 = vunpack.c.l.b16 %v369
        %v1042 = vunpack.c.h.b16 %v369
        %v1043 = vunpack.c.l.b16 %v370
        %v1044 = vunpack.c.h.b16 %v370
        %v1045 = vunpack.c.l.b16 %v371
        %v1046 = vunpack.c.h.b16 %v371
        %v1047 = vunpack.c.l.b16 %v372
        %v1048 = vunpack.c.h.b16 %v372
        %v1049 = vunpack.c.l.b16 %v373
        %v1050 = vunpack.c.h.b16 %v373
        %v1051 = vunpack.c.l.b16 %v374
        %v1052 = vunpack.c.h.b16 %v374
        %v1053 = vunpack.c.l.b16 %v375
        %v1054 = vunpack.c.h.b16 %v375
        %v1055 = vunpack.c.l.b16 %v376
        %v1056 = vunpack.c.h.b16 %v376
        %v1057 = vunpack.c.l.b16 %v377
        %v1058 = vunpack.c.h.b16 %v377
        %v1059 = vunpack.c.l.b16 %v378
        %v1060 = vunpack.c.h.b16 %v378
        %v1061 = vunpack.c.l.b16 %v379
        %v1062 = vunpack.c.h.b16 %v379
        %v1063 = vunpack.c.l.b16 %v380
        %v1064 = vunpack.c.h.b16 %v380
        %v1065 = vunpack.c.l.b16 %v381
        %v1066 = vunpack.c.h.b16 %v381
        %v1067 = vunpack.c.l.b16 %v382
        %v1068 = vunpack.c.h.b16 %v382
        %v1069 = vunpack.c.l.b16 %v383
        %v1070 = vunpack.c.h.b16 %v383
        %v1071 = vunpack.c.l.b16 %v384
        %v1072 = vunpack.c.h.b16 %v384
        %v1073 = vunpack.c.l.b16 %v385
        %v1074 = vunpack.c.h.b16 %v385
        %v1075 = vunpack.c.l.b16 %v386
        %v1076 = vunpack.c.h.b16 %v386
        %v1077 = vunpack.c.l.b16 %v387
        %v1078 = vunpack.c.h.b16 %v387
        %v1079 = vunpack.c.l.b16 %v388
        %v1080 = vunpack.c.h.b16 %v388
        %v1081 = vunpack.c.l.b16 %v389
        %v1082 = vunpack.c.h.b16 %v389
        %v1083 = vunpack.c.l.b16 %v390
        %v1084 = vunpack.c.h.b16 %v390
        %v1085 = vunpack.c.l.b16 %v391
        %v1086 = vunpack.c.h.b16 %v391
        %v1087 = vunpack.c.l.b16 %v392
        %v1088 = vunpack.c.h.b16 %v392
        %v1089 = vunpack.c.l.b16 %v393
        %v1090 = vunpack.c.h.b16 %v393
        %v1091 = vunpack.c.l.b16 %v394
        %v1092 = vunpack.c.h.b16 %v394
        %v1093 = vunpack.c.l.b16 %v395
        %v1094 = vunpack.c.h.b16 %v395
        %v1095 = vunpack.c.l.b16 %v396
        %v1096 = vunpack.c.h.b16 %v396
        %v1097 = vunpack.c.l.b16 %v397
        %v1098 = vunpack.c.h.b16 %v397
        %v1099 = vunpack.c.l.b16 %v398
        %v1100 = vunpack.c.h.b16 %v398
        %v1101 = vunpack.c.l.b16 %v399
        %v1102 = vunpack.c.h.b16 %v399
        %v1103 = vunpack.c.l.b16 %v400
        %v1104 = vunpack.c.h.b16 %v400
        %v1105 = vunpack.c.l.b16 %v401
        %v1106 = vunpack.c.h.b16 %v401
        %v1107 = vunpack.c.l.b16 %v402
        %v1108 = vunpack.c.h.b16 %v402
        %v1109 = vunpack.c.l.b16 %v403
        %v1110 = vunpack.c.h.b16 %v403
        %v1111 = vunpack.c.l.b16 %v404
        %v1112 = vunpack.c.h.b16 %v404
        %v1113 = vunpack.c.l.b16 %v405
        %v1114 = vunpack.c.h.b16 %v405
        %v1115 = vunpack.c.l.b16 %v406
        %v1116 = vunpack.c.h.b16 %v406
        %v1117 = vunpack.c.l.b16 %v407
        %v1118 = vunpack.c.h.b16 %v407
        %v1119 = vunpack.c.l.b16 %v408
        %v1120 = vunpack.c.h.b16 %v408
        %v1121 = vunpack.c.l.b16 %v409
        %v1122 = vunpack.c.h.b16 %v409
        %v1123 = vunpack.c.l.b16 %v410
        %v1124 = vunpack.c.h.b16 %v410
        %v1125 = vunpack.c.l.b16 %v411
        %v1126 = vunpack.c.h.b16 %v411
        %v1127 = vunpack.c.l.b16 %v412
        %v1128 = vunpack.c.h.b16 %v412
        %v1129 = vunpack.c.l.b16 %v413
        %v1130 = vunpack.c.h.b16 %v413
        %v1131 = vunpack.c.l.b16 %v414
        %v1132 = vunpack.c.h.b16 %v414
        %v1133 = vunpack.c.l.b16 %v415
        %v1134 = vunpack.c.h.b16 %v415
        %v1135 = vunpack.c.l.b16 %v416
        %v1136 = vunpack.c.h.b16 %v416
        %v1137 = vunpack.c.l.b16 %v417
        %v1138 = vunpack.c.h.b16 %v417
        %v1139 = vunpack.c.l.b16 %v418
        %v1140 = vunpack.c.h.b16 %v418
        %v1141 = vunpack.c.l.b16 %v419
        %v1142 = vunpack.c.h.b16 %v419
        %v1143 = vunpack.c.l.b16 %v420
        %v1144 = vunpack.c.h.b16 %v420
        %v1145 = vunpack.c.l.b16 %v421
        %v1146 = vunpack.c.h.b16 %v421
        %v1147 = vunpack.c.l.b16 %v422
        %v1148 = vunpack.c.h.b16 %v422
        %v1149 = vunpack.c.l.b16 %v423
        %v1150 = vunpack.c.h.b16 %v423
        %v1151 = vunpack.c.l.b16 %v424
        %v1152 = vunpack.c.h.b16 %v424
        %v1153 = vunpack.c.l.b16 %v425
        %v1154 = vunpack.c.h.b16 %v425
        %v1155 = vunpack.c.l.b16 %v426
        %v1156 = vunpack.c.h.b16 %v426
        %v1157 = vunpack.c.l.b16 %v427
        %v1158 = vunpack.c.h.b16 %v427
        %v1159 = vunpack.c.l.b16 %v428
        %v1160 = vunpack.c.h.b16 %v428
        %v1161 = vunpack.c.l.b16 %v429
        %v1162 = vunpack.c.h.b16 %v429
        %v1163 = vunpack.c.l.b16 %v430
        %v1164 = vunpack.c.h.b16 %v430
        %v1165 = vunpack.c.l.b16 %v431
        %v1166 = vunpack.c.h.b16 %v431
        %v1167 = vunpack.c.l.b16 %v432
        %v1168 = vunpack.c.h.b16 %v432
        %v1169 = vunpack.c.l.b16 %v433
        %v1170 = vunpack.c.h.b16 %v433
        %v1171 = vunpack.c.l.b16 %v434
        %v1172 = vunpack.c.h.b16 %v434
        %v1173 = vunpack.c.l.b16 %v435
        %v1174 = vunpack.c.h.b16 %v435
        %v1175 = vunpack.c.l.b16 %v436
        %v1176 = vunpack.c.h.b16 %v436
        %v1177 = vunpack.c.l.b16 %v437
        %v1178 = vunpack.c.h.b16 %v437
        %v1179 = vunpack.c.l.b16 %v438
        %v1180 = vunpack.c.h.b16 %v438
        %v1181 = vunpack.c.l.b16 %v439
        %v1182 = vunpack.c.h.b16 %v439
        %v1183 = vunpack.c.l.b16 %v440
        %v1184 = vunpack.c.h.b16 %v440
        %v1185 = vunpack.c.l.b16 %v441
        %v1186 = vunpack.c.h.b16 %v441
        %v1187 = vunpack.c.l.b16 %v442
        %v1188 = vunpack.c.h.b16 %v442
        %v1189 = vunpack.c.l.b16 %v443
        %v1190 = vunpack.c.h.b16 %v443
        %v1191 = vunpack.c.l.b16 %v444
        %v1192 = vunpack.c.h.b16 %v444
        %v1193 = vunpack.c.l.b16 %v445
        %v1194 = vunpack.c.h.b16 %v445
        %v1195 = vunpack.c.l.b16 %v446
        %v1196 = vunpack.c.h.b16 %v446
        %v1197 = vunpack.c.l.b16 %v447
        %v1198 = vunpack.c.h.b16 %v447
        %v1199 = vunpack.c.l.b16 %v448
        %v1200 = vunpack.c.h.b16 %v448
        %v1201 = vunpack.c.l.b16 %v449
        %v1202 = vunpack.c.h.b16 %v449
        %v1203 = vunpack.c.l.b16 %v450
        %v1204 = vunpack.c.h.b16 %v450
        %v1205 = vunpack.c.l.b16 %v451
        %v1206 = vunpack.c.h.b16 %v451
        %v1207 = vunpack.c.l.b16 %v452
        %v1208 = vunpack.c.h.b16 %v452
        %v1209 = vunpack.c.l.b16 %v453
        %v1210 = vunpack.c.h.b16 %v453
        %v1211 = vunpack.c.l.b16 %v454
        %v1212 = vunpack.c.h.b16 %v454
        %v1213 = vunpack.c.l.b16 %v455
        %v1214 = vunpack.c.h.b16 %v455
        %v1215 = vunpack.c.l.b16 %v456
        %v1216 = vunpack.c.h.b16 %v456
        %v1217 = vunpack.c.l.b16 %v457
        %v1218 = vunpack.c.h.b16 %v457
        %v1219 = vunpack.c.l.b16 %v458
        %v1220 = vunpack.c.h.b16 %v458
        %v1221 = vunpack.c.l.b16 %v459
        %v1222 = vunpack.c.h.b16 %v459
        %v1223 = vunpack.c.l.b16 %v460
        %v1224 = vunpack.c.h.b16 %v460
        %v1225 = vunpack.c.l.b16 %v461
        %v1226 = vunpack.c.h.b16 %v461
        %v1227 = vunpack.c.l.b16 %v462
        %v1228 = vunpack.c.h.b16 %v462
        %v1229 = vunpack.c.l.b16 %v463
        %v1230 = vunpack.c.h.b16 %v463
        %v1231 = vunpack.c.l.b16 %v464
        %v1232 = vunpack.c.h.b16 %v464
        %v1233 = vunpack.c.l.b16 %v465
        %v1234 = vunpack.c.h.b16 %v465
        %v1235 = vunpack.c.l.b16 %v466
        %v1236 = vunpack.c.h.b16 %v466
        %v1237 = vunpack.c.l.b16 %v467
        %v1238 = vunpack.c.h.b16 %v467
        %v1239 = vunpack.c.l.b16 %v468
        %v1240 = vunpack.c.h.b16 %v468
        %v1241 = vunpack.c.l.b16 %v469
        %v1242 = vunpack.c.h.b16 %v469
        %v1243 = vunpack.c.l.b16 %v470
        %v1244 = vunpack.c.h.b16 %v470
        %v1245 = vunpack.c.l.b16 %v471
        %v1246 = vunpack.c.h.b16 %v471
        %v1247 = vunpack.c.l.b16 %v472
        %v1248 = vunpack.c.h.b16 %v472
        %v1249 = vunpack.c.l.b16 %v473
        %v1250 = vunpack.c.h.b16 %v473
        %v1251 = vunpack.c.l.b16 %v474
        %v1252 = vunpack.c.h.b16 %v474
        %v1253 = vunpack.c.l.b16 %v475
        %v1254 = vunpack.c.h.b16 %v475
        %v1255 = vunpack.c.l.b16 %v476
        %v1256 = vunpack.c.h.b16 %v476
        %v1257 = vunpack.c.l.b16 %v477
        %v1258 = vunpack.c.h.b16 %v477
        %v1259 = vunpack.c.l.b16 %v478
        %v1260 = vunpack.c.h.b16 %v478
        %v1261 = vunpack.c.l.b16 %v479
        %v1262 = vunpack.c.h.b16 %v479
        %v1263 = vunpack.c.l.b16 %v480
        %v1264 = vunpack.c.h.b16 %v480
        %v1265 = vunpack.c.l.b16 %v481
        %v1266 = vunpack.c.h.b16 %v481
        %v1267 = vunpack.c.l.b16 %v482
        %v1268 = vunpack.c.h.b16 %v482
        %v1269 = vunpack.c.l.b16 %v483
        %v1270 = vunpack.c.h.b16 %v483
        %v1271 = vunpack.c.l.b16 %v484
        %v1272 = vunpack.c.h.b16 %v484
        %v1273 = vunpack.c.l.b16 %v485
        %v1274 = vunpack.c.h.b16 %v485
        %v1275 = vunpack.c.l.b16 %v486
        %v1276 = vunpack.c.h.b16 %v486
        %v1277 = vunpack.c.l.b16 %v487
        %v1278 = vunpack.c.h.b16 %v487
        %v1279 = vunpack.c.l.b16 %v488
        %v1280 = vunpack.c.h.b16 %v488
        %v1281 = vunpack.c.l.b16 %v489
        %v1282 = vunpack.c.h.b16 %v489
        %v1283 = vunpack.c.l.b16 %v490
        %v1284 = vunpack.c.h.b16 %v490
        %v1285 = vunpack.c.l.b16 %v491
        %v1286 = vunpack.c.h.b16 %v491
        %v1287 = vunpack.c.l.b16 %v492
        %v1288 = vunpack.c.h.b16 %v492
        %v1289 = vunpack.c.l.b16 %v493
        %v1290 = vunpack.c.h.b16 %v493
        %v1291 = vunpack.c.l.b16 %v494
        %v1292 = vunpack.c.h.b16 %v494
        %v1293 = vunpack.c.l.b16 %v495
        %v1294 = vunpack.c.h.b16 %v495
        %v1295 = vunpack.c.l.b16 %v496
        %v1296 = vunpack.c.h.b16 %v496
        %v1297 = vunpack.c.l.b16 %v497
        %v1298 = vunpack.c.h.b16 %v497
        %v1299 = vunpack.c.l.b16 %v498
        %v1300 = vunpack.c.h.b16 %v498
        %v1301 = vunpack.c.l.b16 %v499
        %v1302 = vunpack.c.h.b16 %v499
        %v1303 = vunpack.c.l.b16 %v500
        %v1304 = vunpack.c.h.b16 %v500
        %v1305 = vunpack.c.l.b16 %v501
        %v1306 = vunpack.c.h.b16 %v501
        %v1307 = vunpack.c.l.b16 %v502
        %v1308 = vunpack.c.h.b16 %v502
        %v1309 = vunpack.c.l.b16 %v503
        %v1310 = vunpack.c.h.b16 %v503
        %v1311 = vunpack.c.l.b16 %v504
        %v1312 = vunpack.c.h.b16 %v504
        %v1313 = vunpack.c.l.b16 %v505
        %v1314 = vunpack.c.h.b16 %v505
        %v1315 = vunpack.c.l.b16 %v506
        %v1316 = vunpack.c.h.b16 %v506
        %v1317 = vunpack.c.l.b16 %v507
        %v1318 = vunpack.c.h.b16 %v507
        %v1319 = vunpack.c.l.b16 %v508
        %v1320 = vunpack.c.h.b16 %v508
        %v1321 = vunpack.c.l.b16 %v509
        %v1322 = vunpack.c.h.b16 %v509
        %v1323 = vunpack.c.l.b16 %v510
        %v1324 = vunpack.c.h.b16 %v510
        %v1325 = vunpack.c.l.b16 %v511
        %v1326 = vunpack.c.h.b16 %v511
        %v1327 = vunpack.c.l.b16 %v512
        %v1328 = vunpack.c.h.b16 %v512
        %v1329 = vunpack.c.l.b16 %v513
        %v1330 = vunpack.c.h.b16 %v513
        %v1331 = vunpack.c.l.b16 %v514
        %v1332 = vunpack.c.h.b16 %v514
        %v1333 = vunpack.c.l.b16 %v515
        %v1334 = vunpack.c.h.b16 %v515
        %v1335 = vunpack.c.l.b16 %v516
        %v1336 = vunpack.c.h.b16 %v516
        %v1337 = vunpack.c.l.b16 %v517
        %v1338 = vunpack.c.h.b16 %v517
        %v1339 = vunpack.c.l.b16 %v518
        %v1340 = vunpack.c.h.b16 %v518
        %v1341 = vunpack.c.l.b16 %v519
        %v1342 = vunpack.c.h.b16 %v519
        %v1343 = vunpack.c.l.b16 %v520
        %v1344 = vunpack.c.h.b16 %v520
        %v1345 = vunpack.c.l.b16 %v521
        %v1346 = vunpack.c.h.b16 %v521
        %v1347 = vunpack.c.l.b16 %v522
        %v1348 = vunpack.c.h.b16 %v522
        %v1349 = vunpack.c.l.b16 %v523
        %v1350 = vunpack.c.h.b16 %v523
        %v1351 = vunpack.c.l.b16 %v524
        %v1352 = vunpack.c.h.b16 %v524
        %v1353 = vunpack.c.l.b16 %v525
        %v1354 = vunpack.c.h.b16 %v525
        %v1355 = vunpack.c.l.b16 %v526
        %v1356 = vunpack.c.h.b16 %v526
        %v1357 = vunpack.c.l.b16 %v527
        %v1358 = vunpack.c.h.b16 %v527
        %v1359 = vunpack.c.l.b16 %v528
        %v1360 = vunpack.c.h.b16 %v528
        %v1361 = vunpack.c.l.b16 %v529
        %v1362 = vunpack.c.h.b16 %v529
        %v1363 = vunpack.c.l.b16 %v530
        %v1364 = vunpack.c.h.b16 %v530
        %v1365 = vunpack.c.l.b16 %v531
        %v1366 = vunpack.c.h.b16 %v531
        %v1367 = vunpack.c.l.b16 %v532
        %v1368 = vunpack.c.h.b16 %v532
        %v1369 = vunpack.c.l.b16 %v533
        %v1370 = vunpack.c.h.b16 %v533
        %v1371 = vunpack.c.l.b16 %v534
        %v1372 = vunpack.c.h.b16 %v534
        %v1373 = vunpack.c.l.b16 %v535
        %v1374 = vunpack.c.h.b16 %v535
        %v1375 = vunpack.c.l.b16 %v536
        %v1376 = vunpack.c.h.b16 %v536
        %v1377 = vunpack.c.l.b16 %v537
        %v1378 = vunpack.c.h.b16 %v537
        %v1379 = vunpack.c.l.b16 %v538
        %v1380 = vunpack.c.h.b16 %v538
        %v1381 = vunpack.c.l.b16 %v539
        %v1382 = vunpack.c.h.b16 %v539
        %v1383 = vunpack.c.l.b16 %v540
        %v1384 = vunpack.c.h.b16 %v540
        %v1385 = vunpack.c.l.b16 %v541
        %v1386 = vunpack.c.h.b16 %v541
        %v1387 = vunpack.c.l.b16 %v542
        %v1388 = vunpack.c.h.b16 %v542
        %v1389 = vunpack.c.l.b16 %v543
        %v1390 = vunpack.c.h.b16 %v543
        %v1391 = vunpack.c.l.b16 %v544
        %v1392 = vunpack.c.h.b16 %v544
        %v1393 = vunpack.c.l.b16 %v545
        %v1394 = vunpack.c.h.b16 %v545
        %v1395 = vunpack.c.l.b16 %v546
        %v1396 = vunpack.c.h.b16 %v546
        %v1397 = vunpack.c.l.b16 %v547
        %v1398 = vunpack.c.h.b16 %v547
        %v1399 = vunpack.c.l.b16 %v548
        %v1400 = vunpack.c.h.b16 %v548
        %v1401 = vunpack.c.l.b16 %v549
        %v1402 = vunpack.c.h.b16 %v549
        %v1403 = vunpack.c.l.b16 %v550
        %v1404 = vunpack.c.h.b16 %v550
        %v1405 = vunpack.c.l.b16 %v551
        %v1406 = vunpack.c.h.b16 %v551
        %v1407 = vunpack.c.l.b16 %v552
        %v1408 = vunpack.c.h.b16 %v552
        %v1409 = vunpack.c.l.b16 %v553
        %v1410 = vunpack.c.h.b16 %v553
        %v1411 = vunpack.c.l.b16 %v554
        %v1412 = vunpack.c.h.b16 %v554
        %v1413 = vunpack.c.l.b16 %v555
        %v1414 = vunpack.c.h.b16 %v555
        %v1415 = vunpack.c.l.b16 %v556
        %v1416 = vunpack.c.h.b16 %v556
        %v1417 = vunpack.c.l.b16 %v557
        %v1418 = vunpack.c.h.b16 %v557
        %v1419 = vunpack.c.l.b16 %v558
        %v1420 = vunpack.c.h.b16 %v558
        %v1421 = vunpack.c.l.b16 %v559
        %v1422 = vunpack.c.h.b16 %v559
        %v1423 = vunpack.c.l.b16 %v560
        %v1424 = vunpack.c.h.b16 %v560
        %v1425 = vunpack.c.l.b16 %v561
        %v1426 = vunpack.c.h.b16 %v561
        %v1427 = vunpack.c.l.b16 %v562
        %v1428 = vunpack.c.h.b16 %v562
        %v1429 = vunpack.c.l.b16 %v563
        %v1430 = vunpack.c.h.b16 %v563
        %v1431 = vunpack.c.l.b16 %v564
        %v1432 = vunpack.c.h.b16 %v564
        %v1433 = vunpack.c.l.b16 %v565
        %v1434 = vunpack.c.h.b16 %v565
        %v1435 = vunpack.c.l.b16 %v566
        %v1436 = vunpack.c.h.b16 %v566
        %v1437 = vunpack.c.l.b16 %v567
        %v1438 = vunpack.c.h.b16 %v567
        %v1439 = vunpack.c.l.b16 %v568
        %v1440 = vunpack.c.h.b16 %v568
        %v1441 = vunpack.c.l.b16 %v569
        %v1442 = vunpack.c.h.b16 %v569
        %v1443 = vunpack.c.l.b16 %v570
        %v1444 = vunpack.c.h.b16 %v570
        %v1445 = vunpack.c.l.b16 %v571
        %v1446 = vunpack.c.h.b16 %v571
        %v1447 = vunpack.c.l.b16 %v572
        %v1448 = vunpack.c.h.b16 %v572
        %v1449 = vunpack.c.l.b16 %v573
        %v1450 = vunpack.c.h.b16 %v573
        %v1451 = vunpack.c.l.b16 %v574
        %v1452 = vunpack.c.h.b16 %v574
        %v1453 = vunpack.c.l.b16 %v575
        %v1454 = vunpack.c.h.b16 %v575
        %v1455 = vunpack.c.l.b16 %v576
        %v1456 = vunpack.c.h.b16 %v576
        %v1457 = vunpack.c.l.b16 %v577
        %v1458 = vunpack.c.h.b16 %v577
        %v1459 = vunpack.c.l.b16 %v578
        %v1460 = vunpack.c.h.b16 %v578
        %v1461 = vunpack.c.l.b16 %v579
        %v1462 = vunpack.c.h.b16 %v579
        %v1463 = vunpack.c.l.b16 %v580
        %v1464 = vunpack.c.h.b16 %v580
        %v1465 = vunpack.c.l.b16 %v581
        %v1466 = vunpack.c.h.b16 %v581
        %v1467 = vunpack.c.l.b16 %v582
        %v1468 = vunpack.c.h.b16 %v582
        %v1469 = vunpack.c.l.b16 %v583
        %v1470 = vunpack.c.h.b16 %v583
        %v1471 = vunpack.c.l.b16 %v584
        %v1472 = vunpack.c.h.b16 %v584
        %v1473 = vunpack.c.l.b16 %v585
        %v1474 = vunpack.c.h.b16 %v585
        %v1475 = vunpack.c.l.b16 %v586
        %v1476 = vunpack.c.h.b16 %v586
        %v1477 = vunpack.c.l.b16 %v587
        %v1478 = vunpack.c.h.b16 %v587
        %v1479 = vunpack.c.l.b16 %v588
        %v1480 = vunpack.c.h.b16 %v588
        %v1481 = vunpack.c.l.b16 %v589
        %v1482 = vunpack.c.h.b16 %v589
        %v1483 = vunpack.c.l.b16 %v590
        %v1484 = vunpack.c.h.b16 %v590
        %v1485 = vunpack.c.l.b16 %v591
        %v1486 = vunpack.c.h.b16 %v591
        %v1487 = vunpack.c.l.b16 %v592
        %v1488 = vunpack.c.h.b16 %v592
        %v1489 = vunpack.c.l.b16 %v593
        %v1490 = vunpack.c.h.b16 %v593
        %v1491 = vunpack.c.l.b16 %v594
        %v1492 = vunpack.c.h.b16 %v594
        %v1493 = vunpack.c.l.b16 %v595
        %v1494 = vunpack.c.h.b16 %v595
        %v1495 = vunpack.c.l.b16 %v596
        %v1496 = vunpack.c.h.b16 %v596
        %v1497 = vunpack.c.l.b16 %v597
        %v1498 = vunpack.c.h.b16 %v597
        %v1499 = vunpack.c.l.b16 %v598
        %v1500 = vunpack.c.h.b16 %v598
        %v1501 = vunpack.c.l.b16 %v599
        %v1502 = vunpack.c.h.b16 %v599
        %v1503 = vunpack.c.l.b16 %v600
        %v1504 = vunpack.c.h.b16 %v600
        %v1505 = vunpack.c.l.b16 %v601
        %v1506 = vunpack.c.h.b16 %v601
        %v1507 = vunpack.c.l.b16 %v602
        %v1508 = vunpack.c.h.b16 %v602
        %v1509 = vunpack.c.l.b16 %v603
        %v1510 = vunpack.c.h.b16 %v603
        %v1511 = vunpack.c.l.b16 %v604
        %v1512 = vunpack.c.h.b16 %v604
        %v1513 = vunpack.c.l.b16 %v605
        %v1514 = vunpack.c.h.b16 %v605
        %v1515 = vunpack.c.l.b16 %v606
        %v1516 = vunpack.c.h.b16 %v606
        %v1517 = vunpack.c.l.b16 %v607
        %v1518 = vunpack.c.h.b16 %v607
        %v1519 = vunpack.c.l.b16 %v608
        %v1520 = vunpack.c.h.b16 %v608
        %v1521 = vunpack.c.l.b16 %v609
        %v1522 = vunpack.c.h.b16 %v609
        %v1523 = vunpack.c.l.b16 %v610
        %v1524 = vunpack.c.h.b16 %v610
        %v1525 = vunpack.c.l.b16 %v611
        %v1526 = vunpack.c.h.b16 %v611
        %v1527 = vunpack.c.l.b16 %v612
        %v1528 = vunpack.c.h.b16 %v612
        %v1529 = vunpack.c.l.b16 %v613
        %v1530 = vunpack.c.h.b16 %v613
        %v1531 = vunpack.c.l.b16 %v614
        %v1532 = vunpack.c.h.b16 %v614
        %v1533 = vunpack.c.l.b16 %v615
        %v1534 = vunpack.c.h.b16 %v615
        %v1535 = vunpack.c.l.b16 %v616
        %v1536 = vunpack.c.h.b16 %v616
        %v1537 = vunpack.c.l.b16 %v617
        %v1538 = vunpack.c.h.b16 %v617
        %v1539 = vunpack.c.l.b16 %v618
        %v1540 = vunpack.c.h.b16 %v618
        %v1541 = vunpack.c.l.b16 %v619
        %v1542 = vunpack.c.h.b16 %v619
        %v1543 = vunpack.c.l.b16 %v620
        %v1544 = vunpack.c.h.b16 %v620
        %v1545 = vunpack.c.l.b16 %v621
        %v1546 = vunpack.c.h.b16 %v621
        %v1547 = vunpack.c.l.b16 %v622
        %v1548 = vunpack.c.h.b16 %v622
        %v1549 = vunpack.c.l.b16 %v623
        %v1550 = vunpack.c.h.b16 %v623
        %v1551 = vunpack.c.l.b16 %v624
        %v1552 = vunpack.c.h.b16 %v624
        %v1553 = vpack.c.b16 %v989, %v977
        %v1554 = vpack.c.b16 %v990, %v978
        %v1555 = vpack.c.b16 %v991, %v979
        %v1556 = vpack.c.b16 %v992, %v980
        %v1557 = vpack.c.b16 %v993, %v981
        %v1558 = vpack.c.b16 %v994, %v982
        %v1559 = vpack.c.b16 %v995, %v983
        %v1560 = vpack.c.b16 %v996, %v984
        %v1561 = vpack.c.b16 %v997, %v985
        %v1562 = vpack.c.b16 %v998, %v986
        %v1563 = vpack.c.b16 %v999, %v987
        %v1564 = vpack.c.b16 %v1000, %v988
        %v1565 = vpack.c.b16 %v1013, %v1001
        %v1566 = vpack.c.b16 %v1014, %v1002
        %v1567 = vpack.c.b16 %v1015, %v1003
        %v1568 = vpack.c.b16 %v1016, %v1004
        %v1569 = vpack.c.b16 %v1017, %v1005
        %v1570 = vpack.c.b16 %v1018, %v1006
        %v1571 = vpack.c.b16 %v1019, %v1007
        %v1572 = vpack.c.b16 %v1020, %v1008
        %v1573 = vpack.c.b16 %v1021, %v1009
        %v1574 = vpack.c.b16 %v1022, %v1010
        %v1575 = vpack.c.b16 %v1023, %v1011
        %v1576 = vpack.c.b16 %v1024, %v1012
        %v1577 = vpack.c.b16 %v1037, %v1025
        %v1578 = vpack.c.b16 %v1038, %v1026
        %v1579 = vpack.c.b16 %v1039, %v1027
        %v1580 = vpack.c.b16 %v1040, %v1028
        %v1581 = vpack.c.b16 %v1041, %v1029
        %v1582 = vpack.c.b16 %v1042, %v1030
        %v1583 = vpack.c.b16 %v1043, %v1031
        %v1584 = vpack.c.b16 %v1044, %v1032
        %v1585 = vpack.c.b16 %v1045, %v1033
        %v1586 = vpack.c.b16 %v1046, %v1034
        %v1587 = vpack.c.b16 %v1047, %v1035
        %v1588 = vpack.c.b16 %v1048, %v1036
        %v1589 = vpack.c.b16 %v1061, %v1049
        %v1590 = vpack.c.b16 %v1062, %v1050
        %v1591 = vpack.c.b16 %v1063, %v1051
        %v1592 = vpack.c.b16 %v1064, %v1052
        %v1593 = vpack.c.b16 %v1065, %v1053
        %v1594 = vpack.c.b16 %v1066, %v1054
        %v1595 = vpack.c.b16 %v1067, %v1055
        %v1596 = vpack.c.b16 %v1068, %v1056
        %v1597 = vpack.c.b16 %v1069, %v1057
        %v1598 = vpack.c.b16 %v1070, %v1058
        %v1599 = vpack.c.b16 %v1071, %v1059
        %v1600 = vpack.c.b16 %v1072, %v1060
        %v1601 = vpack.c.b16 %v1085, %v1073
        %v1602 = vpack.c.b16 %v1086, %v1074
        %v1603 = vpack.c.b16 %v1087, %v1075
        %v1604 = vpack.c.b16 %v1088, %v1076
        %v1605 = vpack.c.b16 %v1089, %v1077
        %v1606 = vpack.c.b16 %v1090, %v1078
        %v1607 = vpack.c.b16 %v1091, %v1079
        %v1608 = vpack.c.b16 %v1092, %v1080
        %v1609 = vpack.c.b16 %v1093, %v1081
        %v1610 = vpack.c.b16 %v1094, %v1082
        %v1611 = vpack.c.b16 %v1095, %v1083
        %v1612 = vpack.c.b16 %v1096, %v1084
        %v1613 = vpack.c.b16 %v1109, %v1097
        %v1614 = vpack.c.b16 %v1110, %v1098
        %v1615 = vpack.c.b16 %v1111, %v1099
        %v1616 = vpack.c.b16 %v1112, %v1100
        %v1617 = vpack.c.b16 %v1113, %v1101
        %v1618 = vpack.c.b16 %v1114, %v1102
        %v1619 = vpack.c.b16 %v1115, %v1103
        %v1620 = vpack.c.b16 %v1116, %v1104
        %v1621 = vpack.c.b16 %v1117, %v1105
        %v1622 = vpack.c.b16 %v1118, %v1106
        %v1623 = vpack.c.b16 %v1119, %v1107
        %v1624 = vpack.c.b16 %v1120, %v1108
        %v1625 = vpack.c.b16 %v1133, %v1121
        %v1626 = vpack.c.b16 %v1134, %v1122
        %v1627 = vpack.c.b16 %v1135, %v1123
        %v1628 = vpack.c.b16 %v1136, %v1124
        %v1629 = vpack.c.b16 %v1137, %v1125
        %v1630 = vpack.c.b16 %v1138, %v1126
        %v1631 = vpack.c.b16 %v1139, %v1127
        %v1632 = vpack.c.b16 %v1140, %v1128
        %v1633 = vpack.c.b16 %v1141, %v1129
        %v1634 = vpack.c.b16 %v1142, %v1130
        %v1635 = vpack.c.b16 %v1143, %v1131
        %v1636 = vpack.c.b16 %v1144, %v1132
        %v1637 = vpack.c.b16 %v1157, %v1145
        %v1638 = vpack.c.b16 %v1158, %v1146
        %v1639 = vpack.c.b16 %v1159, %v1147
        %v1640 = vpack.c.b16 %v1160, %v1148
        %v1641 = vpack.c.b16 %v1161, %v1149
        %v1642 = vpack.c.b16 %v1162, %v1150
        %v1643 = vpack.c.b16 %v1163, %v1151
        %v1644 = vpack.c.b16 %v1164, %v1152
        %v1645 = vpack.c.b16 %v1165, %v1153
        %v1646 = vpack.c.b16 %v1166, %v1154
        %v1647 = vpack.c.b16 %v1167, %v1155
        %v1648 = vpack.c.b16 %v1168, %v1156
        %v1649 = vpack.c.b16 %v1181, %v1169
        %v1650 = vpack.c.b16 %v1182, %v1170
        %v1651 = vpack.c.b16 %v1183, %v1171
        %v1652 = vpack.c.b16 %v1184, %v1172
        %v1653 = vpack.c.b16 %v1185, %v1173
        %v1654 = vpack.c.b16 %v1186, %v1174
        %v1655 = vpack.c.b16 %v1187, %v1175
        %v1656 = vpack.c.b16 %v1188, %v1176
        %v1657 = vpack.c.b16 %v1189, %v1177
        %v1658 = vpack.c.b16 %v1190, %v1178
        %v1659 = vpack.c.b16 %v1191, %v1179
        %v1660 = vpack.c.b16 %v1192, %v1180
        %v1661 = vpack.c.b16 %v1205, %v1193
        %v1662 = vpack.c.b16 %v1206, %v1194
        %v1663 = vpack.c.b16 %v1207, %v1195
        %v1664 = vpack.c.b16 %v1208, %v1196
        %v1665 = vpack.c.b16 %v1209, %v1197
        %v1666 = vpack.c.b16 %v1210, %v1198
        %v1667 = vpack.c.b16 %v1211, %v1199
        %v1668 = vpack.c.b16 %v1212, %v1200
        %v1669 = vpack.c.b16 %v1213, %v1201
        %v1670 = vpack.c.b16 %v1214, %v1202
        %v1671 = vpack.c.b16 %v1215, %v1203
        %v1672 = vpack.c.b16 %v1216, %v1204
        %v1673 = vpack.c.b16 %v1229, %v1217
        %v1674 = vpack.c.b16 %v1230, %v1218
        %v1675 = vpack.c.b16 %v1231, %v1219
        %v1676 = vpack.c.b16 %v1232, %v1220
        %v1677 = vpack.c.b16 %v1233, %v1221
        %v1678 = vpack.c.b16 %v1234, %v1222
        %v1679 = vpack.c.b16 %v1235, %v1223
        %v1680 = vpack.c.b16 %v1236, %v1224
        %v1681 = vpack.c.b16 %v1237, %v1225
        %v1682 = vpack.c.b16 %v1238, %v1226
        %v1683 = vpack.c.b16 %v1239, %v1227
        %v1684 = vpack.c.b16 %v1240, %v1228
        %v1685 = vpack.c.b16 %v1253, %v1241
        %v1686 = vpack.c.b16 %v1254, %v1242
        %v1687 = vpack.c.b16 %v1255, %v1243
        %v1688 = vpack.c.b16 %v1256, %v1244
        %v1689 = vpack.c.b16 %v1257, %v1245
        %v1690 = vpack.c.b16 %v1258, %v1246
        %v1691 = vpack.c.b16 %v1259, %v1247
        %v1692 = vpack.c.b16 %v1260, %v1248
        %v1693 = vpack.c.b16 %v1261, %v1249
        %v1694 = vpack.c.b16 %v1262, %v1250
        %v1695 = vpack.c.b16 %v1263, %v1251
        %v1696 = vpack.c.b16 %v1264, %v1252
        %v1697 = vpack.c.b16 %v1277, %v1265
        %v1698 = vpack.c.b16 %v1278, %v1266
        %v1699 = vpack.c.b16 %v1279, %v1267
        %v1700 = vpack.c.b16 %v1280, %v1268
        %v1701 = vpack.c.b16 %v1281, %v1269
        %v1702 = vpack.c.b16 %v1282, %v1270
        %v1703 = vpack.c.b16 %v1283, %v1271
        %v1704 = vpack.c.b16 %v1284, %v1272
        %v1705 = vpack.c.b16 %v1285, %v1273
        %v1706 = vpack.c.b16 %v1286, %v1274
        %v1707 = vpack.c.b16 %v1287, %v1275
        %v1708 = vpack.c.b16 %v1288, %v1276
        %v1709 = vpack.c.b16 %v1301, %v1289
        %v1710 = vpack.c.b16 %v1302, %v1290
        %v1711 = vpack.c.b16 %v1303, %v1291
        %v1712 = vpack.c.b16 %v1304, %v1292
        %v1713 = vpack.c.b16 %v1305, %v1293
        %v1714 = vpack.c.b16 %v1306, %v1294
        %v1715 = vpack.c.b16 %v1307, %v1295
        %v1716 = vpack.c.b16 %v1308, %v1296
        %v1717 = vpack.c.b16 %v1309, %v1297
        %v1718 = vpack.c.b16 %v1310, %v1298
        %v1719 = vpack.c.b16 %v1311, %v1299
        %v1720 = vpack.c.b16 %v1312, %v1300
        %v1721 = vpack.c.b16 %v1325, %v1313
        %v1722 = vpack.c.b16 %v1326, %v1314
        %v1723 = vpack.c.b16 %v1327, %v1315
        %v1724 = vpack.c.b16 %v1328, %v1316
        %v1725 = vpack.c.b16 %v1329, %v1317
        %v1726 = vpack.c.b16 %v1330, %v1318
        %v1727 = vpack.c.b16 %v1331, %v1319
        %v1728 = vpack.c.b16 %v1332, %v1320
        %v1729 = vpack.c.b16 %v1333, %v1321
        %v1730 = vpack.c.b16 %v1334, %v1322
        %v1731 = vpack.c.b16 %v1335, %v1323
        %v1732 = vpack.c.b16 %v1336, %v1324
        %v1733 = vpack.c.b16 %v1349, %v1337
        %v1734 = vpack.c.b16 %v1350, %v1338
        %v1735 = vpack.c.b16 %v1351, %v1339
        %v1736 = vpack.c.b16 %v1352, %v1340
        %v1737 = vpack.c.b16 %v1353, %v1341
        %v1738 = vpack.c.b16 %v1354, %v1342
        %v1739 = vpack.c.b16 %v1355, %v1343
        %v1740 = vpack.c.b16 %v1356, %v1344
        %v1741 = vpack.c.b16 %v1357, %v1345
        %v1742 = vpack.c.b16 %v1358, %v1346
        %v1743 = vpack.c.b16 %v1359, %v1347
        %v1744 = vpack.c.b16 %v1360, %v1348
        %v1745 = vpack.c.b16 %v1373, %v1361
        %v1746 = vpack.c.b16 %v1374, %v1362
        %v1747 = vpack.c.b16 %v1375, %v1363
        %v1748 = vpack.c.b16 %v1376, %v1364
        %v1749 = vpack.c.b16 %v1377, %v1365
        %v1750 = vpack.c.b16 %v1378, %v1366
        %v1751 = vpack.c.b16 %v1379, %v1367
        %v1752 = vpack.c.b16 %v1380, %v1368
        %v1753 = vpack.c.b16 %v1381, %v1369
        %v1754 = vpack.c.b16 %v1382, %v1370
        %v1755 = vpack.c.b16 %v1383, %v1371
        %v1756 = vpack.c.b16 %v1384, %v1372
        %v1757 = vpack.c.b16 %v1397, %v1385
        %v1758 = vpack.c.b16 %v1398, %v1386
        %v1759 = vpack.c.b16 %v1399, %v1387
        %v1760 = vpack.c.b16 %v1400, %v1388
        %v1761 = vpack.c.b16 %v1401, %v1389
        %v1762 = vpack.c.b16 %v1402, %v1390
        %v1763 = vpack.c.b16 %v1403, %v1391
        %v1764 = vpack.c.b16 %v1404, %v1392
        %v1765 = vpack.c.b16 %v1405, %v1393
        %v1766 = vpack.c.b16 %v1406, %v1394
        %v1767 = vpack.c.b16 %v1407, %v1395
        %v1768 = vpack.c.b16 %v1408, %v1396
        %v1769 = vpack.c.b16 %v1421, %v1409
        %v1770 = vpack.c.b16 %v1422, %v1410
        %v1771 = vpack.c.b16 %v1423, %v1411
        %v1772 = vpack.c.b16 %v1424, %v1412
        %v1773 = vpack.c.b16 %v1425, %v1413
        %v1774 = vpack.c.b16 %v1426, %v1414
        %v1775 = vpack.c.b16 %v1427, %v1415
        %v1776 = vpack.c.b16 %v1428, %v1416
        %v1777 = vpack.c.b16 %v1429, %v1417
        %v1778 = vpack.c.b16 %v1430, %v1418
        %v1779 = vpack.c.b16 %v1431, %v1419
        %v1780 = vpack.c.b16 %v1432, %v1420
        %v1781 = vpack.c.b16 %v1445, %v1433
        %v1782 = vpack.c.b16 %v1446, %v1434
        %v1783 = vpack.c.b16 %v1447, %v1435
        %v1784 = vpack.c.b16 %v1448, %v1436
        %v1785 = vpack.c.b16 %v1449, %v1437
        %v1786 = vpack.c.b16 %v1450, %v1438
        %v1787 = vpack.c.b16 %v1451, %v1439
        %v1788 = vpack.c.b16 %v1452, %v1440
        %v1789 = vpack.c.b16 %v1453, %v1441
        %v1790 = vpack.c.b16 %v1454, %v1442
        %v1791 = vpack.c.b16 %v1455, %v1443
        %v1792 = vpack.c.b16 %v1456, %v1444
        %v1793 = vpack.c.b16 %v1469, %v1457
        %v1794 = vpack.c.b16 %v1470, %v1458
        %v1795 = vpack.c.b16 %v1471, %v1459
        %v1796 = vpack.c.b16 %v1472, %v1460
        %v1797 = vpack.c.b16 %v1473, %v1461
        %v1798 = vpack.c.b16 %v1474, %v1462
        %v1799 = vpack.c.b16 %v1475, %v1463
        %v1800 = vpack.c.b16 %v1476, %v1464
        %v1801 = vpack.c.b16 %v1477, %v1465
        %v1802 = vpack.c.b16 %v1478, %v1466
        %v1803 = vpack.c.b16 %v1479, %v1467
        %v1804 = vpack.c.b16 %v1480, %v1468
        %v1805 = vpack.c.b16 %v1493, %v1481
        %v1806 = vpack.c.b16 %v1494, %v1482
        %v1807 = vpack.c.b16 %v1495, %v1483
        %v1808 = vpack.c.b16 %v1496, %v1484
        %v1809 = vpack.c.b16 %v1497, %v1485
        %v1810 = vpack.c.b16 %v1498, %v1486
        %v1811 = vpack.c.b16 %v1499, %v1487
        %v1812 = vpack.c.b16 %v1500, %v1488
        %v1813 = vpack.c.b16 %v1501, %v1489
        %v1814 = vpack.c.b16 %v1502, %v1490
        %v1815 = vpack.c.b16 %v1503, %v1491
        %v1816 = vpack.c.b16 %v1504, %v1492
        %v1817 = vpack.c.b16 %v1517, %v1505
        %v1818 = vpack.c.b16 %v1518, %v1506
        %v1819 = vpack.c.b16 %v1519, %v1507
        %v1820 = vpack.c.b16 %v1520, %v1508
        %v1821 = vpack.c.b16 %v1521, %v1509
        %v1822 = vpack.c.b16 %v1522, %v1510
        %v1823 = vpack.c.b16 %v1523, %v1511
        %v1824 = vpack.c.b16 %v1524, %v1512
        %v1825 = vpack.c.b16 %v1525, %v1513
        %v1826 = vpack.c.b16 %v1526, %v1514
        %v1827 = vpack.c.b16 %v1527, %v1515
        %v1828 = vpack.c.b16 %v1528, %v1516
        %v1829 = vpack.c.b16 %v1541, %v1529
        %v1830 = vpack.c.b16 %v1542, %v1530
        %v1831 = vpack.c.b16 %v1543, %v1531
        %v1832 = vpack.c.b16 %v1544, %v1532
        %v1833 = vpack.c.b16 %v1545, %v1533
        %v1834 = vpack.c.b16 %v1546, %v1534
        %v1835 = vpack.c.b16 %v1547, %v1535
        %v1836 = vpack.c.b16 %v1548, %v1536
        %v1837 = vpack.c.b16 %v1549, %v1537
        %v1838 = vpack.c.b16 %v1550, %v1538
        %v1839 = vpack.c.b16 %v1551, %v1539
        %v1840 = vpack.c.b16 %v1552, %v1540
        %2129 = vmatprep.subr.bf16.mxu0 %v1554
        %2130 = vmatpush1.bf16.msra.mxu0 %v1553
        %2131 = vmatprep.subr.bf16.mxu0 %v1566
        %2132 = vmatpush1.bf16.msra.mxu0 %v1565
        %2133 = vmatprep.subr.bf16.mxu0 %v1578
        %2134 = vmatpush1.bf16.msra.mxu0 %v1577
        %2135 = vmatprep.subr.bf16.mxu0 %v1590
        %2136 = vmatpush1.bf16.msra.mxu0 %v1589
        %2137 = vmatprep.subr.bf16.mxu0 %v1602
        %2138 = vmatpush1.bf16.msra.mxu0 %v1601
        %2139 = vmatprep.subr.bf16.mxu0 %v1614
        %2140 = vmatpush1.bf16.msra.mxu0 %v1613
        %2141 = vmatprep.subr.bf16.mxu0 %v1626
        %2142 = vmatpush1.bf16.msra.mxu0 %v1625
        %2143 = vmatprep.subr.bf16.mxu0 %v1638
        %2144 = vmatpush1.bf16.msra.mxu0 %v1637
        %2145 = vmatprep.subr.bf16.mxu0 %v1650
        %2146 = vmatpush1.bf16.msra.mxu0 %v1649
        %2147 = vmatprep.subr.bf16.mxu0 %v1662
        %2148 = vmatpush1.bf16.msra.mxu0 %v1661
        %2149 = vmatprep.subr.bf16.mxu0 %v1674
        %2150 = vmatpush1.bf16.msra.mxu0 %v1673
        %2151 = vmatprep.subr.bf16.mxu0 %v1686
        %2152 = vmatpush1.bf16.msra.mxu0 %v1685
        %2153 = vmatprep.subr.bf16.mxu0 %v1698
        %2154 = vmatpush1.bf16.msra.mxu0 %v1697
        %2155 = vmatprep.subr.bf16.mxu0 %v1710
        %2156 = vmatpush1.bf16.msra.mxu0 %v1709
        %2157 = vmatprep.subr.bf16.mxu0 %v1722
        %2158 = vmatpush1.bf16.msra.mxu0 %v1721
        %2159 = vmatprep.subr.bf16.mxu0 %v1734
        %2160 = vmatpush1.bf16.msra.mxu0 %v1733
        %2161 = vmatprep.mubr.bf16.mxu0 %v326
        %2162 = vmatmul.mubr.bf16.gmra.mrb[0].mxu0 %v325
        %v2163 = vpop.f32.mrb[0].mxu0
        %v2164 = vadd.f32 %v632, %v2163
        %v2165 = vpop.f32.mrb[0].mxu0
        %v2166 = vadd.f32 %v636, %v2165
        %v2167 = vpop.f32.mrb[0].mxu0
        %v2168 = vadd.f32 %v632, %v2167
        %v2169 = vpop.f32.mrb[0].mxu0
        %v2170 = vadd.f32 %v636, %v2169
        %2171 = vmatprep.mubr.bf16.mxu0 %v329
        %2172 = vmatmul.mubr.bf16.gmra.mrb[0].mxu0 %v328
        %v2173 = vpop.f32.mrb[0].mxu0
        %v2174 = vadd.f32 %v632, %v2173
        %v2175 = vpop.f32.mrb[0].mxu0
        %v2176 = vadd.f32 %v636, %v2175
        %v2177 = vpop.f32.mrb[0].mxu0
        %v2178 = vadd.f32 %v632, %v2177
        %v2179 = vpop.f32.mrb[0].mxu0
        %v2180 = vadd.f32 %v636, %v2179
        %2181 = vmatprep.mubr.bf16.mxu0 %v332
        %2182 = vmatmul.mubr.bf16.gmra.mrb[0].mxu0 %v331
        %v2183 = vpop.f32.mrb[0].mxu0
        %v2184 = vadd.f32 %v632, %v2183
        %v2185 = vpop.f32.mrb[0].mxu0
        %v2186 = vadd.f32 %v636, %v2185
        %v2187 = vpop.f32.mrb[0].mxu0
        %v2188 = vadd.f32 %v632, %v2187
        %v2189 = vpop.f32.mrb[0].mxu0
        %v2190 = vadd.f32 %v636, %v2189
        %2191 = vmatprep.mubr.bf16.mxu0 %v335
        %2192 = vmatmul.mubr.bf16.gmra.mrb[0].mxu0 %v334
        %v2193 = vpop.f32.mrb[0].mxu0
        %v2194 = vadd.f32 %v632, %v2193
        %v2195 = vpop.f32.mrb[0].mxu0
        %v2196 = vadd.f32 %v636, %v2195
        %v2197 = vpop.f32.mrb[0].mxu0
        %v2198 = vadd.f32 %v632, %v2197
        %v2199 = vpop.f32.mrb[0].mxu0
        %v2200 = vadd.f32 %v636, %v2199
        %2201 = vdwg.mxu0
        %2202 = vmatprep.subr.bf16.mxu0 %v1746
        %2203 = vmatpush1.bf16.msra.mxu0 %v1745
        %2204 = vmatprep.subr.bf16.mxu0 %v1758
        %2205 = vmatpush1.bf16.msra.mxu0 %v1757
        %2206 = vmatprep.subr.bf16.mxu0 %v1770
        %2207 = vmatpush1.bf16.msra.mxu0 %v1769
        %2208 = vmatprep.subr.bf16.mxu0 %v1782
        %2209 = vmatpush1.bf16.msra.mxu0 %v1781
        %2210 = vmatprep.subr.bf16.mxu0 %v1794
        %2211 = vmatpush1.bf16.msra.mxu0 %v1793
        %2212 = vmatprep.subr.bf16.mxu0 %v1806
        %2213 = vmatpush1.bf16.msra.mxu0 %v1805
        %2214 = vmatprep.subr.bf16.mxu0 %v1818
        %2215 = vmatpush1.bf16.msra.mxu0 %v1817
        %2216 = vmatprep.subr.bf16.mxu0 %v1830
        %2217 = vmatpush1.bf16.msra.mxu0 %v1829
        %2218 = vmatprep.subr.bf16.mxu0 0
        %2219 = vmatpush1.bf16.msra.mxu0 0
        %2220 = vmatprep.subr.bf16.mxu0 0
        %2221 = vmatpush1.bf16.msra.mxu0 0
        %2222 = vmatprep.subr.bf16.mxu0 0
        %2223 = vmatpush1.bf16.msra.mxu0 0
        %2224 = vmatprep.subr.bf16.mxu0 0
        %2225 = vmatpush1.bf16.msra.mxu0 0
        %2226 = vmatprep.subr.bf16.mxu0 0
        %2227 = vmatpush1.bf16.msra.mxu0 0
        %2228 = vmatprep.subr.bf16.mxu0 0
        %2229 = vmatpush1.bf16.msra.mxu0 0
        %2230 = vmatprep.subr.bf16.mxu0 0
        %2231 = vmatpush1.bf16.msra.mxu0 0
        %2232 = vmatprep.subr.bf16.mxu0 0
        %2233 = vmatpush1.bf16.msra.mxu0 0
        %2234 = vmatprep.mubr.bf16.mxu0 0
        %2235 = vmatmul.mubr.bf16.gmra.mrb[0].mxu0 %v327
        %v2236 = vpop.f32.mrb[0].mxu0
        %v2237 = vadd.f32 %v2164, %v2236
        %v2238 = vpop.f32.mrb[0].mxu0
        %v2239 = vadd.f32 %v2166, %v2238
        %v2240 = vpop.f32.mrb[0].mxu0
        %v2241 = vadd.f32 %v2168, %v2240
        %v2242 = vpop.f32.mrb[0].mxu0
        %v2243 = vadd.f32 %v2170, %v2242
        %2244 = vmatprep.mubr.bf16.mxu0 0
        %2245 = vmatmul.mubr.bf16.gmra.mrb[0].mxu0 %v330
        %v2246 = vpop.f32.mrb[0].mxu0
        %v2247 = vadd.f32 %v2174, %v2246
        %v2248 = vpop.f32.mrb[0].mxu0
        %v2249 = vadd.f32 %v2176, %v2248
        %v2250 = vpop.f32.mrb[0].mxu0
        %v2251 = vadd.f32 %v2178, %v2250
        %v2252 = vpop.f32.mrb[0].mxu0
        %v2253 = vadd.f32 %v2180, %v2252
        %2254 = vmatprep.mubr.bf16.mxu0 0
        %2255 = vmatmul.mubr.bf16.gmra.mrb[0].mxu0 %v333
        %v2256 = vpop.f32.mrb[0].mxu0
        %v2257 = vadd.f32 %v2184, %v2256
        %v2258 = vpop.f32.mrb[0].mxu0
        %v2259 = vadd.f32 %v2186, %v2258
        %v2260 = vpop.f32.mrb[0].mxu0
        %v2261 = vadd.f32 %v2188, %v2260
        %v2262 = vpop.f32.mrb[0].mxu0
        %v2263 = vadd.f32 %v2190, %v2262
        %2264 = vmatprep.mubr.bf16.mxu0 0
        %2265 = vmatmul.mubr.bf16.gmra.mrb[0].mxu0 %v336
        %v2266 = vpop.f32.mrb[0].mxu0
        %v2267 = vadd.f32 %v2194, %v2266
        %v2268 = vpop.f32.mrb[0].mxu0
        %v2269 = vadd.f32 %v2196, %v2268
        %v2270 = vpop.f32.mrb[0].mxu0
        %v2271 = vadd.f32 %v2198, %v2270
        %v2272 = vpop.f32.mrb[0].mxu0
        %v2273 = vadd.f32 %v2200, %v2272
        %2274 = vdwg.mxu0
        %2275 = vmatprep.subr.bf16.mxu0 %v1556
        %2276 = vmatpush1.bf16.msra.mxu0 %v1555
        %2277 = vmatprep.subr.bf16.mxu0 %v1568
        %2278 = vmatpush1.bf16.msra.mxu0 %v1567
        %2279 = vmatprep.subr.bf16.mxu0 %v1580
        %2280 = vmatpush1.bf16.msra.mxu0 %v1579
        %2281 = vmatprep.subr.bf16.mxu0 %v1592
        %2282 = vmatpush1.bf16.msra.mxu0 %v1591
        %2283 = vmatprep.subr.bf16.mxu0 %v1604
        %2284 = vmatpush1.bf16.msra.mxu0 %v1603
        %2285 = vmatprep.subr.bf16.mxu0 %v1616
        %2286 = vmatpush1.bf16.msra.mxu0 %v1615
        %2287 = vmatprep.subr.bf16.mxu0 %v1628
        %2288 = vmatpush1.bf16.msra.mxu0 %v1627
        %2289 = vmatprep.subr.bf16.mxu0 %v1640
        %2290 = vmatpush1.bf16.msra.mxu0 %v1639
        %2291 = vmatprep.subr.bf16.mxu0 %v1652
        %2292 = vmatpush1.bf16.msra.mxu0 %v1651
        %2293 = vmatprep.subr.bf16.mxu0 %v1664
        %2294 = vmatpush1.bf16.msra.mxu0 %v1663
        %2295 = vmatprep.subr.bf16.mxu0 %v1676
        %2296 = vmatpush1.bf16.msra.mxu0 %v1675
        %2297 = vmatprep.subr.bf16.mxu0 %v1688
        %2298 = vmatpush1.bf16.msra.mxu0 %v1687
        %2299 = vmatprep.subr.bf16.mxu0 %v1700
        %2300 = vmatpush1.bf16.msra.mxu0 %v1699
        %2301 = vmatprep.subr.bf16.mxu0 %v1712
        %2302 = vmatpush1.bf16.msra.mxu0 %v1711
        %2303 = vmatprep.subr.bf16.mxu0 %v1724
        %2304 = vmatpush1.bf16.msra.mxu0 %v1723
        %2305 = vmatprep.subr.bf16.mxu0 %v1736
        %2306 = vmatpush1.bf16.msra.mxu0 %v1735
        %2307 = vmatprep.mubr.bf16.mxu0 %v326
        %2308 = vmatmul.mubr.bf16.gmra.mrb[0].mxu0 %v325
        %v2309 = vpop.f32.mrb[0].mxu0
        %v2310 = vadd.f32 %v640, %v2309
        %v2311 = vpop.f32.mrb[0].mxu0
        %v2312 = vadd.f32 %v644, %v2311
        %v2313 = vpop.f32.mrb[0].mxu0
        %v2314 = vadd.f32 %v640, %v2313
        %v2315 = vpop.f32.mrb[0].mxu0
        %v2316 = vadd.f32 %v644, %v2315
        %2317 = vmatprep.mubr.bf16.mxu0 %v329
        %2318 = vmatmul.mubr.bf16.gmra.mrb[0].mxu0 %v328
        %v2319 = vpop.f32.mrb[0].mxu0
        %v2320 = vadd.f32 %v640, %v2319
        %v2321 = vpop.f32.mrb[0].mxu0
        %v2322 = vadd.f32 %v644, %v2321
        %v2323 = vpop.f32.mrb[0].mxu0
        %v2324 = vadd.f32 %v640, %v2323
        %v2325 = vpop.f32.mrb[0].mxu0
        %v2326 = vadd.f32 %v644, %v2325
        %2327 = vmatprep.mubr.bf16.mxu0 %v332
        %2328 = vmatmul.mubr.bf16.gmra.mrb[0].mxu0 %v331
        %v2329 = vpop.f32.mrb[0].mxu0
        %v2330 = vadd.f32 %v640, %v2329
        %v2331 = vpop.f32.mrb[0].mxu0
        %v2332 = vadd.f32 %v644, %v2331
        %v2333 = vpop.f32.mrb[0].mxu0
        %v2334 = vadd.f32 %v640, %v2333
        %v2335 = vpop.f32.mrb[0].mxu0
        %v2336 = vadd.f32 %v644, %v2335
        %2337 = vmatprep.mubr.bf16.mxu0 %v335
        %2338 = vmatmul.mubr.bf16.gmra.mrb[0].mxu0 %v334
        %v2339 = vpop.f32.mrb[0].mxu0
        %v2340 = vadd.f32 %v640, %v2339
        %v2341 = vpop.f32.mrb[0].mxu0
        %v2342 = vadd.f32 %v644, %v2341
        %v2343 = vpop.f32.mrb[0].mxu0
        %v2344 = vadd.f32 %v640, %v2343
        %v2345 = vpop.f32.mrb[0].mxu0
        %v2346 = vadd.f32 %v644, %v2345
        %2347 = vdwg.mxu0
        %2348 = vmatprep.subr.bf16.mxu0 %v1748
        %2349 = vmatpush1.bf16.msra.mxu0 %v1747
        %2350 = vmatprep.subr.bf16.mxu0 %v1760
        %2351 = vmatpush1.bf16.msra.mxu0 %v1759
        %2352 = vmatprep.subr.bf16.mxu0 %v1772
        %2353 = vmatpush1.bf16.msra.mxu0 %v1771
        %2354 = vmatprep.subr.bf16.mxu0 %v1784
        %2355 = vmatpush1.bf16.msra.mxu0 %v1783
        %2356 = vmatprep.subr.bf16.mxu0 %v1796
        %2357 = vmatpush1.bf16.msra.mxu0 %v1795
        %2358 = vmatprep.subr.bf16.mxu0 %v1808
        %2359 = vmatpush1.bf16.msra.mxu0 %v1807
        %2360 = vmatprep.subr.bf16.mxu0 %v1820
        %2361 = vmatpush1.bf16.msra.mxu0 %v1819
        %2362 = vmatprep.subr.bf16.mxu0 %v1832
        %2363 = vmatpush1.bf16.msra.mxu0 %v1831
        %2364 = vmatprep.subr.bf16.mxu0 0
        %2365 = vmatpush1.bf16.msra.mxu0 0
        %2366 = vmatprep.subr.bf16.mxu0 0
        %2367 = vmatpush1.bf16.msra.mxu0 0
        %2368 = vmatprep.subr.bf16.mxu0 0
        %2369 = vmatpush1.bf16.msra.mxu0 0
        %2370 = vmatprep.subr.bf16.mxu0 0
        %2371 = vmatpush1.bf16.msra.mxu0 0
        %2372 = vmatprep.subr.bf16.mxu0 0
        %2373 = vmatpush1.bf16.msra.mxu0 0
        %2374 = vmatprep.subr.bf16.mxu0 0
        %2375 = vmatpush1.bf16.msra.mxu0 0
        %2376 = vmatprep.subr.bf16.mxu0 0
        %2377 = vmatpush1.bf16.msra.mxu0 0
        %2378 = vmatprep.subr.bf16.mxu0 0
        %2379 = vmatpush1.bf16.msra.mxu0 0
        %2380 = vmatprep.mubr.bf16.mxu0 0
        %2381 = vmatmul.mubr.bf16.gmra.mrb[0].mxu0 %v327
        %v2382 = vpop.f32.mrb[0].mxu0
        %v2383 = vadd.f32 %v2310, %v2382
        %v2384 = vpop.f32.mrb[0].mxu0
        %v2385 = vadd.f32 %v2312, %v2384
        %v2386 = vpop.f32.mrb[0].mxu0
        %v2387 = vadd.f32 %v2314, %v2386
        %v2388 = vpop.f32.mrb[0].mxu0
        %v2389 = vadd.f32 %v2316, %v2388
        %2390 = vmatprep.mubr.bf16.mxu0 0
        %2391 = vmatmul.mubr.bf16.gmra.mrb[0].mxu0 %v330
        %v2392 = vpop.f32.mrb[0].mxu0
        %v2393 = vadd.f32 %v2320, %v2392
        %v2394 = vpop.f32.mrb[0].mxu0
        %v2395 = vadd.f32 %v2322, %v2394
        %v2396 = vpop.f32.mrb[0].mxu0
        %v2397 = vadd.f32 %v2324, %v2396
        %v2398 = vpop.f32.mrb[0].mxu0
        %v2399 = vadd.f32 %v2326, %v2398
        %2400 = vmatprep.mubr.bf16.mxu0 0
        %2401 = vmatmul.mubr.bf16.gmra.mrb[0].mxu0 %v333
        %v2402 = vpop.f32.mrb[0].mxu0
        %v2403 = vadd.f32 %v2330, %v2402
        %v2404 = vpop.f32.mrb[0].mxu0
        %v2405 = vadd.f32 %v2332, %v2404
        %v2406 = vpop.f32.mrb[0].mxu0
        %v2407 = vadd.f32 %v2334, %v2406
        %v2408 = vpop.f32.mrb[0].mxu0
        %v2409 = vadd.f32 %v2336, %v2408
        %2410 = vmatprep.mubr.bf16.mxu0 0
        %2411 = vmatmul.mubr.bf16.gmra.mrb[0].mxu0 %v336
        %v2412 = vpop.f32.mrb[0].mxu0
        %v2413 = vadd.f32 %v2340, %v2412
        %v2414 = vpop.f32.mrb[0].mxu0
        %v2415 = vadd.f32 %v2342, %v2414
        %v2416 = vpop.f32.mrb[0].mxu0
        %v2417 = vadd.f32 %v2344, %v2416
        %v2418 = vpop.f32.mrb[0].mxu0
        %v2419 = vadd.f32 %v2346, %v2418
        %2420 = vdwg.mxu0
        %2421 = vmatprep.subr.bf16.mxu0 %v1558
        %2422 = vmatpush1.bf16.msra.mxu0 %v1557
        %2423 = vmatprep.subr.bf16.mxu0 %v1570
        %2424 = vmatpush1.bf16.msra.mxu0 %v1569
        %2425 = vmatprep.subr.bf16.mxu0 %v1582
        %2426 = vmatpush1.bf16.msra.mxu0 %v1581
        %2427 = vmatprep.subr.bf16.mxu0 %v1594
        %2428 = vmatpush1.bf16.msra.mxu0 %v1593
        %2429 = vmatprep.subr.bf16.mxu0 %v1606
        %2430 = vmatpush1.bf16.msra.mxu0 %v1605
        %2431 = vmatprep.subr.bf16.mxu0 %v1618
        %2432 = vmatpush1.bf16.msra.mxu0 %v1617
        %2433 = vmatprep.subr.bf16.mxu0 %v1630
        %2434 = vmatpush1.bf16.msra.mxu0 %v1629
        %2435 = vmatprep.subr.bf16.mxu0 %v1642
        %2436 = vmatpush1.bf16.msra.mxu0 %v1641
        %2437 = vmatprep.subr.bf16.mxu0 %v1654
        %2438 = vmatpush1.bf16.msra.mxu0 %v1653
        %2439 = vmatprep.subr.bf16.mxu0 %v1666
        %2440 = vmatpush1.bf16.msra.mxu0 %v1665
        %2441 = vmatprep.subr.bf16.mxu0 %v1678
        %2442 = vmatpush1.bf16.msra.mxu0 %v1677
        %2443 = vmatprep.subr.bf16.mxu0 %v1690
        %2444 = vmatpush1.bf16.msra.mxu0 %v1689
        %2445 = vmatprep.subr.bf16.mxu0 %v1702
        %2446 = vmatpush1.bf16.msra.mxu0 %v1701
        %2447 = vmatprep.subr.bf16.mxu0 %v1714
        %2448 = vmatpush1.bf16.msra.mxu0 %v1713
        %2449 = vmatprep.subr.bf16.mxu0 %v1726
        %2450 = vmatpush1.bf16.msra.mxu0 %v1725
        %2451 = vmatprep.subr.bf16.mxu0 %v1738
        %2452 = vmatpush1.bf16.msra.mxu0 %v1737
        %2453 = vmatprep.mubr.bf16.mxu0 %v326
        %2454 = vmatmul.mubr.bf16.gmra.mrb[0].mxu0 %v325
        %v2455 = vpop.f32.mrb[0].mxu0
        %v2456 = vadd.f32 %v648, %v2455
        %v2457 = vpop.f32.mrb[0].mxu0
        %v2458 = vadd.f32 %v652, %v2457
        %v2459 = vpop.f32.mrb[0].mxu0
        %v2460 = vadd.f32 %v648, %v2459
        %v2461 = vpop.f32.mrb[0].mxu0
        %v2462 = vadd.f32 %v652, %v2461
        %2463 = vmatprep.mubr.bf16.mxu0 %v329
        %2464 = vmatmul.mubr.bf16.gmra.mrb[0].mxu0 %v328
        %v2465 = vpop.f32.mrb[0].mxu0
        %v2466 = vadd.f32 %v648, %v2465
        %v2467 = vpop.f32.mrb[0].mxu0
        %v2468 = vadd.f32 %v652, %v2467
        %v2469 = vpop.f32.mrb[0].mxu0
        %v2470 = vadd.f32 %v648, %v2469
        %v2471 = vpop.f32.mrb[0].mxu0
        %v2472 = vadd.f32 %v652, %v2471
        %2473 = vmatprep.mubr.bf16.mxu0 %v332
        %2474 = vmatmul.mubr.bf16.gmra.mrb[0].mxu0 %v331
        %v2475 = vpop.f32.mrb[0].mxu0
        %v2476 = vadd.f32 %v648, %v2475
        %v2477 = vpop.f32.mrb[0].mxu0
        %v2478 = vadd.f32 %v652, %v2477
        %v2479 = vpop.f32.mrb[0].mxu0
        %v2480 = vadd.f32 %v648, %v2479
        %v2481 = vpop.f32.mrb[0].mxu0
        %v2482 = vadd.f32 %v652, %v2481
        %2483 = vmatprep.mubr.bf16.mxu0 %v335
        %2484 = vmatmul.mubr.bf16.gmra.mrb[0].mxu0 %v334
        %v2485 = vpop.f32.mrb[0].mxu0
        %v2486 = vadd.f32 %v648, %v2485
        %v2487 = vpop.f32.mrb[0].mxu0
        %v2488 = vadd.f32 %v652, %v2487
        %v2489 = vpop.f32.mrb[0].mxu0
        %v2490 = vadd.f32 %v648, %v2489
        %v2491 = vpop.f32.mrb[0].mxu0
        %v2492 = vadd.f32 %v652, %v2491
        %2493 = vdwg.mxu0
        %2494 = vmatprep.subr.bf16.mxu0 %v1750
        %2495 = vmatpush1.bf16.msra.mxu0 %v1749
        %2496 = vmatprep.subr.bf16.mxu0 %v1762
        %2497 = vmatpush1.bf16.msra.mxu0 %v1761
        %2498 = vmatprep.subr.bf16.mxu0 %v1774
        %2499 = vmatpush1.bf16.msra.mxu0 %v1773
        %2500 = vmatprep.subr.bf16.mxu0 %v1786
        %2501 = vmatpush1.bf16.msra.mxu0 %v1785
        %2502 = vmatprep.subr.bf16.mxu0 %v1798
        %2503 = vmatpush1.bf16.msra.mxu0 %v1797
        %2504 = vmatprep.subr.bf16.mxu0 %v1810
        %2505 = vmatpush1.bf16.msra.mxu0 %v1809
        %2506 = vmatprep.subr.bf16.mxu0 %v1822
        %2507 = vmatpush1.bf16.msra.mxu0 %v1821
        %2508 = vmatprep.subr.bf16.mxu0 %v1834
        %2509 = vmatpush1.bf16.msra.mxu0 %v1833
        %2510 = vmatprep.subr.bf16.mxu0 0
        %2511 = vmatpush1.bf16.msra.mxu0 0
        %2512 = vmatprep.subr.bf16.mxu0 0
        %2513 = vmatpush1.bf16.msra.mxu0 0
        %2514 = vmatprep.subr.bf16.mxu0 0
        %2515 = vmatpush1.bf16.msra.mxu0 0
        %2516 = vmatprep.subr.bf16.mxu0 0
        %2517 = vmatpush1.bf16.msra.mxu0 0
        %2518 = vmatprep.subr.bf16.mxu0 0
        %2519 = vmatpush1.bf16.msra.mxu0 0
        %2520 = vmatprep.subr.bf16.mxu0 0
        %2521 = vmatpush1.bf16.msra.mxu0 0
        %2522 = vmatprep.subr.bf16.mxu0 0
        %2523 = vmatpush1.bf16.msra.mxu0 0
        %2524 = vmatprep.subr.bf16.mxu0 0
        %2525 = vmatpush1.bf16.msra.mxu0 0
        %2526 = vmatprep.mubr.bf16.mxu0 0
        %2527 = vmatmul.mubr.bf16.gmra.mrb[0].mxu0 %v327
        %v2528 = vpop.f32.mrb[0].mxu0
        %v2529 = vadd.f32 %v2456, %v2528
        %v2530 = vpop.f32.mrb[0].mxu0
        %v2531 = vadd.f32 %v2458, %v2530
        %v2532 = vpop.f32.mrb[0].mxu0
        %v2533 = vadd.f32 %v2460, %v2532
        %v2534 = vpop.f32.mrb[0].mxu0
        %v2535 = vadd.f32 %v2462, %v2534
        %2536 = vmatprep.mubr.bf16.mxu0 0
        %2537 = vmatmul.mubr.bf16.gmra.mrb[0].mxu0 %v330
        %v2538 = vpop.f32.mrb[0].mxu0
        %v2539 = vadd.f32 %v2466, %v2538
        %v2540 = vpop.f32.mrb[0].mxu0
        %v2541 = vadd.f32 %v2468, %v2540
        %v2542 = vpop.f32.mrb[0].mxu0
        %v2543 = vadd.f32 %v2470, %v2542
        %v2544 = vpop.f32.mrb[0].mxu0
        %v2545 = vadd.f32 %v2472, %v2544
        %2546 = vmatprep.mubr.bf16.mxu0 0
        %2547 = vmatmul.mubr.bf16.gmra.mrb[0].mxu0 %v333
        %v2548 = vpop.f32.mrb[0].mxu0
        %v2549 = vadd.f32 %v2476, %v2548
        %v2550 = vpop.f32.mrb[0].mxu0
        %v2551 = vadd.f32 %v2478, %v2550
        %v2552 = vpop.f32.mrb[0].mxu0
        %v2553 = vadd.f32 %v2480, %v2552
        %v2554 = vpop.f32.mrb[0].mxu0
        %v2555 = vadd.f32 %v2482, %v2554
        %2556 = vmatprep.mubr.bf16.mxu0 0
        %2557 = vmatmul.mubr.bf16.gmra.mrb[0].mxu0 %v336
        %v2558 = vpop.f32.mrb[0].mxu0
        %v2559 = vadd.f32 %v2486, %v2558
        %v2560 = vpop.f32.mrb[0].mxu0
        %v2561 = vadd.f32 %v2488, %v2560
        %v2562 = vpop.f32.mrb[0].mxu0
        %v2563 = vadd.f32 %v2490, %v2562
        %v2564 = vpop.f32.mrb[0].mxu0
        %v2565 = vadd.f32 %v2492, %v2564
        %2566 = vdwg.mxu0
        %2567 = vmatprep.subr.bf16.mxu0 %v1560
        %2568 = vmatpush1.bf16.msra.mxu0 %v1559
        %2569 = vmatprep.subr.bf16.mxu0 %v1572
        %2570 = vmatpush1.bf16.msra.mxu0 %v1571
        %2571 = vmatprep.subr.bf16.mxu0 %v1584
        %2572 = vmatpush1.bf16.msra.mxu0 %v1583
        %2573 = vmatprep.subr.bf16.mxu0 %v1596
        %2574 = vmatpush1.bf16.msra.mxu0 %v1595
        %2575 = vmatprep.subr.bf16.mxu0 %v1608
        %2576 = vmatpush1.bf16.msra.mxu0 %v1607
        %2577 = vmatprep.subr.bf16.mxu0 %v1620
        %2578 = vmatpush1.bf16.msra.mxu0 %v1619
        %2579 = vmatprep.subr.bf16.mxu0 %v1632
        %2580 = vmatpush1.bf16.msra.mxu0 %v1631
        %2581 = vmatprep.subr.bf16.mxu0 %v1644
        %2582 = vmatpush1.bf16.msra.mxu0 %v1643
        %2583 = vmatprep.subr.bf16.mxu0 %v1656
        %2584 = vmatpush1.bf16.msra.mxu0 %v1655
        %2585 = vmatprep.subr.bf16.mxu0 %v1668
        %2586 = vmatpush1.bf16.msra.mxu0 %v1667
        %2587 = vmatprep.subr.bf16.mxu0 %v1680
        %2588 = vmatpush1.bf16.msra.mxu0 %v1679
        %2589 = vmatprep.subr.bf16.mxu0 %v1692
        %2590 = vmatpush1.bf16.msra.mxu0 %v1691
        %2591 = vmatprep.subr.bf16.mxu0 %v1704
        %2592 = vmatpush1.bf16.msra.mxu0 %v1703
        %2593 = vmatprep.subr.bf16.mxu0 %v1716
        %2594 = vmatpush1.bf16.msra.mxu0 %v1715
        %2595 = vmatprep.subr.bf16.mxu0 %v1728
        %2596 = vmatpush1.bf16.msra.mxu0 %v1727
        %2597 = vmatprep.subr.bf16.mxu0 %v1740
        %2598 = vmatpush1.bf16.msra.mxu0 %v1739
        %2599 = vmatprep.mubr.bf16.mxu0 %v326
        %2600 = vmatmul.mubr.bf16.gmra.mrb[0].mxu0 %v325
        %v2601 = vpop.f32.mrb[0].mxu0
        %v2602 = vadd.f32 %v656, %v2601
        %v2603 = vpop.f32.mrb[0].mxu0
        %v2604 = vadd.f32 %v660, %v2603
        %v2605 = vpop.f32.mrb[0].mxu0
        %v2606 = vadd.f32 %v656, %v2605
        %v2607 = vpop.f32.mrb[0].mxu0
        %v2608 = vadd.f32 %v660, %v2607
        %2609 = vmatprep.mubr.bf16.mxu0 %v329
        %2610 = vmatmul.mubr.bf16.gmra.mrb[0].mxu0 %v328
        %v2611 = vpop.f32.mrb[0].mxu0
        %v2612 = vadd.f32 %v656, %v2611
        %v2613 = vpop.f32.mrb[0].mxu0
        %v2614 = vadd.f32 %v660, %v2613
        %v2615 = vpop.f32.mrb[0].mxu0
        %v2616 = vadd.f32 %v656, %v2615
        %v2617 = vpop.f32.mrb[0].mxu0
        %v2618 = vadd.f32 %v660, %v2617
        %2619 = vmatprep.mubr.bf16.mxu0 %v332
        %2620 = vmatmul.mubr.bf16.gmra.mrb[0].mxu0 %v331
        %v2621 = vpop.f32.mrb[0].mxu0
        %v2622 = vadd.f32 %v656, %v2621
        %v2623 = vpop.f32.mrb[0].mxu0
        %v2624 = vadd.f32 %v660, %v2623
        %v2625 = vpop.f32.mrb[0].mxu0
        %v2626 = vadd.f32 %v656, %v2625
        %v2627 = vpop.f32.mrb[0].mxu0
        %v2628 = vadd.f32 %v660, %v2627
        %2629 = vmatprep.mubr.bf16.mxu0 %v335
        %2630 = vmatmul.mubr.bf16.gmra.mrb[0].mxu0 %v334
        %v2631 = vpop.f32.mrb[0].mxu0
        %v2632 = vadd.f32 %v656, %v2631
        %v2633 = vpop.f32.mrb[0].mxu0
        %v2634 = vadd.f32 %v660, %v2633
        %v2635 = vpop.f32.mrb[0].mxu0
        %v2636 = vadd.f32 %v656, %v2635
        %v2637 = vpop.f32.mrb[0].mxu0
        %v2638 = vadd.f32 %v660, %v2637
        %2639 = vdwg.mxu0
        %2640 = vmatprep.subr.bf16.mxu0 %v1752
        %2641 = vmatpush1.bf16.msra.mxu0 %v1751
        %2642 = vmatprep.subr.bf16.mxu0 %v1764
        %2643 = vmatpush1.bf16.msra.mxu0 %v1763
        %2644 = vmatprep.subr.bf16.mxu0 %v1776
        %2645 = vmatpush1.bf16.msra.mxu0 %v1775
        %2646 = vmatprep.subr.bf16.mxu0 %v1788
        %2647 = vmatpush1.bf16.msra.mxu0 %v1787
        %2648 = vmatprep.subr.bf16.mxu0 %v1800
        %2649 = vmatpush1.bf16.msra.mxu0 %v1799
        %2650 = vmatprep.subr.bf16.mxu0 %v1812
        %2651 = vmatpush1.bf16.msra.mxu0 %v1811
        %2652 = vmatprep.subr.bf16.mxu0 %v1824
        %2653 = vmatpush1.bf16.msra.mxu0 %v1823
        %2654 = vmatprep.subr.bf16.mxu0 %v1836
        %2655 = vmatpush1.bf16.msra.mxu0 %v1835
        %2656 = vmatprep.subr.bf16.mxu0 0
        %2657 = vmatpush1.bf16.msra.mxu0 0
        %2658 = vmatprep.subr.bf16.mxu0 0
        %2659 = vmatpush1.bf16.msra.mxu0 0
        %2660 = vmatprep.subr.bf16.mxu0 0
        %2661 = vmatpush1.bf16.msra.mxu0 0
        %2662 = vmatprep.subr.bf16.mxu0 0
        %2663 = vmatpush1.bf16.msra.mxu0 0
        %2664 = vmatprep.subr.bf16.mxu0 0
        %2665 = vmatpush1.bf16.msra.mxu0 0
        %2666 = vmatprep.subr.bf16.mxu0 0
        %2667 = vmatpush1.bf16.msra.mxu0 0
        %2668 = vmatprep.subr.bf16.mxu0 0
        %2669 = vmatpush1.bf16.msra.mxu0 0
        %2670 = vmatprep.subr.bf16.mxu0 0
        %2671 = vmatpush1.bf16.msra.mxu0 0
        %2672 = vmatprep.mubr.bf16.mxu0 0
        %2673 = vmatmul.mubr.bf16.gmra.mrb[0].mxu0 %v327
        %v2674 = vpop.f32.mrb[0].mxu0
        %v2675 = vadd.f32 %v2602, %v2674
        %v2676 = vpop.f32.mrb[0].mxu0
        %v2677 = vadd.f32 %v2604, %v2676
        %v2678 = vpop.f32.mrb[0].mxu0
        %v2679 = vadd.f32 %v2606, %v2678
        %v2680 = vpop.f32.mrb[0].mxu0
        %v2681 = vadd.f32 %v2608, %v2680
        %2682 = vmatprep.mubr.bf16.mxu0 0
        %2683 = vmatmul.mubr.bf16.gmra.mrb[0].mxu0 %v330
        %v2684 = vpop.f32.mrb[0].mxu0
        %v2685 = vadd.f32 %v2612, %v2684
        %v2686 = vpop.f32.mrb[0].mxu0
        %v2687 = vadd.f32 %v2614, %v2686
        %v2688 = vpop.f32.mrb[0].mxu0
        %v2689 = vadd.f32 %v2616, %v2688
        %v2690 = vpop.f32.mrb[0].mxu0
        %v2691 = vadd.f32 %v2618, %v2690
        %2692 = vmatprep.mubr.bf16.mxu0 0
        %2693 = vmatmul.mubr.bf16.gmra.mrb[0].mxu0 %v333
        %v2694 = vpop.f32.mrb[0].mxu0
        %v2695 = vadd.f32 %v2622, %v2694
        %v2696 = vpop.f32.mrb[0].mxu0
        %v2697 = vadd.f32 %v2624, %v2696
        %v2698 = vpop.f32.mrb[0].mxu0
        %v2699 = vadd.f32 %v2626, %v2698
        %v2700 = vpop.f32.mrb[0].mxu0
        %v2701 = vadd.f32 %v2628, %v2700
        %2702 = vmatprep.mubr.bf16.mxu0 0
        %2703 = vmatmul.mubr.bf16.gmra.mrb[0].mxu0 %v336
        %v2704 = vpop.f32.mrb[0].mxu0
        %v2705 = vadd.f32 %v2632, %v2704
        %v2706 = vpop.f32.mrb[0].mxu0
        %v2707 = vadd.f32 %v2634, %v2706
        %v2708 = vpop.f32.mrb[0].mxu0
        %v2709 = vadd.f32 %v2636, %v2708
        %v2710 = vpop.f32.mrb[0].mxu0
        %v2711 = vadd.f32 %v2638, %v2710
        %2712 = vdwg.mxu0
        %2713 = vmatprep.subr.bf16.mxu0 %v1562
        %2714 = vmatpush1.bf16.msra.mxu0 %v1561
        %2715 = vmatprep.subr.bf16.mxu0 %v1574
        %2716 = vmatpush1.bf16.msra.mxu0 %v1573
        %2717 = vmatprep.subr.bf16.mxu0 %v1586
        %2718 = vmatpush1.bf16.msra.mxu0 %v1585
        %2719 = vmatprep.subr.bf16.mxu0 %v1598
        %2720 = vmatpush1.bf16.msra.mxu0 %v1597
        %2721 = vmatprep.subr.bf16.mxu0 %v1610
        %2722 = vmatpush1.bf16.msra.mxu0 %v1609
        %2723 = vmatprep.subr.bf16.mxu0 %v1622
        %2724 = vmatpush1.bf16.msra.mxu0 %v1621
        %2725 = vmatprep.subr.bf16.mxu0 %v1634
        %2726 = vmatpush1.bf16.msra.mxu0 %v1633
        %2727 = vmatprep.subr.bf16.mxu0 %v1646
        %2728 = vmatpush1.bf16.msra.mxu0 %v1645
        %2729 = vmatprep.subr.bf16.mxu0 %v1658
        %2730 = vmatpush1.bf16.msra.mxu0 %v1657
        %2731 = vmatprep.subr.bf16.mxu0 %v1670
        %2732 = vmatpush1.bf16.msra.mxu0 %v1669
        %2733 = vmatprep.subr.bf16.mxu0 %v1682
        %2734 = vmatpush1.bf16.msra.mxu0 %v1681
        %2735 = vmatprep.subr.bf16.mxu0 %v1694
        %2736 = vmatpush1.bf16.msra.mxu0 %v1693
        %2737 = vmatprep.subr.bf16.mxu0 %v1706
        %2738 = vmatpush1.bf16.msra.mxu0 %v1705
        %2739 = vmatprep.subr.bf16.mxu0 %v1718
        %2740 = vmatpush1.bf16.msra.mxu0 %v1717
        %2741 = vmatprep.subr.bf16.mxu0 %v1730
        %2742 = vmatpush1.bf16.msra.mxu0 %v1729
        %2743 = vmatprep.subr.bf16.mxu0 %v1742
        %2744 = vmatpush1.bf16.msra.mxu0 %v1741
        %2745 = vmatprep.mubr.bf16.mxu0 %v326
        %2746 = vmatmul.mubr.bf16.gmra.mrb[0].mxu0 %v325
        %v2747 = vpop.f32.mrb[0].mxu0
        %v2748 = vadd.f32 %v664, %v2747
        %v2749 = vpop.f32.mrb[0].mxu0
        %v2750 = vadd.f32 %v668, %v2749
        %v2751 = vpop.f32.mrb[0].mxu0
        %v2752 = vadd.f32 %v664, %v2751
        %v2753 = vpop.f32.mrb[0].mxu0
        %v2754 = vadd.f32 %v668, %v2753
        %2755 = vmatprep.mubr.bf16.mxu0 %v329
        %2756 = vmatmul.mubr.bf16.gmra.mrb[0].mxu0 %v328
        %v2757 = vpop.f32.mrb[0].mxu0
        %v2758 = vadd.f32 %v664, %v2757
        %v2759 = vpop.f32.mrb[0].mxu0
        %v2760 = vadd.f32 %v668, %v2759
        %v2761 = vpop.f32.mrb[0].mxu0
        %v2762 = vadd.f32 %v664, %v2761
        %v2763 = vpop.f32.mrb[0].mxu0
        %v2764 = vadd.f32 %v668, %v2763
        %2765 = vmatprep.mubr.bf16.mxu0 %v332
        %2766 = vmatmul.mubr.bf16.gmra.mrb[0].mxu0 %v331
        %v2767 = vpop.f32.mrb[0].mxu0
        %v2768 = vadd.f32 %v664, %v2767
        %v2769 = vpop.f32.mrb[0].mxu0
        %v2770 = vadd.f32 %v668, %v2769
        %v2771 = vpop.f32.mrb[0].mxu0
        %v2772 = vadd.f32 %v664, %v2771
        %v2773 = vpop.f32.mrb[0].mxu0
        %v2774 = vadd.f32 %v668, %v2773
        %2775 = vmatprep.mubr.bf16.mxu0 %v335
        %2776 = vmatmul.mubr.bf16.gmra.mrb[0].mxu0 %v334
        %v2777 = vpop.f32.mrb[0].mxu0
        %v2778 = vadd.f32 %v664, %v2777
        %v2779 = vpop.f32.mrb[0].mxu0
        %v2780 = vadd.f32 %v668, %v2779
        %v2781 = vpop.f32.mrb[0].mxu0
        %v2782 = vadd.f32 %v664, %v2781
        %v2783 = vpop.f32.mrb[0].mxu0
        %v2784 = vadd.f32 %v668, %v2783
        %2785 = vdwg.mxu0
        %2786 = vmatprep.subr.bf16.mxu0 %v1754
        %2787 = vmatpush1.bf16.msra.mxu0 %v1753
        %2788 = vmatprep.subr.bf16.mxu0 %v1766
        %2789 = vmatpush1.bf16.msra.mxu0 %v1765
        %2790 = vmatprep.subr.bf16.mxu0 %v1778
        %2791 = vmatpush1.bf16.msra.mxu0 %v1777
        %2792 = vmatprep.subr.bf16.mxu0 %v1790
        %2793 = vmatpush1.bf16.msra.mxu0 %v1789
        %2794 = vmatprep.subr.bf16.mxu0 %v1802
        %2795 = vmatpush1.bf16.msra.mxu0 %v1801
        %2796 = vmatprep.subr.bf16.mxu0 %v1814
        %2797 = vmatpush1.bf16.msra.mxu0 %v1813
        %2798 = vmatprep.subr.bf16.mxu0 %v1826
        %2799 = vmatpush1.bf16.msra.mxu0 %v1825
        %2800 = vmatprep.subr.bf16.mxu0 %v1838
        %2801 = vmatpush1.bf16.msra.mxu0 %v1837
        %2802 = vmatprep.subr.bf16.mxu0 0
        %2803 = vmatpush1.bf16.msra.mxu0 0
        %2804 = vmatprep.subr.bf16.mxu0 0
        %2805 = vmatpush1.bf16.msra.mxu0 0
        %2806 = vmatprep.subr.bf16.mxu0 0
        %2807 = vmatpush1.bf16.msra.mxu0 0
        %2808 = vmatprep.subr.bf16.mxu0 0
        %2809 = vmatpush1.bf16.msra.mxu0 0
        %2810 = vmatprep.subr.bf16.mxu0 0
        %2811 = vmatpush1.bf16.msra.mxu0 0
        %2812 = vmatprep.subr.bf16.mxu0 0
        %2813 = vmatpush1.bf16.msra.mxu0 0
        %2814 = vmatprep.subr.bf16.mxu0 0
        %2815 = vmatpush1.bf16.msra.mxu0 0
        %2816 = vmatprep.subr.bf16.mxu0 0
        %2817 = vmatpush1.bf16.msra.mxu0 0
        %2818 = vmatprep.mubr.bf16.mxu0 0
        %2819 = vmatmul.mubr.bf16.gmra.mrb[0].mxu0 %v327
        %v2820 = vpop.f32.mrb[0].mxu0
        %v2821 = vadd.f32 %v2748, %v2820
        %v2822 = vpop.f32.mrb[0].mxu0
        %v2823 = vadd.f32 %v2750, %v2822
        %v2824 = vpop.f32.mrb[0].mxu0
        %v2825 = vadd.f32 %v2752, %v2824
        %v2826 = vpop.f32.mrb[0].mxu0
        %v2827 = vadd.f32 %v2754, %v2826
        %2828 = vmatprep.mubr.bf16.mxu0 0
        %2829 = vmatmul.mubr.bf16.gmra.mrb[0].mxu0 %v330
        %v2830 = vpop.f32.mrb[0].mxu0
        %v2831 = vadd.f32 %v2758, %v2830
        %v2832 = vpop.f32.mrb[0].mxu0
        %v2833 = vadd.f32 %v2760, %v2832
        %v2834 = vpop.f32.mrb[0].mxu0
        %v2835 = vadd.f32 %v2762, %v2834
        %v2836 = vpop.f32.mrb[0].mxu0
        %v2837 = vadd.f32 %v2764, %v2836
        %2838 = vmatprep.mubr.bf16.mxu0 0
        %2839 = vmatmul.mubr.bf16.gmra.mrb[0].mxu0 %v333
        %v2840 = vpop.f32.mrb[0].mxu0
        %v2841 = vadd.f32 %v2768, %v2840
        %v2842 = vpop.f32.mrb[0].mxu0
        %v2843 = vadd.f32 %v2770, %v2842
        %v2844 = vpop.f32.mrb[0].mxu0
        %v2845 = vadd.f32 %v2772, %v2844
        %v2846 = vpop.f32.mrb[0].mxu0
        %v2847 = vadd.f32 %v2774, %v2846
        %2848 = vmatprep.mubr.bf16.mxu0 0
        %2849 = vmatmul.mubr.bf16.gmra.mrb[0].mxu0 %v336
        %v2850 = vpop.f32.mrb[0].mxu0
        %v2851 = vadd.f32 %v2778, %v2850
        %v2852 = vpop.f32.mrb[0].mxu0
        %v2853 = vadd.f32 %v2780, %v2852
        %v2854 = vpop.f32.mrb[0].mxu0
        %v2855 = vadd.f32 %v2782, %v2854
        %v2856 = vpop.f32.mrb[0].mxu0
        %v2857 = vadd.f32 %v2784, %v2856
        %2858 = vdwg.mxu0
        %2859 = vmatprep.subr.bf16.mxu0 %v1564
        %2860 = vmatpush1.bf16.msra.mxu0 %v1563
        %2861 = vmatprep.subr.bf16.mxu0 %v1576
        %2862 = vmatpush1.bf16.msra.mxu0 %v1575
        %2863 = vmatprep.subr.bf16.mxu0 %v1588
        %2864 = vmatpush1.bf16.msra.mxu0 %v1587
        %2865 = vmatprep.subr.bf16.mxu0 %v1600
        %2866 = vmatpush1.bf16.msra.mxu0 %v1599
        %2867 = vmatprep.subr.bf16.mxu0 %v1612
        %2868 = vmatpush1.bf16.msra.mxu0 %v1611
        %2869 = vmatprep.subr.bf16.mxu0 %v1624
        %2870 = vmatpush1.bf16.msra.mxu0 %v1623
        %2871 = vmatprep.subr.bf16.mxu0 %v1636
        %2872 = vmatpush1.bf16.msra.mxu0 %v1635
        %2873 = vmatprep.subr.bf16.mxu0 %v1648
        %2874 = vmatpush1.bf16.msra.mxu0 %v1647
        %2875 = vmatprep.subr.bf16.mxu0 %v1660
        %2876 = vmatpush1.bf16.msra.mxu0 %v1659
        %2877 = vmatprep.subr.bf16.mxu0 %v1672
        %2878 = vmatpush1.bf16.msra.mxu0 %v1671
        %2879 = vmatprep.subr.bf16.mxu0 %v1684
        %2880 = vmatpush1.bf16.msra.mxu0 %v1683
        %2881 = vmatprep.subr.bf16.mxu0 %v1696
        %2882 = vmatpush1.bf16.msra.mxu0 %v1695
        %2883 = vmatprep.subr.bf16.mxu0 %v1708
        %2884 = vmatpush1.bf16.msra.mxu0 %v1707
        %2885 = vmatprep.subr.bf16.mxu0 %v1720
        %2886 = vmatpush1.bf16.msra.mxu0 %v1719
        %2887 = vmatprep.subr.bf16.mxu0 %v1732
        %2888 = vmatpush1.bf16.msra.mxu0 %v1731
        %2889 = vmatprep.subr.bf16.mxu0 %v1744
        %2890 = vmatpush1.bf16.msra.mxu0 %v1743
        %2891 = vmatprep.mubr.bf16.mxu0 %v326
        %2892 = vmatmul.mubr.bf16.gmra.mrb[0].mxu0 %v325
        %v2893 = vpop.f32.mrb[0].mxu0
        %v2894 = vadd.f32 %v672, %v2893
        %v2895 = vpop.f32.mrb[0].mxu0
        %v2896 = vadd.f32 %v676, %v2895
        %v2897 = vpop.f32.mrb[0].mxu0
        %v2898 = vadd.f32 %v672, %v2897
        %v2899 = vpop.f32.mrb[0].mxu0
        %v2900 = vadd.f32 %v676, %v2899
        %2901 = vmatprep.mubr.bf16.mxu0 %v329
        %2902 = vmatmul.mubr.bf16.gmra.mrb[0].mxu0 %v328
        %v2903 = vpop.f32.mrb[0].mxu0
        %v2904 = vadd.f32 %v672, %v2903
        %v2905 = vpop.f32.mrb[0].mxu0
        %v2906 = vadd.f32 %v676, %v2905
        %v2907 = vpop.f32.mrb[0].mxu0
        %v2908 = vadd.f32 %v672, %v2907
        %v2909 = vpop.f32.mrb[0].mxu0
        %v2910 = vadd.f32 %v676, %v2909
        %2911 = vmatprep.mubr.bf16.mxu0 %v332
        %2912 = vmatmul.mubr.bf16.gmra.mrb[0].mxu0 %v331
        %v2913 = vpop.f32.mrb[0].mxu0
        %v2914 = vadd.f32 %v672, %v2913
        %v2915 = vpop.f32.mrb[0].mxu0
        %v2916 = vadd.f32 %v676, %v2915
        %v2917 = vpop.f32.mrb[0].mxu0
        %v2918 = vadd.f32 %v672, %v2917
        %v2919 = vpop.f32.mrb[0].mxu0
        %v2920 = vadd.f32 %v676, %v2919
        %2921 = vmatprep.mubr.bf16.mxu0 %v335
        %2922 = vmatmul.mubr.bf16.gmra.mrb[0].mxu0 %v334
        %v2923 = vpop.f32.mrb[0].mxu0
        %v2924 = vadd.f32 %v672, %v2923
        %v2925 = vpop.f32.mrb[0].mxu0
        %v2926 = vadd.f32 %v676, %v2925
        %v2927 = vpop.f32.mrb[0].mxu0
        %v2928 = vadd.f32 %v672, %v2927
        %v2929 = vpop.f32.mrb[0].mxu0
        %v2930 = vadd.f32 %v676, %v2929
        %2931 = vdwg.mxu0
        %2932 = vmatprep.subr.bf16.mxu0 %v1756
        %2933 = vmatpush1.bf16.msra.mxu0 %v1755
        %2934 = vmatprep.subr.bf16.mxu0 %v1768
        %2935 = vmatpush1.bf16.msra.mxu0 %v1767
        %2936 = vmatprep.subr.bf16.mxu0 %v1780
        %2937 = vmatpush1.bf16.msra.mxu0 %v1779
        %2938 = vmatprep.subr.bf16.mxu0 %v1792
        %2939 = vmatpush1.bf16.msra.mxu0 %v1791
        %2940 = vmatprep.subr.bf16.mxu0 %v1804
        %2941 = vmatpush1.bf16.msra.mxu0 %v1803
        %2942 = vmatprep.subr.bf16.mxu0 %v1816
        %2943 = vmatpush1.bf16.msra.mxu0 %v1815
        %2944 = vmatprep.subr.bf16.mxu0 %v1828
        %2945 = vmatpush1.bf16.msra.mxu0 %v1827
        %2946 = vmatprep.subr.bf16.mxu0 %v1840
        %2947 = vmatpush1.bf16.msra.mxu0 %v1839
        %2948 = vmatprep.subr.bf16.mxu0 0
        %2949 = vmatpush1.bf16.msra.mxu0 0
        %2950 = vmatprep.subr.bf16.mxu0 0
        %2951 = vmatpush1.bf16.msra.mxu0 0
        %2952 = vmatprep.subr.bf16.mxu0 0
        %2953 = vmatpush1.bf16.msra.mxu0 0
        %2954 = vmatprep.subr.bf16.mxu0 0
        %2955 = vmatpush1.bf16.msra.mxu0 0
        %2956 = vmatprep.subr.bf16.mxu0 0
        %2957 = vmatpush1.bf16.msra.mxu0 0
        %2958 = vmatprep.subr.bf16.mxu0 0
        %2959 = vmatpush1.bf16.msra.mxu0 0
        %2960 = vmatprep.subr.bf16.mxu0 0
        %2961 = vmatpush1.bf16.msra.mxu0 0
        %2962 = vmatprep.subr.bf16.mxu0 0
        %2963 = vmatpush1.bf16.msra.mxu0 0
        %2964 = vmatprep.mubr.bf16.mxu0 0
        %2965 = vmatmul.mubr.bf16.gmra.mrb[0].mxu0 %v327
        %v2966 = vpop.f32.mrb[0].mxu0
        %v2967 = vadd.f32 %v2894, %v2966
        %v2968 = vpop.f32.mrb[0].mxu0
        %v2969 = vadd.f32 %v2896, %v2968
        %v2970 = vpop.f32.mrb[0].mxu0
        %v2971 = vadd.f32 %v2898, %v2970
        %v2972 = vpop.f32.mrb[0].mxu0
        %v2973 = vadd.f32 %v2900, %v2972
        %2974 = vmatprep.mubr.bf16.mxu0 0
        %2975 = vmatmul.mubr.bf16.gmra.mrb[0].mxu0 %v330
        %v2976 = vpop.f32.mrb[0].mxu0
        %v2977 = vadd.f32 %v2904, %v2976
        %v2978 = vpop.f32.mrb[0].mxu0
        %v2979 = vadd.f32 %v2906, %v2978
        %v2980 = vpop.f32.mrb[0].mxu0
        %v2981 = vadd.f32 %v2908, %v2980
        %v2982 = vpop.f32.mrb[0].mxu0
        %v2983 = vadd.f32 %v2910, %v2982
        %2984 = vmatprep.mubr.bf16.mxu0 0
        %2985 = vmatmul.mubr.bf16.gmra.mrb[0].mxu0 %v333
        %v2986 = vpop.f32.mrb[0].mxu0
        %v2987 = vadd.f32 %v2914, %v2986
        %v2988 = vpop.f32.mrb[0].mxu0
        %v2989 = vadd.f32 %v2916, %v2988
        %v2990 = vpop.f32.mrb[0].mxu0
        %v2991 = vadd.f32 %v2918, %v2990
        %v2992 = vpop.f32.mrb[0].mxu0
        %v2993 = vadd.f32 %v2920, %v2992
        %2994 = vmatprep.mubr.bf16.mxu0 0
        %2995 = vmatmul.mubr.bf16.gmra.mrb[0].mxu0 %v336
        %v2996 = vpop.f32.mrb[0].mxu0
        %v2997 = vadd.f32 %v2924, %v2996
        %v2998 = vpop.f32.mrb[0].mxu0
        %v2999 = vadd.f32 %v2926, %v2998
        %v3000 = vpop.f32.mrb[0].mxu0
        %v3001 = vadd.f32 %v2928, %v3000
        %v3002 = vpop.f32.mrb[0].mxu0
        %v3003 = vadd.f32 %v2930, %v3002
        %3004 = vdwg.mxu0
        %v3005 = vmax.f32 %v2237, 0.0
        %v3006 = vmax.f32 %v2239, 0.0
        %v3007 = vmax.f32 %v2383, 0.0
        %v3008 = vmax.f32 %v2385, 0.0
        %v3009 = vmax.f32 %v2529, 0.0
        %v3010 = vmax.f32 %v2531, 0.0
        %v3011 = vmax.f32 %v2675, 0.0
        %v3012 = vmax.f32 %v2677, 0.0
        %v3013 = vmax.f32 %v2821, 0.0
        %v3014 = vmax.f32 %v2823, 0.0
        %v3015 = vmax.f32 %v2967, 0.0
        %v3016 = vmax.f32 %v2969, 0.0
        %v3017 = vmax.f32 %v2241, 0.0
        %v3018 = vmax.f32 %v2243, 0.0
        %v3019 = vmax.f32 %v2387, 0.0
        %v3020 = vmax.f32 %v2389, 0.0
        %v3021 = vmax.f32 %v2533, 0.0
        %v3022 = vmax.f32 %v2535, 0.0
        %v3023 = vmax.f32 %v2679, 0.0
        %v3024 = vmax.f32 %v2681, 0.0
        %v3025 = vmax.f32 %v2825, 0.0
        %v3026 = vmax.f32 %v2827, 0.0
        %v3027 = vmax.f32 %v2971, 0.0
        %v3028 = vmax.f32 %v2973, 0.0
        %v3029 = vmax.f32 %v2247, 0.0
        %v3030 = vmax.f32 %v2249, 0.0
        %v3031 = vmax.f32 %v2393, 0.0
        %v3032 = vmax.f32 %v2395, 0.0
        %v3033 = vmax.f32 %v2539, 0.0
        %v3034 = vmax.f32 %v2541, 0.0
        %v3035 = vmax.f32 %v2685, 0.0
        %v3036 = vmax.f32 %v2687, 0.0
        %v3037 = vmax.f32 %v2831, 0.0
        %v3038 = vmax.f32 %v2833, 0.0
        %v3039 = vmax.f32 %v2977, 0.0
        %v3040 = vmax.f32 %v2979, 0.0
        %v3041 = vmax.f32 %v2251, 0.0
        %v3042 = vmax.f32 %v2253, 0.0
        %v3043 = vmax.f32 %v2397, 0.0
        %v3044 = vmax.f32 %v2399, 0.0
        %v3045 = vmax.f32 %v2543, 0.0
        %v3046 = vmax.f32 %v2545, 0.0
        %v3047 = vmax.f32 %v2689, 0.0
        %v3048 = vmax.f32 %v2691, 0.0
        %v3049 = vmax.f32 %v2835, 0.0
        %v3050 = vmax.f32 %v2837, 0.0
        %v3051 = vmax.f32 %v2981, 0.0
        %v3052 = vmax.f32 %v2983, 0.0
        %v3053 = vmax.f32 %v2257, 0.0
        %v3054 = vmax.f32 %v2259, 0.0
        %v3055 = vmax.f32 %v2403, 0.0
        %v3056 = vmax.f32 %v2405, 0.0
        %v3057 = vmax.f32 %v2549, 0.0
        %v3058 = vmax.f32 %v2551, 0.0
        %v3059 = vmax.f32 %v2695, 0.0
        %v3060 = vmax.f32 %v2697, 0.0
        %v3061 = vmax.f32 %v2841, 0.0
        %v3062 = vmax.f32 %v2843, 0.0
        %v3063 = vmax.f32 %v2987, 0.0
        %v3064 = vmax.f32 %v2989, 0.0
        %v3065 = vmax.f32 %v2261, 0.0
        %v3066 = vmax.f32 %v2263, 0.0
        %v3067 = vmax.f32 %v2407, 0.0
        %v3068 = vmax.f32 %v2409, 0.0
        %v3069 = vmax.f32 %v2553, 0.0
        %v3070 = vmax.f32 %v2555, 0.0
        %v3071 = vmax.f32 %v2699, 0.0
        %v3072 = vmax.f32 %v2701, 0.0
        %v3073 = vmax.f32 %v2845, 0.0
        %v3074 = vmax.f32 %v2847, 0.0
        %v3075 = vmax.f32 %v2991, 0.0
        %v3076 = vmax.f32 %v2993, 0.0
        %v3077 = vmax.f32 %v2267, 0.0
        %v3078 = vmax.f32 %v2269, 0.0
        %v3079 = vmax.f32 %v2413, 0.0
        %v3080 = vmax.f32 %v2415, 0.0
        %v3081 = vmax.f32 %v2559, 0.0
        %v3082 = vmax.f32 %v2561, 0.0
        %v3083 = vmax.f32 %v2705, 0.0
        %v3084 = vmax.f32 %v2707, 0.0
        %v3085 = vmax.f32 %v2851, 0.0
        %v3086 = vmax.f32 %v2853, 0.0
        %v3087 = vmax.f32 %v2997, 0.0
        %v3088 = vmax.f32 %v2999, 0.0
        %v3089 = vmax.f32 %v2271, 0.0
        %v3090 = vmax.f32 %v2273, 0.0
        %v3091 = vmax.f32 %v2417, 0.0
        %v3092 = vmax.f32 %v2419, 0.0
        %v3093 = vmax.f32 %v2563, 0.0
        %v3094 = vmax.f32 %v2565, 0.0
        %v3095 = vmax.f32 %v2709, 0.0
        %v3096 = vmax.f32 %v2711, 0.0
        %v3097 = vmax.f32 %v2855, 0.0
        %v3098 = vmax.f32 %v2857, 0.0
        %v3099 = vmax.f32 %v3001, 0.0
        %v3100 = vmax.f32 %v3003, 0.0
        %v3101 = vpack.c.bf16 %v3017, %v3005
        %v3102 = vpack.c.bf16 %v3018, %v3006
        %v3103 = vpack.c.bf16 %v3019, %v3007
        %v3104 = vpack.c.bf16 %v3020, %v3008
        %v3105 = vpack.c.bf16 %v3021, %v3009
        %v3106 = vpack.c.bf16 %v3022, %v3010
        %v3107 = vpack.c.bf16 %v3023, %v3011
        %v3108 = vpack.c.bf16 %v3024, %v3012
        %v3109 = vpack.c.bf16 %v3025, %v3013
        %v3110 = vpack.c.bf16 %v3026, %v3014
        %v3111 = vpack.c.bf16 %v3027, %v3015
        %v3112 = vpack.c.bf16 %v3028, %v3016
        %v3113 = vpack.c.bf16 %v3041, %v3029
        %v3114 = vpack.c.bf16 %v3042, %v3030
        %v3115 = vpack.c.bf16 %v3043, %v3031
        %v3116 = vpack.c.bf16 %v3044, %v3032
        %v3117 = vpack.c.bf16 %v3045, %v3033
        %v3118 = vpack.c.bf16 %v3046, %v3034
        %v3119 = vpack.c.bf16 %v3047, %v3035
        %v3120 = vpack.c.bf16 %v3048, %v3036
        %v3121 = vpack.c.bf16 %v3049, %v3037
        %v3122 = vpack.c.bf16 %v3050, %v3038
        %v3123 = vpack.c.bf16 %v3051, %v3039
        %v3124 = vpack.c.bf16 %v3052, %v3040
        %v3125 = vpack.c.bf16 %v3065, %v3053
        %v3126 = vpack.c.bf16 %v3066, %v3054
        %v3127 = vpack.c.bf16 %v3067, %v3055
        %v3128 = vpack.c.bf16 %v3068, %v3056
        %v3129 = vpack.c.bf16 %v3069, %v3057
        %v3130 = vpack.c.bf16 %v3070, %v3058
        %v3131 = vpack.c.bf16 %v3071, %v3059
        %v3132 = vpack.c.bf16 %v3072, %v3060
        %v3133 = vpack.c.bf16 %v3073, %v3061
        %v3134 = vpack.c.bf16 %v3074, %v3062
        %v3135 = vpack.c.bf16 %v3075, %v3063
        %v3136 = vpack.c.bf16 %v3076, %v3064
        %v3137 = vpack.c.bf16 %v3089, %v3077
        %v3138 = vpack.c.bf16 %v3090, %v3078
        %v3139 = vpack.c.bf16 %v3091, %v3079
        %v3140 = vpack.c.bf16 %v3092, %v3080
        %v3141 = vpack.c.bf16 %v3093, %v3081
        %v3142 = vpack.c.bf16 %v3094, %v3082
        %v3143 = vpack.c.bf16 %v3095, %v3083
        %v3144 = vpack.c.bf16 %v3096, %v3084
        %v3145 = vpack.c.bf16 %v3097, %v3085
        %v3146 = vpack.c.bf16 %v3098, %v3086
        %v3147 = vpack.c.bf16 %v3099, %v3087
        %v3148 = vpack.c.bf16 %v3100, %v3088
        %v3149 = vld [vmem:[#allocation8] sm:$0xff]
        %v3150 = vld [vmem:[#allocation8 + $0x8] sm:$0xf]
        %v3151 = vld [vmem:[#allocation8 + $0xc] sm:$0xff]
        %v3152 = vld [vmem:[#allocation8 + $0x14] sm:$0xf]
        %v3153 = vld [vmem:[#allocation8 + $0x18] sm:$0xff]
        %v3154 = vld [vmem:[#allocation8 + $0x20] sm:$0xf]
        %v3155 = vld [vmem:[#allocation8 + $0x24] sm:$0xff]
        %v3156 = vld [vmem:[#allocation8 + $0x2c] sm:$0xf]
        %v3157 = vld [vmem:[#allocation8 + $0x30] sm:$0xff]
        %v3158 = vld [vmem:[#allocation8 + $0x38] sm:$0xf]
        %v3159 = vld [vmem:[#allocation8 + $0x3c] sm:$0xff]
        %v3160 = vld [vmem:[#allocation8 + $0x44] sm:$0xf]
        %v3161 = vld [vmem:[#allocation8 + $0x48] sm:$0xff]
        %v3162 = vld [vmem:[#allocation8 + $0x50] sm:$0xf]
        %v3163 = vld [vmem:[#allocation8 + $0x54] sm:$0xff]
        %v3164 = vld [vmem:[#allocation8 + $0x5c] sm:$0xf]
        %v3165 = vld [vmem:[#allocation8 + $0x60] sm:$0xff]
        %v3166 = vld [vmem:[#allocation8 + $0x68] sm:$0xf]
        %v3167 = vld [vmem:[#allocation8 + $0x6c] sm:$0xff]
        %v3168 = vld [vmem:[#allocation8 + $0x74] sm:$0xf]
        %v3169 = vld [vmem:[#allocation8 + $0x78] sm:$0xff]
        %v3170 = vld [vmem:[#allocation8 + $0x80] sm:$0xf]
        %v3171 = vld [vmem:[#allocation8 + $0x84] sm:$0xff]
        %v3172 = vld [vmem:[#allocation8 + $0x8c] sm:$0xf]
        %v3173 = vld [vmem:[#allocation8 + $0x90] sm:$0xff]
        %v3174 = vld [vmem:[#allocation8 + $0x98] sm:$0xf]
        %v3175 = vld [vmem:[#allocation8 + $0x9c] sm:$0xff]
        %v3176 = vld [vmem:[#allocation8 + $0xa4] sm:$0xf]
        %v3177 = vld [vmem:[#allocation8 + $0xa8] sm:$0xff]
        %v3178 = vld [vmem:[#allocation8 + $0xb0] sm:$0xf]
        %v3179 = vld [vmem:[#allocation8 + $0xb4] sm:$0xff]
        %v3180 = vld [vmem:[#allocation8 + $0xbc] sm:$0xf]
        %v3181 = vld [vmem:[#allocation8 + $0xc0] sm:$0xff]
        %v3182 = vld [vmem:[#allocation8 + $0xc8] sm:$0xf]
        %v3183 = vld [vmem:[#allocation8 + $0xcc] sm:$0xff]
        %v3184 = vld [vmem:[#allocation8 + $0xd4] sm:$0xf]
        %v3185 = vld [vmem:[#allocation8 + $0xd8] sm:$0xff]
        %v3186 = vld [vmem:[#allocation8 + $0xe0] sm:$0xf]
        %v3187 = vld [vmem:[#allocation8 + $0xe4] sm:$0xff]
        %v3188 = vld [vmem:[#allocation8 + $0xec] sm:$0xf]
        %v3189 = vld [vmem:[#allocation8 + $0xf0] sm:$0xff]
        %v3190 = vld [vmem:[#allocation8 + $0xf8] sm:$0xf]
        %v3191 = vld [vmem:[#allocation8 + $0xfc] sm:$0xff]
        %v3192 = vld [vmem:[#allocation8 + $0x104] sm:$0xf]
        %v3193 = vld [vmem:[#allocation8 + $0x108] sm:$0xff]
        %v3194 = vld [vmem:[#allocation8 + $0x110] sm:$0xf]
        %v3195 = vld [vmem:[#allocation8 + $0x114] sm:$0xff]
        %v3196 = vld [vmem:[#allocation8 + $0x11c] sm:$0xf]
        %v3197 = vld [vmem:[#allocation8 + $0x120] sm:$0xff]
        %v3198 = vld [vmem:[#allocation8 + $0x128] sm:$0xf]
        %v3199 = vld [vmem:[#allocation8 + $0x12c] sm:$0xff]
        %v3200 = vld [vmem:[#allocation8 + $0x134] sm:$0xf]
        %v3201 = vld [vmem:[#allocation8 + $0x138] sm:$0xff]
        %v3202 = vld [vmem:[#allocation8 + $0x140] sm:$0xf]
        %v3203 = vld [vmem:[#allocation8 + $0x144] sm:$0xff]
        %v3204 = vld [vmem:[#allocation8 + $0x14c] sm:$0xf]
        %v3205 = vld [vmem:[#allocation8 + $0x150] sm:$0xff]
        %v3206 = vld [vmem:[#allocation8 + $0x158] sm:$0xf]
        %v3207 = vld [vmem:[#allocation8 + $0x15c] sm:$0xff]
        %v3208 = vld [vmem:[#allocation8 + $0x164] sm:$0xf]
        %v3209 = vld [vmem:[#allocation8 + $0x168] sm:$0xff]
        %v3210 = vld [vmem:[#allocation8 + $0x170] sm:$0xf]
        %v3211 = vld [vmem:[#allocation8 + $0x174] sm:$0xff]
        %v3212 = vld [vmem:[#allocation8 + $0x17c] sm:$0xf]
        %v3213 = vld [vmem:[#allocation8 + $0x180] sm:$0xff]
        %v3214 = vld [vmem:[#allocation8 + $0x188] sm:$0xf]
        %v3215 = vld [vmem:[#allocation8 + $0x18c] sm:$0xff]
        %v3216 = vld [vmem:[#allocation8 + $0x194] sm:$0xf]
        %v3217 = vld [vmem:[#allocation8 + $0x198] sm:$0xff]
        %v3218 = vld [vmem:[#allocation8 + $0x1a0] sm:$0xf]
        %v3219 = vld [vmem:[#allocation8 + $0x1a4] sm:$0xff]
        %v3220 = vld [vmem:[#allocation8 + $0x1ac] sm:$0xf]
        %v3221 = vld [vmem:[#allocation8 + $0x1b0] sm:$0xff]
        %v3222 = vld [vmem:[#allocation8 + $0x1b8] sm:$0xf]
        %v3223 = vld [vmem:[#allocation8 + $0x1bc] sm:$0xff]
        %v3224 = vld [vmem:[#allocation8 + $0x1c4] sm:$0xf]
        %v3225 = vld [vmem:[#allocation8 + $0x1c8] sm:$0xff]
        %v3226 = vld [vmem:[#allocation8 + $0x1d0] sm:$0xf]
        %v3227 = vld [vmem:[#allocation8 + $0x1d4] sm:$0xff]
        %v3228 = vld [vmem:[#allocation8 + $0x1dc] sm:$0xf]
        %v3229 = vld [vmem:[#allocation8 + $0x1e0] sm:$0xff]
        %v3230 = vld [vmem:[#allocation8 + $0x1e8] sm:$0xf]
        %v3231 = vld [vmem:[#allocation8 + $0x1ec] sm:$0xff]
        %v3232 = vld [vmem:[#allocation8 + $0x1f4] sm:$0xf]
        %v3233 = vld [vmem:[#allocation8 + $0x1f8] sm:$0xff]
        %v3234 = vld [vmem:[#allocation8 + $0x200] sm:$0xf]
        %v3235 = vld [vmem:[#allocation8 + $0x204] sm:$0xff]
        %v3236 = vld [vmem:[#allocation8 + $0x20c] sm:$0xf]
        %v3237 = vld [vmem:[#allocation8 + $0x210] sm:$0xff]
        %v3238 = vld [vmem:[#allocation8 + $0x218] sm:$0xf]
        %v3239 = vld [vmem:[#allocation8 + $0x21c] sm:$0xff]
        %v3240 = vld [vmem:[#allocation8 + $0x224] sm:$0xf]
        %v3241 = vld [vmem:[#allocation8 + $0x228] sm:$0xff]
        %v3242 = vld [vmem:[#allocation8 + $0x230] sm:$0xf]
        %v3243 = vld [vmem:[#allocation8 + $0x234] sm:$0xff]
        %v3244 = vld [vmem:[#allocation8 + $0x23c] sm:$0xf]
        %v3245 = vld [vmem:[#allocation8 + $0x240] sm:$0xff]
        %v3246 = vld [vmem:[#allocation8 + $0x248] sm:$0xf]
        %v3247 = vld [vmem:[#allocation8 + $0x24c] sm:$0xff]
        %v3248 = vld [vmem:[#allocation8 + $0x254] sm:$0xf]
        %v3249 = vld [vmem:[#allocation8 + $0x258] sm:$0xff]
        %v3250 = vld [vmem:[#allocation8 + $0x260] sm:$0xf]
        %v3251 = vld [vmem:[#allocation8 + $0x264] sm:$0xff]
        %v3252 = vld [vmem:[#allocation8 + $0x26c] sm:$0xf]
        %v3253 = vld [vmem:[#allocation8 + $0x270] sm:$0xff]
        %v3254 = vld [vmem:[#allocation8 + $0x278] sm:$0xf]
        %v3255 = vld [vmem:[#allocation8 + $0x27c] sm:$0xff]
        %v3256 = vld [vmem:[#allocation8 + $0x284] sm:$0xf]
        %v3257 = vld [vmem:[#allocation8 + $0x288] sm:$0xff]
        %v3258 = vld [vmem:[#allocation8 + $0x290] sm:$0xf]
        %v3259 = vld [vmem:[#allocation8 + $0x294] sm:$0xff]
        %v3260 = vld [vmem:[#allocation8 + $0x29c] sm:$0xf]
        %v3261 = vld [vmem:[#allocation8 + $0x2a0] sm:$0xff]
        %v3262 = vld [vmem:[#allocation8 + $0x2a8] sm:$0xf]
        %v3263 = vld [vmem:[#allocation8 + $0x2ac] sm:$0xff]
        %v3264 = vld [vmem:[#allocation8 + $0x2b4] sm:$0xf]
        %v3265 = vld [vmem:[#allocation8 + $0x2b8] sm:$0xff]
        %v3266 = vld [vmem:[#allocation8 + $0x2c0] sm:$0xf]
        %v3267 = vld [vmem:[#allocation8 + $0x2c4] sm:$0xff]
        %v3268 = vld [vmem:[#allocation8 + $0x2cc] sm:$0xf]
        %v3269 = vld [vmem:[#allocation8 + $0x2d0] sm:$0xff]
        %v3270 = vld [vmem:[#allocation8 + $0x2d8] sm:$0xf]
        %v3271 = vld [vmem:[#allocation8 + $0x2dc] sm:$0xff]
        %v3272 = vld [vmem:[#allocation8 + $0x2e4] sm:$0xf]
        %v3273 = vld [vmem:[#allocation8 + $0x2e8] sm:$0xff]
        %v3274 = vld [vmem:[#allocation8 + $0x2f0] sm:$0xf]
        %v3275 = vld [vmem:[#allocation8 + $0x2f4] sm:$0xff]
        %v3276 = vld [vmem:[#allocation8 + $0x2fc] sm:$0xf]
        %v3277 = vld [vmem:[#allocation8 + $0x300] sm:$0xff]
        %v3278 = vld [vmem:[#allocation8 + $0x308] sm:$0xf]
        %v3279 = vld [vmem:[#allocation8 + $0x30c] sm:$0xff]
        %v3280 = vld [vmem:[#allocation8 + $0x314] sm:$0xf]
        %v3281 = vld [vmem:[#allocation8 + $0x318] sm:$0xff]
        %v3282 = vld [vmem:[#allocation8 + $0x320] sm:$0xf]
        %v3283 = vld [vmem:[#allocation8 + $0x324] sm:$0xff]
        %v3284 = vld [vmem:[#allocation8 + $0x32c] sm:$0xf]
        %v3285 = vld [vmem:[#allocation8 + $0x330] sm:$0xff]
        %v3286 = vld [vmem:[#allocation8 + $0x338] sm:$0xf]
        %v3287 = vld [vmem:[#allocation8 + $0x33c] sm:$0xff]
        %v3288 = vld [vmem:[#allocation8 + $0x344] sm:$0xf]
        %v3289 = vld [vmem:[#allocation8 + $0x348] sm:$0xff]
        %v3290 = vld [vmem:[#allocation8 + $0x350] sm:$0xf]
        %v3291 = vld [vmem:[#allocation8 + $0x354] sm:$0xff]
        %v3292 = vld [vmem:[#allocation8 + $0x35c] sm:$0xf]
        %v3293 = vld [vmem:[#allocation8 + $0x360] sm:$0xff]
        %v3294 = vld [vmem:[#allocation8 + $0x368] sm:$0xf]
        %v3295 = vld [vmem:[#allocation8 + $0x36c] sm:$0xff]
        %v3296 = vld [vmem:[#allocation8 + $0x374] sm:$0xf]
        %v3297 = vld [vmem:[#allocation8 + $0x378] sm:$0xff]
        %v3298 = vld [vmem:[#allocation8 + $0x380] sm:$0xf]
        %v3299 = vld [vmem:[#allocation8 + $0x384] sm:$0xff]
        %v3300 = vld [vmem:[#allocation8 + $0x38c] sm:$0xf]
        %v3301 = vld [vmem:[#allocation8 + $0x390] sm:$0xff]
        %v3302 = vld [vmem:[#allocation8 + $0x398] sm:$0xf]
        %v3303 = vld [vmem:[#allocation8 + $0x39c] sm:$0xff]
        %v3304 = vld [vmem:[#allocation8 + $0x3a4] sm:$0xf]
        %v3305 = vld [vmem:[#allocation8 + $0x3a8] sm:$0xff]
        %v3306 = vld [vmem:[#allocation8 + $0x3b0] sm:$0xf]
        %v3307 = vld [vmem:[#allocation8 + $0x3b4] sm:$0xff]
        %v3308 = vld [vmem:[#allocation8 + $0x3bc] sm:$0xf]
        %v3309 = vld [vmem:[#allocation8 + $0x3c0] sm:$0xff]
        %v3310 = vld [vmem:[#allocation8 + $0x3c8] sm:$0xf]
        %v3311 = vld [vmem:[#allocation8 + $0x3cc] sm:$0xff]
        %v3312 = vld [vmem:[#allocation8 + $0x3d4] sm:$0xf]
        %v3313 = vld [vmem:[#allocation8 + $0x3d8] sm:$0xff]
        %v3314 = vld [vmem:[#allocation8 + $0x3e0] sm:$0xf]
        %v3315 = vld [vmem:[#allocation8 + $0x3e4] sm:$0xff]
        %v3316 = vld [vmem:[#allocation8 + $0x3ec] sm:$0xf]
        %v3317 = vld [vmem:[#allocation8 + $0x3f0] sm:$0xff]
        %v3318 = vld [vmem:[#allocation8 + $0x3f8] sm:$0xf]
        %v3319 = vld [vmem:[#allocation8 + $0x3fc] sm:$0xff]
        %v3320 = vld [vmem:[#allocation8 + $0x404] sm:$0xf]
        %v3321 = vld [vmem:[#allocation8 + $0x408] sm:$0xff]
        %v3322 = vld [vmem:[#allocation8 + $0x410] sm:$0xf]
        %v3323 = vld [vmem:[#allocation8 + $0x414] sm:$0xff]
        %v3324 = vld [vmem:[#allocation8 + $0x41c] sm:$0xf]
        %v3325 = vld [vmem:[#allocation8 + $0x420] sm:$0xff]
        %v3326 = vld [vmem:[#allocation8 + $0x428] sm:$0xf]
        %v3327 = vld [vmem:[#allocation8 + $0x42c] sm:$0xff]
        %v3328 = vld [vmem:[#allocation8 + $0x434] sm:$0xf]
        %v3329 = vld [vmem:[#allocation8 + $0x438] sm:$0xff]
        %v3330 = vld [vmem:[#allocation8 + $0x440] sm:$0xf]
        %v3331 = vld [vmem:[#allocation8 + $0x444] sm:$0xff]
        %v3332 = vld [vmem:[#allocation8 + $0x44c] sm:$0xf]
        %v3333 = vld [vmem:[#allocation8 + $0x450] sm:$0xff]
        %v3334 = vld [vmem:[#allocation8 + $0x458] sm:$0xf]
        %v3335 = vld [vmem:[#allocation8 + $0x45c] sm:$0xff]
        %v3336 = vld [vmem:[#allocation8 + $0x464] sm:$0xf]
        %v3337 = vld [vmem:[#allocation8 + $0x468] sm:$0xff]
        %v3338 = vld [vmem:[#allocation8 + $0x470] sm:$0xf]
        %v3339 = vld [vmem:[#allocation8 + $0x474] sm:$0xff]
        %v3340 = vld [vmem:[#allocation8 + $0x47c] sm:$0xf]
        %v3341 = vld [vmem:[#allocation8 + $0x480] sm:$0xff]
        %v3342 = vld [vmem:[#allocation8 + $0x488] sm:$0xf]
        %v3343 = vld [vmem:[#allocation8 + $0x48c] sm:$0xff]
        %v3344 = vld [vmem:[#allocation8 + $0x494] sm:$0xf]
        %v3345 = vld [vmem:[#allocation8 + $0x498] sm:$0xff]
        %v3346 = vld [vmem:[#allocation8 + $0x4a0] sm:$0xf]
        %v3347 = vld [vmem:[#allocation8 + $0x4a4] sm:$0xff]
        %v3348 = vld [vmem:[#allocation8 + $0x4ac] sm:$0xf]
        %v3349 = vld [vmem:[#allocation8 + $0x4b0] sm:$0xff]
        %v3350 = vld [vmem:[#allocation8 + $0x4b8] sm:$0xf]
        %v3351 = vld [vmem:[#allocation8 + $0x4bc] sm:$0xff]
        %v3352 = vld [vmem:[#allocation8 + $0x4c4] sm:$0xf]
        %v3353 = vld [vmem:[#allocation8 + $0x4c8] sm:$0xff]
        %v3354 = vld [vmem:[#allocation8 + $0x4d0] sm:$0xf]
        %v3355 = vld [vmem:[#allocation8 + $0x4d4] sm:$0xff]
        %v3356 = vld [vmem:[#allocation8 + $0x4dc] sm:$0xf]
        %v3357 = vld [vmem:[#allocation8 + $0x4e0] sm:$0xff]
        %v3358 = vld [vmem:[#allocation8 + $0x4e8] sm:$0xf]
        %v3359 = vld [vmem:[#allocation8 + $0x4ec] sm:$0xff]
        %v3360 = vld [vmem:[#allocation8 + $0x4f4] sm:$0xf]
        %v3361 = vld [vmem:[#allocation8 + $0x4f8] sm:$0xff]
        %v3362 = vld [vmem:[#allocation8 + $0x500] sm:$0xf]
        %v3363 = vld [vmem:[#allocation8 + $0x504] sm:$0xff]
        %v3364 = vld [vmem:[#allocation8 + $0x50c] sm:$0xf]
        %v3365 = vld [vmem:[#allocation8 + $0x510] sm:$0xff]
        %v3366 = vld [vmem:[#allocation8 + $0x518] sm:$0xf]
        %v3367 = vld [vmem:[#allocation8 + $0x51c] sm:$0xff]
        %v3368 = vld [vmem:[#allocation8 + $0x524] sm:$0xf]
        %v3369 = vld [vmem:[#allocation8 + $0x528] sm:$0xff]
        %v3370 = vld [vmem:[#allocation8 + $0x530] sm:$0xf]
        %v3371 = vld [vmem:[#allocation8 + $0x534] sm:$0xff]
        %v3372 = vld [vmem:[#allocation8 + $0x53c] sm:$0xf]
        %v3373 = vld [vmem:[#allocation8 + $0x540] sm:$0xff]
        %v3374 = vld [vmem:[#allocation8 + $0x548] sm:$0xf]
        %v3375 = vld [vmem:[#allocation8 + $0x54c] sm:$0xff]
        %v3376 = vld [vmem:[#allocation8 + $0x554] sm:$0xf]
        %v3377 = vld [vmem:[#allocation8 + $0x558] sm:$0xff]
        %v3378 = vld [vmem:[#allocation8 + $0x560] sm:$0xf]
        %v3379 = vld [vmem:[#allocation8 + $0x564] sm:$0xff]
        %v3380 = vld [vmem:[#allocation8 + $0x56c] sm:$0xf]
        %v3381 = vld [vmem:[#allocation8 + $0x570] sm:$0xff]
        %v3382 = vld [vmem:[#allocation8 + $0x578] sm:$0xf]
        %v3383 = vld [vmem:[#allocation8 + $0x57c] sm:$0xff]
        %v3384 = vld [vmem:[#allocation8 + $0x584] sm:$0xf]
        %v3385 = vld [vmem:[#allocation8 + $0x588] sm:$0xff]
        %v3386 = vld [vmem:[#allocation8 + $0x590] sm:$0xf]
        %v3387 = vld [vmem:[#allocation8 + $0x594] sm:$0xff]
        %v3388 = vld [vmem:[#allocation8 + $0x59c] sm:$0xf]
        %v3389 = vld [vmem:[#allocation8 + $0x5a0] sm:$0xff]
        %v3390 = vld [vmem:[#allocation8 + $0x5a8] sm:$0xf]
        %v3391 = vld [vmem:[#allocation8 + $0x5ac] sm:$0xff]
        %v3392 = vld [vmem:[#allocation8 + $0x5b4] sm:$0xf]
        %v3393 = vld [vmem:[#allocation8 + $0x5b8] sm:$0xff]
        %v3394 = vld [vmem:[#allocation8 + $0x5c0] sm:$0xf]
        %v3395 = vld [vmem:[#allocation8 + $0x5c4] sm:$0xff]
        %v3396 = vld [vmem:[#allocation8 + $0x5cc] sm:$0xf]
        %v3397 = vld [vmem:[#allocation8 + $0x5d0] sm:$0xff]
        %v3398 = vld [vmem:[#allocation8 + $0x5d8] sm:$0xf]
        %v3399 = vld [vmem:[#allocation8 + $0x5dc] sm:$0xff]
        %v3400 = vld [vmem:[#allocation8 + $0x5e4] sm:$0xf]
        %v3401 = vld [vmem:[#allocation8 + $0x5e8] sm:$0xff]
        %v3402 = vld [vmem:[#allocation8 + $0x5f0] sm:$0xf]
        %v3403 = vld [vmem:[#allocation8 + $0x5f4] sm:$0xff]
        %v3404 = vld [vmem:[#allocation8 + $0x5fc] sm:$0xf]
        %v3405 = vld [vmem:[#allocation8 + $0x600] sm:$0xff]
        %v3406 = vld [vmem:[#allocation8 + $0x608] sm:$0xf]
        %v3407 = vld [vmem:[#allocation8 + $0x60c] sm:$0xff]
        %v3408 = vld [vmem:[#allocation8 + $0x614] sm:$0xf]
        %v3409 = vld [vmem:[#allocation8 + $0x618] sm:$0xff]
        %v3410 = vld [vmem:[#allocation8 + $0x620] sm:$0xf]
        %v3411 = vld [vmem:[#allocation8 + $0x624] sm:$0xff]
        %v3412 = vld [vmem:[#allocation8 + $0x62c] sm:$0xf]
        %v3413 = vld [vmem:[#allocation8 + $0x630] sm:$0xff]
        %v3414 = vld [vmem:[#allocation8 + $0x638] sm:$0xf]
        %v3415 = vld [vmem:[#allocation8 + $0x63c] sm:$0xff]
        %v3416 = vld [vmem:[#allocation8 + $0x644] sm:$0xf]
        %v3417 = vld [vmem:[#allocation8 + $0x648] sm:$0xff]
        %v3418 = vld [vmem:[#allocation8 + $0x650] sm:$0xf]
        %v3419 = vld [vmem:[#allocation8 + $0x654] sm:$0xff]
        %v3420 = vld [vmem:[#allocation8 + $0x65c] sm:$0xf]
        %v3421 = vld [vmem:[#allocation8 + $0x660] sm:$0xff]
        %v3422 = vld [vmem:[#allocation8 + $0x668] sm:$0xf]
        %v3423 = vld [vmem:[#allocation8 + $0x66c] sm:$0xff]
        %v3424 = vld [vmem:[#allocation8 + $0x674] sm:$0xf]
        %v3425 = vld [vmem:[#allocation8 + $0x678] sm:$0xff]
        %v3426 = vld [vmem:[#allocation8 + $0x680] sm:$0xf]
        %v3427 = vld [vmem:[#allocation8 + $0x684] sm:$0xff]
        %v3428 = vld [vmem:[#allocation8 + $0x68c] sm:$0xf]
        %v3429 = vld [vmem:[#allocation8 + $0x690] sm:$0xff]
        %v3430 = vld [vmem:[#allocation8 + $0x698] sm:$0xf]
        %v3431 = vld [vmem:[#allocation8 + $0x69c] sm:$0xff]
        %v3432 = vld [vmem:[#allocation8 + $0x6a4] sm:$0xf]
        %v3433 = vld [vmem:[#allocation8 + $0x6a8] sm:$0xff]
        %v3434 = vld [vmem:[#allocation8 + $0x6b0] sm:$0xf]
        %v3435 = vld [vmem:[#allocation8 + $0x6b4] sm:$0xff]
        %v3436 = vld [vmem:[#allocation8 + $0x6bc] sm:$0xf]
        %v3437 = vld [vmem:[#allocation8 + $0x6c0] sm:$0xff]
        %v3438 = vld [vmem:[#allocation8 + $0x6c8] sm:$0xf]
        %v3439 = vld [vmem:[#allocation8 + $0x6cc] sm:$0xff]
        %v3440 = vld [vmem:[#allocation8 + $0x6d4] sm:$0xf]
        %v3441 = vld [vmem:[#allocation8 + $0x6d8] sm:$0xff]
        %v3442 = vld [vmem:[#allocation8 + $0x6e0] sm:$0xf]
        %v3443 = vld [vmem:[#allocation8 + $0x6e4] sm:$0xff]
        %v3444 = vld [vmem:[#allocation8 + $0x6ec] sm:$0xf]
        %v3445 = vld [vmem:[#allocation8 + $0x6f0] sm:$0xff]
        %v3446 = vld [vmem:[#allocation8 + $0x6f8] sm:$0xf]
        %v3447 = vld [vmem:[#allocation8 + $0x6fc] sm:$0xff]
        %v3448 = vld [vmem:[#allocation8 + $0x704] sm:$0xf]
        %v3449 = vld [vmem:[#allocation8 + $0x708] sm:$0xff]
        %v3450 = vld [vmem:[#allocation8 + $0x710] sm:$0xf]
        %v3451 = vld [vmem:[#allocation8 + $0x714] sm:$0xff]
        %v3452 = vld [vmem:[#allocation8 + $0x71c] sm:$0xf]
        %v3453 = vld [vmem:[#allocation8 + $0x720] sm:$0xff]
        %v3454 = vld [vmem:[#allocation8 + $0x728] sm:$0xf]
        %v3455 = vld [vmem:[#allocation8 + $0x72c] sm:$0xff]
        %v3456 = vld [vmem:[#allocation8 + $0x734] sm:$0xf]
        %v3457 = vld [vmem:[#allocation8 + $0x738] sm:$0xff]
        %v3458 = vld [vmem:[#allocation8 + $0x740] sm:$0xf]
        %v3459 = vld [vmem:[#allocation8 + $0x744] sm:$0xff]
        %v3460 = vld [vmem:[#allocation8 + $0x74c] sm:$0xf]
        %v3461 = vld [vmem:[#allocation8 + $0x750] sm:$0xff]
        %v3462 = vld [vmem:[#allocation8 + $0x758] sm:$0xf]
        %v3463 = vld [vmem:[#allocation8 + $0x75c] sm:$0xff]
        %v3464 = vld [vmem:[#allocation8 + $0x764] sm:$0xf]
        %v3465 = vld [vmem:[#allocation8 + $0x768] sm:$0xff]
        %v3466 = vld [vmem:[#allocation8 + $0x770] sm:$0xf]
        %v3467 = vld [vmem:[#allocation8 + $0x774] sm:$0xff]
        %v3468 = vld [vmem:[#allocation8 + $0x77c] sm:$0xf]
        %v3469 = vld [vmem:[#allocation8 + $0x780] sm:$0xff]
        %v3470 = vld [vmem:[#allocation8 + $0x788] sm:$0xf]
        %v3471 = vld [vmem:[#allocation8 + $0x78c] sm:$0xff]
        %v3472 = vld [vmem:[#allocation8 + $0x794] sm:$0xf]
        %v3473 = vld [vmem:[#allocation8 + $0x798] sm:$0xff]
        %v3474 = vld [vmem:[#allocation8 + $0x7a0] sm:$0xf]
        %v3475 = vld [vmem:[#allocation8 + $0x7a4] sm:$0xff]
        %v3476 = vld [vmem:[#allocation8 + $0x7ac] sm:$0xf]
        %v3477 = vld [vmem:[#allocation8 + $0x7b0] sm:$0xff]
        %v3478 = vld [vmem:[#allocation8 + $0x7b8] sm:$0xf]
        %v3479 = vld [vmem:[#allocation8 + $0x7bc] sm:$0xff]
        %v3480 = vld [vmem:[#allocation8 + $0x7c4] sm:$0xf]
        %v3481 = vld [vmem:[#allocation8 + $0x7c8] sm:$0xff]
        %v3482 = vld [vmem:[#allocation8 + $0x7d0] sm:$0xf]
        %v3483 = vld [vmem:[#allocation8 + $0x7d4] sm:$0xff]
        %v3484 = vld [vmem:[#allocation8 + $0x7dc] sm:$0xf]
        %v3485 = vld [vmem:[#allocation8 + $0x7e0] sm:$0xff]
        %v3486 = vld [vmem:[#allocation8 + $0x7e8] sm:$0xf]
        %v3487 = vld [vmem:[#allocation8 + $0x7ec] sm:$0xff]
        %v3488 = vld [vmem:[#allocation8 + $0x7f4] sm:$0xf]
        %v3489 = vld [vmem:[#allocation8 + $0x7f8] sm:$0xff]
        %v3490 = vld [vmem:[#allocation8 + $0x800] sm:$0xf]
        %v3491 = vld [vmem:[#allocation8 + $0x804] sm:$0xff]
        %v3492 = vld [vmem:[#allocation8 + $0x80c] sm:$0xf]
        %v3493 = vld [vmem:[#allocation8 + $0x810] sm:$0xff]
        %v3494 = vld [vmem:[#allocation8 + $0x818] sm:$0xf]
        %v3495 = vld [vmem:[#allocation8 + $0x81c] sm:$0xff]
        %v3496 = vld [vmem:[#allocation8 + $0x824] sm:$0xf]
        %v3497 = vld [vmem:[#allocation8 + $0x828] sm:$0xff]
        %v3498 = vld [vmem:[#allocation8 + $0x830] sm:$0xf]
        %v3499 = vld [vmem:[#allocation8 + $0x834] sm:$0xff]
        %v3500 = vld [vmem:[#allocation8 + $0x83c] sm:$0xf]
        %v3501 = vld [vmem:[#allocation8 + $0x840] sm:$0xff]
        %v3502 = vld [vmem:[#allocation8 + $0x848] sm:$0xf]
        %v3503 = vld [vmem:[#allocation8 + $0x84c] sm:$0xff]
        %v3504 = vld [vmem:[#allocation8 + $0x854] sm:$0xf]
        %v3505 = vld [vmem:[#allocation8 + $0x858] sm:$0xff]
        %v3506 = vld [vmem:[#allocation8 + $0x860] sm:$0xf]
        %v3507 = vld [vmem:[#allocation8 + $0x864] sm:$0xff]
        %v3508 = vld [vmem:[#allocation8 + $0x86c] sm:$0xf]
        %v3509 = vld [vmem:[#allocation8 + $0x870] sm:$0xff]
        %v3510 = vld [vmem:[#allocation8 + $0x878] sm:$0xf]
        %v3511 = vld [vmem:[#allocation8 + $0x87c] sm:$0xff]
        %v3512 = vld [vmem:[#allocation8 + $0x884] sm:$0xf]
        %v3513 = vld [vmem:[#allocation8 + $0x888] sm:$0xff]
        %v3514 = vld [vmem:[#allocation8 + $0x890] sm:$0xf]
        %v3515 = vld [vmem:[#allocation8 + $0x894] sm:$0xff]
        %v3516 = vld [vmem:[#allocation8 + $0x89c] sm:$0xf]
        %v3517 = vld [vmem:[#allocation8 + $0x8a0] sm:$0xff]
        %v3518 = vld [vmem:[#allocation8 + $0x8a8] sm:$0xf]
        %v3519 = vld [vmem:[#allocation8 + $0x8ac] sm:$0xff]
        %v3520 = vld [vmem:[#allocation8 + $0x8b4] sm:$0xf]
        %v3521 = vld [vmem:[#allocation8 + $0x8b8] sm:$0xff]
        %v3522 = vld [vmem:[#allocation8 + $0x8c0] sm:$0xf]
        %v3523 = vld [vmem:[#allocation8 + $0x8c4] sm:$0xff]
        %v3524 = vld [vmem:[#allocation8 + $0x8cc] sm:$0xf]
        %v3525 = vld [vmem:[#allocation8 + $0x8d0] sm:$0xff]
        %v3526 = vld [vmem:[#allocation8 + $0x8d8] sm:$0xf]
        %v3527 = vld [vmem:[#allocation8 + $0x8dc] sm:$0xff]
        %v3528 = vld [vmem:[#allocation8 + $0x8e4] sm:$0xf]
        %v3529 = vld [vmem:[#allocation8 + $0x8e8] sm:$0xff]
        %v3530 = vld [vmem:[#allocation8 + $0x8f0] sm:$0xf]
        %v3531 = vld [vmem:[#allocation8 + $0x8f4] sm:$0xff]
        %v3532 = vld [vmem:[#allocation8 + $0x8fc] sm:$0xf]
        %v3533 = vld [vmem:[#allocation10] sm:$0x7]
        %v3535 = vlaneseq
        %v3536 = vshrl.u32 %v3535, 7
        %v3537 = vsub.s32 0, %v3536
        %v3538 = vrot.slane %v3533, %v3537
        %v3539 = vlaneseq
        %v3540 = vshrl.u32 %v3539, 7
        %v3541 = vsub.s32 1, %v3540
        %v3542 = vrot.slane %v3533, %v3541
        %v3543 = vlaneseq
        %v3544 = vshrl.u32 %v3543, 7
        %v3545 = vsub.s32 2, %v3544
        %v3546 = vrot.slane %v3533, %v3545
        %v3934 = vunpack.c.l.b16 %v3149
        %v3935 = vunpack.c.h.b16 %v3149
        %v3936 = vunpack.c.l.b16 %v3150
        %v3937 = vunpack.c.l.b16 %v3151
        %v3938 = vunpack.c.h.b16 %v3151
        %v3939 = vunpack.c.l.b16 %v3152
        %v3940 = vunpack.c.l.b16 %v3153
        %v3941 = vunpack.c.h.b16 %v3153
        %v3942 = vunpack.c.l.b16 %v3154
        %v3943 = vunpack.c.l.b16 %v3155
        %v3944 = vunpack.c.h.b16 %v3155
        %v3945 = vunpack.c.l.b16 %v3156
        %v3946 = vunpack.c.l.b16 %v3157
        %v3947 = vunpack.c.h.b16 %v3157
        %v3948 = vunpack.c.l.b16 %v3158
        %v3949 = vunpack.c.l.b16 %v3159
        %v3950 = vunpack.c.h.b16 %v3159
        %v3951 = vunpack.c.l.b16 %v3160
        %v3952 = vunpack.c.l.b16 %v3161
        %v3953 = vunpack.c.h.b16 %v3161
        %v3954 = vunpack.c.l.b16 %v3162
        %v3955 = vunpack.c.l.b16 %v3163
        %v3956 = vunpack.c.h.b16 %v3163
        %v3957 = vunpack.c.l.b16 %v3164
        %v3958 = vunpack.c.l.b16 %v3165
        %v3959 = vunpack.c.h.b16 %v3165
        %v3960 = vunpack.c.l.b16 %v3166
        %v3961 = vunpack.c.l.b16 %v3167
        %v3962 = vunpack.c.h.b16 %v3167
        %v3963 = vunpack.c.l.b16 %v3168
        %v3964 = vunpack.c.l.b16 %v3169
        %v3965 = vunpack.c.h.b16 %v3169
        %v3966 = vunpack.c.l.b16 %v3170
        %v3967 = vunpack.c.l.b16 %v3171
        %v3968 = vunpack.c.h.b16 %v3171
        %v3969 = vunpack.c.l.b16 %v3172
        %v3970 = vunpack.c.l.b16 %v3173
        %v3971 = vunpack.c.h.b16 %v3173
        %v3972 = vunpack.c.l.b16 %v3174
        %v3973 = vunpack.c.l.b16 %v3175
        %v3974 = vunpack.c.h.b16 %v3175
        %v3975 = vunpack.c.l.b16 %v3176
        %v3976 = vunpack.c.l.b16 %v3177
        %v3977 = vunpack.c.h.b16 %v3177
        %v3978 = vunpack.c.l.b16 %v3178
        %v3979 = vunpack.c.l.b16 %v3179
        %v3980 = vunpack.c.h.b16 %v3179
        %v3981 = vunpack.c.l.b16 %v3180
        %v3982 = vunpack.c.l.b16 %v3181
        %v3983 = vunpack.c.h.b16 %v3181
        %v3984 = vunpack.c.l.b16 %v3182
        %v3985 = vunpack.c.l.b16 %v3183
        %v3986 = vunpack.c.h.b16 %v3183
        %v3987 = vunpack.c.l.b16 %v3184
        %v3988 = vunpack.c.l.b16 %v3185
        %v3989 = vunpack.c.h.b16 %v3185
        %v3990 = vunpack.c.l.b16 %v3186
        %v3991 = vunpack.c.l.b16 %v3187
        %v3992 = vunpack.c.h.b16 %v3187
        %v3993 = vunpack.c.l.b16 %v3188
        %v3994 = vunpack.c.l.b16 %v3189
        %v3995 = vunpack.c.h.b16 %v3189
        %v3996 = vunpack.c.l.b16 %v3190
        %v3997 = vunpack.c.l.b16 %v3191
        %v3998 = vunpack.c.h.b16 %v3191
        %v3999 = vunpack.c.l.b16 %v3192
        %v4000 = vunpack.c.l.b16 %v3193
        %v4001 = vunpack.c.h.b16 %v3193
        %v4002 = vunpack.c.l.b16 %v3194
        %v4003 = vunpack.c.l.b16 %v3195
        %v4004 = vunpack.c.h.b16 %v3195
        %v4005 = vunpack.c.l.b16 %v3196
        %v4006 = vunpack.c.l.b16 %v3197
        %v4007 = vunpack.c.h.b16 %v3197
        %v4008 = vunpack.c.l.b16 %v3198
        %v4009 = vunpack.c.l.b16 %v3199
        %v4010 = vunpack.c.h.b16 %v3199
        %v4011 = vunpack.c.l.b16 %v3200
        %v4012 = vunpack.c.l.b16 %v3201
        %v4013 = vunpack.c.h.b16 %v3201
        %v4014 = vunpack.c.l.b16 %v3202
        %v4015 = vunpack.c.l.b16 %v3203
        %v4016 = vunpack.c.h.b16 %v3203
        %v4017 = vunpack.c.l.b16 %v3204
        %v4018 = vunpack.c.l.b16 %v3205
        %v4019 = vunpack.c.h.b16 %v3205
        %v4020 = vunpack.c.l.b16 %v3206
        %v4021 = vunpack.c.l.b16 %v3207
        %v4022 = vunpack.c.h.b16 %v3207
        %v4023 = vunpack.c.l.b16 %v3208
        %v4024 = vunpack.c.l.b16 %v3209
        %v4025 = vunpack.c.h.b16 %v3209
        %v4026 = vunpack.c.l.b16 %v3210
        %v4027 = vunpack.c.l.b16 %v3211
        %v4028 = vunpack.c.h.b16 %v3211
        %v4029 = vunpack.c.l.b16 %v3212
        %v4030 = vunpack.c.l.b16 %v3213
        %v4031 = vunpack.c.h.b16 %v3213
        %v4032 = vunpack.c.l.b16 %v3214
        %v4033 = vunpack.c.l.b16 %v3215
        %v4034 = vunpack.c.h.b16 %v3215
        %v4035 = vunpack.c.l.b16 %v3216
        %v4036 = vunpack.c.l.b16 %v3217
        %v4037 = vunpack.c.h.b16 %v3217
        %v4038 = vunpack.c.l.b16 %v3218
        %v4039 = vunpack.c.l.b16 %v3219
        %v4040 = vunpack.c.h.b16 %v3219
        %v4041 = vunpack.c.l.b16 %v3220
        %v4042 = vunpack.c.l.b16 %v3221
        %v4043 = vunpack.c.h.b16 %v3221
        %v4044 = vunpack.c.l.b16 %v3222
        %v4045 = vunpack.c.l.b16 %v3223
        %v4046 = vunpack.c.h.b16 %v3223
        %v4047 = vunpack.c.l.b16 %v3224
        %v4048 = vunpack.c.l.b16 %v3225
        %v4049 = vunpack.c.h.b16 %v3225
        %v4050 = vunpack.c.l.b16 %v3226
        %v4051 = vunpack.c.l.b16 %v3227
        %v4052 = vunpack.c.h.b16 %v3227
        %v4053 = vunpack.c.l.b16 %v3228
        %v4054 = vunpack.c.l.b16 %v3229
        %v4055 = vunpack.c.h.b16 %v3229
        %v4056 = vunpack.c.l.b16 %v3230
        %v4057 = vunpack.c.l.b16 %v3231
        %v4058 = vunpack.c.h.b16 %v3231
        %v4059 = vunpack.c.l.b16 %v3232
        %v4060 = vunpack.c.l.b16 %v3233
        %v4061 = vunpack.c.h.b16 %v3233
        %v4062 = vunpack.c.l.b16 %v3234
        %v4063 = vunpack.c.l.b16 %v3235
        %v4064 = vunpack.c.h.b16 %v3235
        %v4065 = vunpack.c.l.b16 %v3236
        %v4066 = vunpack.c.l.b16 %v3237
        %v4067 = vunpack.c.h.b16 %v3237
        %v4068 = vunpack.c.l.b16 %v3238
        %v4069 = vunpack.c.l.b16 %v3239
        %v4070 = vunpack.c.h.b16 %v3239
        %v4071 = vunpack.c.l.b16 %v3240
        %v4072 = vunpack.c.l.b16 %v3241
        %v4073 = vunpack.c.h.b16 %v3241
        %v4074 = vunpack.c.l.b16 %v3242
        %v4075 = vunpack.c.l.b16 %v3243
        %v4076 = vunpack.c.h.b16 %v3243
        %v4077 = vunpack.c.l.b16 %v3244
        %v4078 = vunpack.c.l.b16 %v3245
        %v4079 = vunpack.c.h.b16 %v3245
        %v4080 = vunpack.c.l.b16 %v3246
        %v4081 = vunpack.c.l.b16 %v3247
        %v4082 = vunpack.c.h.b16 %v3247
        %v4083 = vunpack.c.l.b16 %v3248
        %v4084 = vunpack.c.l.b16 %v3249
        %v4085 = vunpack.c.h.b16 %v3249
        %v4086 = vunpack.c.l.b16 %v3250
        %v4087 = vunpack.c.l.b16 %v3251
        %v4088 = vunpack.c.h.b16 %v3251
        %v4089 = vunpack.c.l.b16 %v3252
        %v4090 = vunpack.c.l.b16 %v3253
        %v4091 = vunpack.c.h.b16 %v3253
        %v4092 = vunpack.c.l.b16 %v3254
        %v4093 = vunpack.c.l.b16 %v3255
        %v4094 = vunpack.c.h.b16 %v3255
        %v4095 = vunpack.c.l.b16 %v3256
        %v4096 = vunpack.c.l.b16 %v3257
        %v4097 = vunpack.c.h.b16 %v3257
        %v4098 = vunpack.c.l.b16 %v3258
        %v4099 = vunpack.c.l.b16 %v3259
        %v4100 = vunpack.c.h.b16 %v3259
        %v4101 = vunpack.c.l.b16 %v3260
        %v4102 = vunpack.c.l.b16 %v3261
        %v4103 = vunpack.c.h.b16 %v3261
        %v4104 = vunpack.c.l.b16 %v3262
        %v4105 = vunpack.c.l.b16 %v3263
        %v4106 = vunpack.c.h.b16 %v3263
        %v4107 = vunpack.c.l.b16 %v3264
        %v4108 = vunpack.c.l.b16 %v3265
        %v4109 = vunpack.c.h.b16 %v3265
        %v4110 = vunpack.c.l.b16 %v3266
        %v4111 = vunpack.c.l.b16 %v3267
        %v4112 = vunpack.c.h.b16 %v3267
        %v4113 = vunpack.c.l.b16 %v3268
        %v4114 = vunpack.c.l.b16 %v3269
        %v4115 = vunpack.c.h.b16 %v3269
        %v4116 = vunpack.c.l.b16 %v3270
        %v4117 = vunpack.c.l.b16 %v3271
        %v4118 = vunpack.c.h.b16 %v3271
        %v4119 = vunpack.c.l.b16 %v3272
        %v4120 = vunpack.c.l.b16 %v3273
        %v4121 = vunpack.c.h.b16 %v3273
        %v4122 = vunpack.c.l.b16 %v3274
        %v4123 = vunpack.c.l.b16 %v3275
        %v4124 = vunpack.c.h.b16 %v3275
        %v4125 = vunpack.c.l.b16 %v3276
        %v4126 = vunpack.c.l.b16 %v3277
        %v4127 = vunpack.c.h.b16 %v3277
        %v4128 = vunpack.c.l.b16 %v3278
        %v4129 = vunpack.c.l.b16 %v3279
        %v4130 = vunpack.c.h.b16 %v3279
        %v4131 = vunpack.c.l.b16 %v3280
        %v4132 = vunpack.c.l.b16 %v3281
        %v4133 = vunpack.c.h.b16 %v3281
        %v4134 = vunpack.c.l.b16 %v3282
        %v4135 = vunpack.c.l.b16 %v3283
        %v4136 = vunpack.c.h.b16 %v3283
        %v4137 = vunpack.c.l.b16 %v3284
        %v4138 = vunpack.c.l.b16 %v3285
        %v4139 = vunpack.c.h.b16 %v3285
        %v4140 = vunpack.c.l.b16 %v3286
        %v4141 = vunpack.c.l.b16 %v3287
        %v4142 = vunpack.c.h.b16 %v3287
        %v4143 = vunpack.c.l.b16 %v3288
        %v4144 = vunpack.c.l.b16 %v3289
        %v4145 = vunpack.c.h.b16 %v3289
        %v4146 = vunpack.c.l.b16 %v3290
        %v4147 = vunpack.c.l.b16 %v3291
        %v4148 = vunpack.c.h.b16 %v3291
        %v4149 = vunpack.c.l.b16 %v3292
        %v4150 = vunpack.c.l.b16 %v3293
        %v4151 = vunpack.c.h.b16 %v3293
        %v4152 = vunpack.c.l.b16 %v3294
        %v4153 = vunpack.c.l.b16 %v3295
        %v4154 = vunpack.c.h.b16 %v3295
        %v4155 = vunpack.c.l.b16 %v3296
        %v4156 = vunpack.c.l.b16 %v3297
        %v4157 = vunpack.c.h.b16 %v3297
        %v4158 = vunpack.c.l.b16 %v3298
        %v4159 = vunpack.c.l.b16 %v3299
        %v4160 = vunpack.c.h.b16 %v3299
        %v4161 = vunpack.c.l.b16 %v3300
        %v4162 = vunpack.c.l.b16 %v3301
        %v4163 = vunpack.c.h.b16 %v3301
        %v4164 = vunpack.c.l.b16 %v3302
        %v4165 = vunpack.c.l.b16 %v3303
        %v4166 = vunpack.c.h.b16 %v3303
        %v4167 = vunpack.c.l.b16 %v3304
        %v4168 = vunpack.c.l.b16 %v3305
        %v4169 = vunpack.c.h.b16 %v3305
        %v4170 = vunpack.c.l.b16 %v3306
        %v4171 = vunpack.c.l.b16 %v3307
        %v4172 = vunpack.c.h.b16 %v3307
        %v4173 = vunpack.c.l.b16 %v3308
        %v4174 = vunpack.c.l.b16 %v3309
        %v4175 = vunpack.c.h.b16 %v3309
        %v4176 = vunpack.c.l.b16 %v3310
        %v4177 = vunpack.c.l.b16 %v3311
        %v4178 = vunpack.c.h.b16 %v3311
        %v4179 = vunpack.c.l.b16 %v3312
        %v4180 = vunpack.c.l.b16 %v3313
        %v4181 = vunpack.c.h.b16 %v3313
        %v4182 = vunpack.c.l.b16 %v3314
        %v4183 = vunpack.c.l.b16 %v3315
        %v4184 = vunpack.c.h.b16 %v3315
        %v4185 = vunpack.c.l.b16 %v3316
        %v4186 = vunpack.c.l.b16 %v3317
        %v4187 = vunpack.c.h.b16 %v3317
        %v4188 = vunpack.c.l.b16 %v3318
        %v4189 = vunpack.c.l.b16 %v3319
        %v4190 = vunpack.c.h.b16 %v3319
        %v4191 = vunpack.c.l.b16 %v3320
        %v4192 = vunpack.c.l.b16 %v3321
        %v4193 = vunpack.c.h.b16 %v3321
        %v4194 = vunpack.c.l.b16 %v3322
        %v4195 = vunpack.c.l.b16 %v3323
        %v4196 = vunpack.c.h.b16 %v3323
        %v4197 = vunpack.c.l.b16 %v3324
        %v4198 = vunpack.c.l.b16 %v3325
        %v4199 = vunpack.c.h.b16 %v3325
        %v4200 = vunpack.c.l.b16 %v3326
        %v4201 = vunpack.c.l.b16 %v3327
        %v4202 = vunpack.c.h.b16 %v3327
        %v4203 = vunpack.c.l.b16 %v3328
        %v4204 = vunpack.c.l.b16 %v3329
        %v4205 = vunpack.c.h.b16 %v3329
        %v4206 = vunpack.c.l.b16 %v3330
        %v4207 = vunpack.c.l.b16 %v3331
        %v4208 = vunpack.c.h.b16 %v3331
        %v4209 = vunpack.c.l.b16 %v3332
        %v4210 = vunpack.c.l.b16 %v3333
        %v4211 = vunpack.c.h.b16 %v3333
        %v4212 = vunpack.c.l.b16 %v3334
        %v4213 = vunpack.c.l.b16 %v3335
        %v4214 = vunpack.c.h.b16 %v3335
        %v4215 = vunpack.c.l.b16 %v3336
        %v4216 = vunpack.c.l.b16 %v3337
        %v4217 = vunpack.c.h.b16 %v3337
        %v4218 = vunpack.c.l.b16 %v3338
        %v4219 = vunpack.c.l.b16 %v3339
        %v4220 = vunpack.c.h.b16 %v3339
        %v4221 = vunpack.c.l.b16 %v3340
        %v4222 = vunpack.c.l.b16 %v3341
        %v4223 = vunpack.c.h.b16 %v3341
        %v4224 = vunpack.c.l.b16 %v3342
        %v4225 = vunpack.c.l.b16 %v3343
        %v4226 = vunpack.c.h.b16 %v3343
        %v4227 = vunpack.c.l.b16 %v3344
        %v4228 = vunpack.c.l.b16 %v3345
        %v4229 = vunpack.c.h.b16 %v3345
        %v4230 = vunpack.c.l.b16 %v3346
        %v4231 = vunpack.c.l.b16 %v3347
        %v4232 = vunpack.c.h.b16 %v3347
        %v4233 = vunpack.c.l.b16 %v3348
        %v4234 = vunpack.c.l.b16 %v3349
        %v4235 = vunpack.c.h.b16 %v3349
        %v4236 = vunpack.c.l.b16 %v3350
        %v4237 = vunpack.c.l.b16 %v3351
        %v4238 = vunpack.c.h.b16 %v3351
        %v4239 = vunpack.c.l.b16 %v3352
        %v4240 = vunpack.c.l.b16 %v3353
        %v4241 = vunpack.c.h.b16 %v3353
        %v4242 = vunpack.c.l.b16 %v3354
        %v4243 = vunpack.c.l.b16 %v3355
        %v4244 = vunpack.c.h.b16 %v3355
        %v4245 = vunpack.c.l.b16 %v3356
        %v4246 = vunpack.c.l.b16 %v3357
        %v4247 = vunpack.c.h.b16 %v3357
        %v4248 = vunpack.c.l.b16 %v3358
        %v4249 = vunpack.c.l.b16 %v3359
        %v4250 = vunpack.c.h.b16 %v3359
        %v4251 = vunpack.c.l.b16 %v3360
        %v4252 = vunpack.c.l.b16 %v3361
        %v4253 = vunpack.c.h.b16 %v3361
        %v4254 = vunpack.c.l.b16 %v3362
        %v4255 = vunpack.c.l.b16 %v3363
        %v4256 = vunpack.c.h.b16 %v3363
        %v4257 = vunpack.c.l.b16 %v3364
        %v4258 = vunpack.c.l.b16 %v3365
        %v4259 = vunpack.c.h.b16 %v3365
        %v4260 = vunpack.c.l.b16 %v3366
        %v4261 = vunpack.c.l.b16 %v3367
        %v4262 = vunpack.c.h.b16 %v3367
        %v4263 = vunpack.c.l.b16 %v3368
        %v4264 = vunpack.c.l.b16 %v3369
        %v4265 = vunpack.c.h.b16 %v3369
        %v4266 = vunpack.c.l.b16 %v3370
        %v4267 = vunpack.c.l.b16 %v3371
        %v4268 = vunpack.c.h.b16 %v3371
        %v4269 = vunpack.c.l.b16 %v3372
        %v4270 = vunpack.c.l.b16 %v3373
        %v4271 = vunpack.c.h.b16 %v3373
        %v4272 = vunpack.c.l.b16 %v3374
        %v4273 = vunpack.c.l.b16 %v3375
        %v4274 = vunpack.c.h.b16 %v3375
        %v4275 = vunpack.c.l.b16 %v3376
        %v4276 = vunpack.c.l.b16 %v3377
        %v4277 = vunpack.c.h.b16 %v3377
        %v4278 = vunpack.c.l.b16 %v3378
        %v4279 = vunpack.c.l.b16 %v3379
        %v4280 = vunpack.c.h.b16 %v3379
        %v4281 = vunpack.c.l.b16 %v3380
        %v4282 = vunpack.c.l.b16 %v3381
        %v4283 = vunpack.c.h.b16 %v3381
        %v4284 = vunpack.c.l.b16 %v3382
        %v4285 = vunpack.c.l.b16 %v3383
        %v4286 = vunpack.c.h.b16 %v3383
        %v4287 = vunpack.c.l.b16 %v3384
        %v4288 = vunpack.c.l.b16 %v3385
        %v4289 = vunpack.c.h.b16 %v3385
        %v4290 = vunpack.c.l.b16 %v3386
        %v4291 = vunpack.c.l.b16 %v3387
        %v4292 = vunpack.c.h.b16 %v3387
        %v4293 = vunpack.c.l.b16 %v3388
        %v4294 = vunpack.c.l.b16 %v3389
        %v4295 = vunpack.c.h.b16 %v3389
        %v4296 = vunpack.c.l.b16 %v3390
        %v4297 = vunpack.c.l.b16 %v3391
        %v4298 = vunpack.c.h.b16 %v3391
        %v4299 = vunpack.c.l.b16 %v3392
        %v4300 = vunpack.c.l.b16 %v3393
        %v4301 = vunpack.c.h.b16 %v3393
        %v4302 = vunpack.c.l.b16 %v3394
        %v4303 = vunpack.c.l.b16 %v3395
        %v4304 = vunpack.c.h.b16 %v3395
        %v4305 = vunpack.c.l.b16 %v3396
        %v4306 = vunpack.c.l.b16 %v3397
        %v4307 = vunpack.c.h.b16 %v3397
        %v4308 = vunpack.c.l.b16 %v3398
        %v4309 = vunpack.c.l.b16 %v3399
        %v4310 = vunpack.c.h.b16 %v3399
        %v4311 = vunpack.c.l.b16 %v3400
        %v4312 = vunpack.c.l.b16 %v3401
        %v4313 = vunpack.c.h.b16 %v3401
        %v4314 = vunpack.c.l.b16 %v3402
        %v4315 = vunpack.c.l.b16 %v3403
        %v4316 = vunpack.c.h.b16 %v3403
        %v4317 = vunpack.c.l.b16 %v3404
        %v4318 = vunpack.c.l.b16 %v3405
        %v4319 = vunpack.c.h.b16 %v3405
        %v4320 = vunpack.c.l.b16 %v3406
        %v4321 = vunpack.c.l.b16 %v3407
        %v4322 = vunpack.c.h.b16 %v3407
        %v4323 = vunpack.c.l.b16 %v3408
        %v4324 = vunpack.c.l.b16 %v3409
        %v4325 = vunpack.c.h.b16 %v3409
        %v4326 = vunpack.c.l.b16 %v3410
        %v4327 = vunpack.c.l.b16 %v3411
        %v4328 = vunpack.c.h.b16 %v3411
        %v4329 = vunpack.c.l.b16 %v3412
        %v4330 = vunpack.c.l.b16 %v3413
        %v4331 = vunpack.c.h.b16 %v3413
        %v4332 = vunpack.c.l.b16 %v3414
        %v4333 = vunpack.c.l.b16 %v3415
        %v4334 = vunpack.c.h.b16 %v3415
        %v4335 = vunpack.c.l.b16 %v3416
        %v4336 = vunpack.c.l.b16 %v3417
        %v4337 = vunpack.c.h.b16 %v3417
        %v4338 = vunpack.c.l.b16 %v3418
        %v4339 = vunpack.c.l.b16 %v3419
        %v4340 = vunpack.c.h.b16 %v3419
        %v4341 = vunpack.c.l.b16 %v3420
        %v4342 = vunpack.c.l.b16 %v3421
        %v4343 = vunpack.c.h.b16 %v3421
        %v4344 = vunpack.c.l.b16 %v3422
        %v4345 = vunpack.c.l.b16 %v3423
        %v4346 = vunpack.c.h.b16 %v3423
        %v4347 = vunpack.c.l.b16 %v3424
        %v4348 = vunpack.c.l.b16 %v3425
        %v4349 = vunpack.c.h.b16 %v3425
        %v4350 = vunpack.c.l.b16 %v3426
        %v4351 = vunpack.c.l.b16 %v3427
        %v4352 = vunpack.c.h.b16 %v3427
        %v4353 = vunpack.c.l.b16 %v3428
        %v4354 = vunpack.c.l.b16 %v3429
        %v4355 = vunpack.c.h.b16 %v3429
        %v4356 = vunpack.c.l.b16 %v3430
        %v4357 = vunpack.c.l.b16 %v3431
        %v4358 = vunpack.c.h.b16 %v3431
        %v4359 = vunpack.c.l.b16 %v3432
        %v4360 = vunpack.c.l.b16 %v3433
        %v4361 = vunpack.c.h.b16 %v3433
        %v4362 = vunpack.c.l.b16 %v3434
        %v4363 = vunpack.c.l.b16 %v3435
        %v4364 = vunpack.c.h.b16 %v3435
        %v4365 = vunpack.c.l.b16 %v3436
        %v4366 = vunpack.c.l.b16 %v3437
        %v4367 = vunpack.c.h.b16 %v3437
        %v4368 = vunpack.c.l.b16 %v3438
        %v4369 = vunpack.c.l.b16 %v3439
        %v4370 = vunpack.c.h.b16 %v3439
        %v4371 = vunpack.c.l.b16 %v3440
        %v4372 = vunpack.c.l.b16 %v3441
        %v4373 = vunpack.c.h.b16 %v3441
        %v4374 = vunpack.c.l.b16 %v3442
        %v4375 = vunpack.c.l.b16 %v3443
        %v4376 = vunpack.c.h.b16 %v3443
        %v4377 = vunpack.c.l.b16 %v3444
        %v4378 = vunpack.c.l.b16 %v3445
        %v4379 = vunpack.c.h.b16 %v3445
        %v4380 = vunpack.c.l.b16 %v3446
        %v4381 = vunpack.c.l.b16 %v3447
        %v4382 = vunpack.c.h.b16 %v3447
        %v4383 = vunpack.c.l.b16 %v3448
        %v4384 = vunpack.c.l.b16 %v3449
        %v4385 = vunpack.c.h.b16 %v3449
        %v4386 = vunpack.c.l.b16 %v3450
        %v4387 = vunpack.c.l.b16 %v3451
        %v4388 = vunpack.c.h.b16 %v3451
        %v4389 = vunpack.c.l.b16 %v3452
        %v4390 = vunpack.c.l.b16 %v3453
        %v4391 = vunpack.c.h.b16 %v3453
        %v4392 = vunpack.c.l.b16 %v3454
        %v4393 = vunpack.c.l.b16 %v3455
        %v4394 = vunpack.c.h.b16 %v3455
        %v4395 = vunpack.c.l.b16 %v3456
        %v4396 = vunpack.c.l.b16 %v3457
        %v4397 = vunpack.c.h.b16 %v3457
        %v4398 = vunpack.c.l.b16 %v3458
        %v4399 = vunpack.c.l.b16 %v3459
        %v4400 = vunpack.c.h.b16 %v3459
        %v4401 = vunpack.c.l.b16 %v3460
        %v4402 = vunpack.c.l.b16 %v3461
        %v4403 = vunpack.c.h.b16 %v3461
        %v4404 = vunpack.c.l.b16 %v3462
        %v4405 = vunpack.c.l.b16 %v3463
        %v4406 = vunpack.c.h.b16 %v3463
        %v4407 = vunpack.c.l.b16 %v3464
        %v4408 = vunpack.c.l.b16 %v3465
        %v4409 = vunpack.c.h.b16 %v3465
        %v4410 = vunpack.c.l.b16 %v3466
        %v4411 = vunpack.c.l.b16 %v3467
        %v4412 = vunpack.c.h.b16 %v3467
        %v4413 = vunpack.c.l.b16 %v3468
        %v4414 = vunpack.c.l.b16 %v3469
        %v4415 = vunpack.c.h.b16 %v3469
        %v4416 = vunpack.c.l.b16 %v3470
        %v4417 = vunpack.c.l.b16 %v3471
        %v4418 = vunpack.c.h.b16 %v3471
        %v4419 = vunpack.c.l.b16 %v3472
        %v4420 = vunpack.c.l.b16 %v3473
        %v4421 = vunpack.c.h.b16 %v3473
        %v4422 = vunpack.c.l.b16 %v3474
        %v4423 = vunpack.c.l.b16 %v3475
        %v4424 = vunpack.c.h.b16 %v3475
        %v4425 = vunpack.c.l.b16 %v3476
        %v4426 = vunpack.c.l.b16 %v3477
        %v4427 = vunpack.c.h.b16 %v3477
        %v4428 = vunpack.c.l.b16 %v3478
        %v4429 = vunpack.c.l.b16 %v3479
        %v4430 = vunpack.c.h.b16 %v3479
        %v4431 = vunpack.c.l.b16 %v3480
        %v4432 = vunpack.c.l.b16 %v3481
        %v4433 = vunpack.c.h.b16 %v3481
        %v4434 = vunpack.c.l.b16 %v3482
        %v4435 = vunpack.c.l.b16 %v3483
        %v4436 = vunpack.c.h.b16 %v3483
        %v4437 = vunpack.c.l.b16 %v3484
        %v4438 = vunpack.c.l.b16 %v3485
        %v4439 = vunpack.c.h.b16 %v3485
        %v4440 = vunpack.c.l.b16 %v3486
        %v4441 = vunpack.c.l.b16 %v3487
        %v4442 = vunpack.c.h.b16 %v3487
        %v4443 = vunpack.c.l.b16 %v3488
        %v4444 = vunpack.c.l.b16 %v3489
        %v4445 = vunpack.c.h.b16 %v3489
        %v4446 = vunpack.c.l.b16 %v3490
        %v4447 = vunpack.c.l.b16 %v3491
        %v4448 = vunpack.c.h.b16 %v3491
        %v4449 = vunpack.c.l.b16 %v3492
        %v4450 = vunpack.c.l.b16 %v3493
        %v4451 = vunpack.c.h.b16 %v3493
        %v4452 = vunpack.c.l.b16 %v3494
        %v4453 = vunpack.c.l.b16 %v3495
        %v4454 = vunpack.c.h.b16 %v3495
        %v4455 = vunpack.c.l.b16 %v3496
        %v4456 = vunpack.c.l.b16 %v3497
        %v4457 = vunpack.c.h.b16 %v3497
        %v4458 = vunpack.c.l.b16 %v3498
        %v4459 = vunpack.c.l.b16 %v3499
        %v4460 = vunpack.c.h.b16 %v3499
        %v4461 = vunpack.c.l.b16 %v3500
        %v4462 = vunpack.c.l.b16 %v3501
        %v4463 = vunpack.c.h.b16 %v3501
        %v4464 = vunpack.c.l.b16 %v3502
        %v4465 = vunpack.c.l.b16 %v3503
        %v4466 = vunpack.c.h.b16 %v3503
        %v4467 = vunpack.c.l.b16 %v3504
        %v4468 = vunpack.c.l.b16 %v3505
        %v4469 = vunpack.c.h.b16 %v3505
        %v4470 = vunpack.c.l.b16 %v3506
        %v4471 = vunpack.c.l.b16 %v3507
        %v4472 = vunpack.c.h.b16 %v3507
        %v4473 = vunpack.c.l.b16 %v3508
        %v4474 = vunpack.c.l.b16 %v3509
        %v4475 = vunpack.c.h.b16 %v3509
        %v4476 = vunpack.c.l.b16 %v3510
        %v4477 = vunpack.c.l.b16 %v3511
        %v4478 = vunpack.c.h.b16 %v3511
        %v4479 = vunpack.c.l.b16 %v3512
        %v4480 = vunpack.c.l.b16 %v3513
        %v4481 = vunpack.c.h.b16 %v3513
        %v4482 = vunpack.c.l.b16 %v3514
        %v4483 = vunpack.c.l.b16 %v3515
        %v4484 = vunpack.c.h.b16 %v3515
        %v4485 = vunpack.c.l.b16 %v3516
        %v4486 = vunpack.c.l.b16 %v3517
        %v4487 = vunpack.c.h.b16 %v3517
        %v4488 = vunpack.c.l.b16 %v3518
        %v4489 = vunpack.c.l.b16 %v3519
        %v4490 = vunpack.c.h.b16 %v3519
        %v4491 = vunpack.c.l.b16 %v3520
        %v4492 = vunpack.c.l.b16 %v3521
        %v4493 = vunpack.c.h.b16 %v3521
        %v4494 = vunpack.c.l.b16 %v3522
        %v4495 = vunpack.c.l.b16 %v3523
        %v4496 = vunpack.c.h.b16 %v3523
        %v4497 = vunpack.c.l.b16 %v3524
        %v4498 = vunpack.c.l.b16 %v3525
        %v4499 = vunpack.c.h.b16 %v3525
        %v4500 = vunpack.c.l.b16 %v3526
        %v4501 = vunpack.c.l.b16 %v3527
        %v4502 = vunpack.c.h.b16 %v3527
        %v4503 = vunpack.c.l.b16 %v3528
        %v4504 = vunpack.c.l.b16 %v3529
        %v4505 = vunpack.c.h.b16 %v3529
        %v4506 = vunpack.c.l.b16 %v3530
        %v4507 = vunpack.c.l.b16 %v3531
        %v4508 = vunpack.c.h.b16 %v3531
        %v4509 = vunpack.c.l.b16 %v3532
        %v4510 = vpack.c.b16 %v3937, %v3934
        %v4511 = vpack.c.b16 %v3938, %v3935
        %v4512 = vpack.c.b16 %v3939, %v3936
        %v4513 = vpack.c.b16 %v3943, %v3940
        %v4514 = vpack.c.b16 %v3944, %v3941
        %v4515 = vpack.c.b16 %v3945, %v3942
        %v4516 = vpack.c.b16 %v3949, %v3946
        %v4517 = vpack.c.b16 %v3950, %v3947
        %v4518 = vpack.c.b16 %v3951, %v3948
        %v4519 = vpack.c.b16 %v3955, %v3952
        %v4520 = vpack.c.b16 %v3956, %v3953
        %v4521 = vpack.c.b16 %v3957, %v3954
        %v4522 = vpack.c.b16 %v3961, %v3958
        %v4523 = vpack.c.b16 %v3962, %v3959
        %v4524 = vpack.c.b16 %v3963, %v3960
        %v4525 = vpack.c.b16 %v3967, %v3964
        %v4526 = vpack.c.b16 %v3968, %v3965
        %v4527 = vpack.c.b16 %v3969, %v3966
        %v4528 = vpack.c.b16 %v3973, %v3970
        %v4529 = vpack.c.b16 %v3974, %v3971
        %v4530 = vpack.c.b16 %v3975, %v3972
        %v4531 = vpack.c.b16 %v3979, %v3976
        %v4532 = vpack.c.b16 %v3980, %v3977
        %v4533 = vpack.c.b16 %v3981, %v3978
        %v4534 = vpack.c.b16 %v3985, %v3982
        %v4535 = vpack.c.b16 %v3986, %v3983
        %v4536 = vpack.c.b16 %v3987, %v3984
        %v4537 = vpack.c.b16 %v3991, %v3988
        %v4538 = vpack.c.b16 %v3992, %v3989
        %v4539 = vpack.c.b16 %v3993, %v3990
        %v4540 = vpack.c.b16 %v3997, %v3994
        %v4541 = vpack.c.b16 %v3998, %v3995
        %v4542 = vpack.c.b16 %v3999, %v3996
        %v4543 = vpack.c.b16 %v4003, %v4000
        %v4544 = vpack.c.b16 %v4004, %v4001
        %v4545 = vpack.c.b16 %v4005, %v4002
        %v4546 = vpack.c.b16 %v4009, %v4006
        %v4547 = vpack.c.b16 %v4010, %v4007
        %v4548 = vpack.c.b16 %v4011, %v4008
        %v4549 = vpack.c.b16 %v4015, %v4012
        %v4550 = vpack.c.b16 %v4016, %v4013
        %v4551 = vpack.c.b16 %v4017, %v4014
        %v4552 = vpack.c.b16 %v4021, %v4018
        %v4553 = vpack.c.b16 %v4022, %v4019
        %v4554 = vpack.c.b16 %v4023, %v4020
        %v4555 = vpack.c.b16 %v4027, %v4024
        %v4556 = vpack.c.b16 %v4028, %v4025
        %v4557 = vpack.c.b16 %v4029, %v4026
        %v4558 = vpack.c.b16 %v4033, %v4030
        %v4559 = vpack.c.b16 %v4034, %v4031
        %v4560 = vpack.c.b16 %v4035, %v4032
        %v4561 = vpack.c.b16 %v4039, %v4036
        %v4562 = vpack.c.b16 %v4040, %v4037
        %v4563 = vpack.c.b16 %v4041, %v4038
        %v4564 = vpack.c.b16 %v4045, %v4042
        %v4565 = vpack.c.b16 %v4046, %v4043
        %v4566 = vpack.c.b16 %v4047, %v4044
        %v4567 = vpack.c.b16 %v4051, %v4048
        %v4568 = vpack.c.b16 %v4052, %v4049
        %v4569 = vpack.c.b16 %v4053, %v4050
        %v4570 = vpack.c.b16 %v4057, %v4054
        %v4571 = vpack.c.b16 %v4058, %v4055
        %v4572 = vpack.c.b16 %v4059, %v4056
        %v4573 = vpack.c.b16 %v4063, %v4060
        %v4574 = vpack.c.b16 %v4064, %v4061
        %v4575 = vpack.c.b16 %v4065, %v4062
        %v4576 = vpack.c.b16 %v4069, %v4066
        %v4577 = vpack.c.b16 %v4070, %v4067
        %v4578 = vpack.c.b16 %v4071, %v4068
        %v4579 = vpack.c.b16 %v4075, %v4072
        %v4580 = vpack.c.b16 %v4076, %v4073
        %v4581 = vpack.c.b16 %v4077, %v4074
        %v4582 = vpack.c.b16 %v4081, %v4078
        %v4583 = vpack.c.b16 %v4082, %v4079
        %v4584 = vpack.c.b16 %v4083, %v4080
        %v4585 = vpack.c.b16 %v4087, %v4084
        %v4586 = vpack.c.b16 %v4088, %v4085
        %v4587 = vpack.c.b16 %v4089, %v4086
        %v4588 = vpack.c.b16 %v4093, %v4090
        %v4589 = vpack.c.b16 %v4094, %v4091
        %v4590 = vpack.c.b16 %v4095, %v4092
        %v4591 = vpack.c.b16 %v4099, %v4096
        %v4592 = vpack.c.b16 %v4100, %v4097
        %v4593 = vpack.c.b16 %v4101, %v4098
        %v4594 = vpack.c.b16 %v4105, %v4102
        %v4595 = vpack.c.b16 %v4106, %v4103
        %v4596 = vpack.c.b16 %v4107, %v4104
        %v4597 = vpack.c.b16 %v4111, %v4108
        %v4598 = vpack.c.b16 %v4112, %v4109
        %v4599 = vpack.c.b16 %v4113, %v4110
        %v4600 = vpack.c.b16 %v4117, %v4114
        %v4601 = vpack.c.b16 %v4118, %v4115
        %v4602 = vpack.c.b16 %v4119, %v4116
        %v4603 = vpack.c.b16 %v4123, %v4120
        %v4604 = vpack.c.b16 %v4124, %v4121
        %v4605 = vpack.c.b16 %v4125, %v4122
        %v4606 = vpack.c.b16 %v4129, %v4126
        %v4607 = vpack.c.b16 %v4130, %v4127
        %v4608 = vpack.c.b16 %v4131, %v4128
        %v4609 = vpack.c.b16 %v4135, %v4132
        %v4610 = vpack.c.b16 %v4136, %v4133
        %v4611 = vpack.c.b16 %v4137, %v4134
        %v4612 = vpack.c.b16 %v4141, %v4138
        %v4613 = vpack.c.b16 %v4142, %v4139
        %v4614 = vpack.c.b16 %v4143, %v4140
        %v4615 = vpack.c.b16 %v4147, %v4144
        %v4616 = vpack.c.b16 %v4148, %v4145
        %v4617 = vpack.c.b16 %v4149, %v4146
        %v4618 = vpack.c.b16 %v4153, %v4150
        %v4619 = vpack.c.b16 %v4154, %v4151
        %v4620 = vpack.c.b16 %v4155, %v4152
        %v4621 = vpack.c.b16 %v4159, %v4156
        %v4622 = vpack.c.b16 %v4160, %v4157
        %v4623 = vpack.c.b16 %v4161, %v4158
        %v4624 = vpack.c.b16 %v4165, %v4162
        %v4625 = vpack.c.b16 %v4166, %v4163
        %v4626 = vpack.c.b16 %v4167, %v4164
        %v4627 = vpack.c.b16 %v4171, %v4168
        %v4628 = vpack.c.b16 %v4172, %v4169
        %v4629 = vpack.c.b16 %v4173, %v4170
        %v4630 = vpack.c.b16 %v4177, %v4174
        %v4631 = vpack.c.b16 %v4178, %v4175
        %v4632 = vpack.c.b16 %v4179, %v4176
        %v4633 = vpack.c.b16 %v4183, %v4180
        %v4634 = vpack.c.b16 %v4184, %v4181
        %v4635 = vpack.c.b16 %v4185, %v4182
        %v4636 = vpack.c.b16 %v4189, %v4186
        %v4637 = vpack.c.b16 %v4190, %v4187
        %v4638 = vpack.c.b16 %v4191, %v4188
        %v4639 = vpack.c.b16 %v4195, %v4192
        %v4640 = vpack.c.b16 %v4196, %v4193
        %v4641 = vpack.c.b16 %v4197, %v4194
        %v4642 = vpack.c.b16 %v4201, %v4198
        %v4643 = vpack.c.b16 %v4202, %v4199
        %v4644 = vpack.c.b16 %v4203, %v4200
        %v4645 = vpack.c.b16 %v4207, %v4204
        %v4646 = vpack.c.b16 %v4208, %v4205
        %v4647 = vpack.c.b16 %v4209, %v4206
        %v4648 = vpack.c.b16 %v4213, %v4210
        %v4649 = vpack.c.b16 %v4214, %v4211
        %v4650 = vpack.c.b16 %v4215, %v4212
        %v4651 = vpack.c.b16 %v4219, %v4216
        %v4652 = vpack.c.b16 %v4220, %v4217
        %v4653 = vpack.c.b16 %v4221, %v4218
        %v4654 = vpack.c.b16 %v4225, %v4222
        %v4655 = vpack.c.b16 %v4226, %v4223
        %v4656 = vpack.c.b16 %v4227, %v4224
        %v4657 = vpack.c.b16 %v4231, %v4228
        %v4658 = vpack.c.b16 %v4232, %v4229
        %v4659 = vpack.c.b16 %v4233, %v4230
        %v4660 = vpack.c.b16 %v4237, %v4234
        %v4661 = vpack.c.b16 %v4238, %v4235
        %v4662 = vpack.c.b16 %v4239, %v4236
        %v4663 = vpack.c.b16 %v4243, %v4240
        %v4664 = vpack.c.b16 %v4244, %v4241
        %v4665 = vpack.c.b16 %v4245, %v4242
        %v4666 = vpack.c.b16 %v4249, %v4246
        %v4667 = vpack.c.b16 %v4250, %v4247
        %v4668 = vpack.c.b16 %v4251, %v4248
        %v4669 = vpack.c.b16 %v4255, %v4252
        %v4670 = vpack.c.b16 %v4256, %v4253
        %v4671 = vpack.c.b16 %v4257, %v4254
        %v4672 = vpack.c.b16 %v4261, %v4258
        %v4673 = vpack.c.b16 %v4262, %v4259
        %v4674 = vpack.c.b16 %v4263, %v4260
        %v4675 = vpack.c.b16 %v4267, %v4264
        %v4676 = vpack.c.b16 %v4268, %v4265
        %v4677 = vpack.c.b16 %v4269, %v4266
        %v4678 = vpack.c.b16 %v4273, %v4270
        %v4679 = vpack.c.b16 %v4274, %v4271
        %v4680 = vpack.c.b16 %v4275, %v4272
        %v4681 = vpack.c.b16 %v4279, %v4276
        %v4682 = vpack.c.b16 %v4280, %v4277
        %v4683 = vpack.c.b16 %v4281, %v4278
        %v4684 = vpack.c.b16 %v4285, %v4282
        %v4685 = vpack.c.b16 %v4286, %v4283
        %v4686 = vpack.c.b16 %v4287, %v4284
        %v4687 = vpack.c.b16 %v4291, %v4288
        %v4688 = vpack.c.b16 %v4292, %v4289
        %v4689 = vpack.c.b16 %v4293, %v4290
        %v4690 = vpack.c.b16 %v4297, %v4294
        %v4691 = vpack.c.b16 %v4298, %v4295
        %v4692 = vpack.c.b16 %v4299, %v4296
        %v4693 = vpack.c.b16 %v4303, %v4300
        %v4694 = vpack.c.b16 %v4304, %v4301
        %v4695 = vpack.c.b16 %v4305, %v4302
        %v4696 = vpack.c.b16 %v4309, %v4306
        %v4697 = vpack.c.b16 %v4310, %v4307
        %v4698 = vpack.c.b16 %v4311, %v4308
        %v4699 = vpack.c.b16 %v4315, %v4312
        %v4700 = vpack.c.b16 %v4316, %v4313
        %v4701 = vpack.c.b16 %v4317, %v4314
        %v4702 = vpack.c.b16 %v4321, %v4318
        %v4703 = vpack.c.b16 %v4322, %v4319
        %v4704 = vpack.c.b16 %v4323, %v4320
        %v4705 = vpack.c.b16 %v4327, %v4324
        %v4706 = vpack.c.b16 %v4328, %v4325
        %v4707 = vpack.c.b16 %v4329, %v4326
        %v4708 = vpack.c.b16 %v4333, %v4330
        %v4709 = vpack.c.b16 %v4334, %v4331
        %v4710 = vpack.c.b16 %v4335, %v4332
        %v4711 = vpack.c.b16 %v4339, %v4336
        %v4712 = vpack.c.b16 %v4340, %v4337
        %v4713 = vpack.c.b16 %v4341, %v4338
        %v4714 = vpack.c.b16 %v4345, %v4342
        %v4715 = vpack.c.b16 %v4346, %v4343
        %v4716 = vpack.c.b16 %v4347, %v4344
        %v4717 = vpack.c.b16 %v4351, %v4348
        %v4718 = vpack.c.b16 %v4352, %v4349
        %v4719 = vpack.c.b16 %v4353, %v4350
        %v4720 = vpack.c.b16 %v4357, %v4354
        %v4721 = vpack.c.b16 %v4358, %v4355
        %v4722 = vpack.c.b16 %v4359, %v4356
        %v4723 = vpack.c.b16 %v4363, %v4360
        %v4724 = vpack.c.b16 %v4364, %v4361
        %v4725 = vpack.c.b16 %v4365, %v4362
        %v4726 = vpack.c.b16 %v4369, %v4366
        %v4727 = vpack.c.b16 %v4370, %v4367
        %v4728 = vpack.c.b16 %v4371, %v4368
        %v4729 = vpack.c.b16 %v4375, %v4372
        %v4730 = vpack.c.b16 %v4376, %v4373
        %v4731 = vpack.c.b16 %v4377, %v4374
        %v4732 = vpack.c.b16 %v4381, %v4378
        %v4733 = vpack.c.b16 %v4382, %v4379
        %v4734 = vpack.c.b16 %v4383, %v4380
        %v4735 = vpack.c.b16 %v4387, %v4384
        %v4736 = vpack.c.b16 %v4388, %v4385
        %v4737 = vpack.c.b16 %v4389, %v4386
        %v4738 = vpack.c.b16 %v4393, %v4390
        %v4739 = vpack.c.b16 %v4394, %v4391
        %v4740 = vpack.c.b16 %v4395, %v4392
        %v4741 = vpack.c.b16 %v4399, %v4396
        %v4742 = vpack.c.b16 %v4400, %v4397
        %v4743 = vpack.c.b16 %v4401, %v4398
        %v4744 = vpack.c.b16 %v4405, %v4402
        %v4745 = vpack.c.b16 %v4406, %v4403
        %v4746 = vpack.c.b16 %v4407, %v4404
        %v4747 = vpack.c.b16 %v4411, %v4408
        %v4748 = vpack.c.b16 %v4412, %v4409
        %v4749 = vpack.c.b16 %v4413, %v4410
        %v4750 = vpack.c.b16 %v4417, %v4414
        %v4751 = vpack.c.b16 %v4418, %v4415
        %v4752 = vpack.c.b16 %v4419, %v4416
        %v4753 = vpack.c.b16 %v4423, %v4420
        %v4754 = vpack.c.b16 %v4424, %v4421
        %v4755 = vpack.c.b16 %v4425, %v4422
        %v4756 = vpack.c.b16 %v4429, %v4426
        %v4757 = vpack.c.b16 %v4430, %v4427
        %v4758 = vpack.c.b16 %v4431, %v4428
        %v4759 = vpack.c.b16 %v4435, %v4432
        %v4760 = vpack.c.b16 %v4436, %v4433
        %v4761 = vpack.c.b16 %v4437, %v4434
        %v4762 = vpack.c.b16 %v4441, %v4438
        %v4763 = vpack.c.b16 %v4442, %v4439
        %v4764 = vpack.c.b16 %v4443, %v4440
        %v4765 = vpack.c.b16 %v4447, %v4444
        %v4766 = vpack.c.b16 %v4448, %v4445
        %v4767 = vpack.c.b16 %v4449, %v4446
        %v4768 = vpack.c.b16 %v4453, %v4450
        %v4769 = vpack.c.b16 %v4454, %v4451
        %v4770 = vpack.c.b16 %v4455, %v4452
        %v4771 = vpack.c.b16 %v4459, %v4456
        %v4772 = vpack.c.b16 %v4460, %v4457
        %v4773 = vpack.c.b16 %v4461, %v4458
        %v4774 = vpack.c.b16 %v4465, %v4462
        %v4775 = vpack.c.b16 %v4466, %v4463
        %v4776 = vpack.c.b16 %v4467, %v4464
        %v4777 = vpack.c.b16 %v4471, %v4468
        %v4778 = vpack.c.b16 %v4472, %v4469
        %v4779 = vpack.c.b16 %v4473, %v4470
        %v4780 = vpack.c.b16 %v4477, %v4474
        %v4781 = vpack.c.b16 %v4478, %v4475
        %v4782 = vpack.c.b16 %v4479, %v4476
        %v4783 = vpack.c.b16 %v4483, %v4480
        %v4784 = vpack.c.b16 %v4484, %v4481
        %v4785 = vpack.c.b16 %v4485, %v4482
        %v4786 = vpack.c.b16 %v4489, %v4486
        %v4787 = vpack.c.b16 %v4490, %v4487
        %v4788 = vpack.c.b16 %v4491, %v4488
        %v4789 = vpack.c.b16 %v4495, %v4492
        %v4790 = vpack.c.b16 %v4496, %v4493
        %v4791 = vpack.c.b16 %v4497, %v4494
        %v4792 = vpack.c.b16 %v4501, %v4498
        %v4793 = vpack.c.b16 %v4502, %v4499
        %v4794 = vpack.c.b16 %v4503, %v4500
        %v4795 = vpack.c.b16 %v4507, %v4504
        %v4796 = vpack.c.b16 %v4508, %v4505
        %v4797 = vpack.c.b16 %v4509, %v4506
        %5086 = vmatprep.subr.bf16.mxu0 %v4511
        %5087 = vmatpush1.bf16.msra.mxu0 %v4510
        %5088 = vmatprep.subr.bf16.mxu0 %v4514
        %5089 = vmatpush1.bf16.msra.mxu0 %v4513
        %5090 = vmatprep.subr.bf16.mxu0 %v4517
        %5091 = vmatpush1.bf16.msra.mxu0 %v4516
        %5092 = vmatprep.subr.bf16.mxu0 %v4520
        %5093 = vmatpush1.bf16.msra.mxu0 %v4519
        %5094 = vmatprep.subr.bf16.mxu0 %v4523
        %5095 = vmatpush1.bf16.msra.mxu0 %v4522
        %5096 = vmatprep.subr.bf16.mxu0 %v4526
        %5097 = vmatpush1.bf16.msra.mxu0 %v4525
        %5098 = vmatprep.subr.bf16.mxu0 %v4529
        %5099 = vmatpush1.bf16.msra.mxu0 %v4528
        %5100 = vmatprep.subr.bf16.mxu0 %v4532
        %5101 = vmatpush1.bf16.msra.mxu0 %v4531
        %5102 = vmatprep.subr.bf16.mxu0 %v4535
        %5103 = vmatpush1.bf16.msra.mxu0 %v4534
        %5104 = vmatprep.subr.bf16.mxu0 %v4538
        %5105 = vmatpush1.bf16.msra.mxu0 %v4537
        %5106 = vmatprep.subr.bf16.mxu0 %v4541
        %5107 = vmatpush1.bf16.msra.mxu0 %v4540
        %5108 = vmatprep.subr.bf16.mxu0 %v4544
        %5109 = vmatpush1.bf16.msra.mxu0 %v4543
        %5110 = vmatprep.subr.bf16.mxu0 %v4547
        %5111 = vmatpush1.bf16.msra.mxu0 %v4546
        %5112 = vmatprep.subr.bf16.mxu0 %v4550
        %5113 = vmatpush1.bf16.msra.mxu0 %v4549
        %5114 = vmatprep.subr.bf16.mxu0 %v4553
        %5115 = vmatpush1.bf16.msra.mxu0 %v4552
        %5116 = vmatprep.subr.bf16.mxu0 %v4556
        %5117 = vmatpush1.bf16.msra.mxu0 %v4555
        %5118 = vmatprep.mubr.bf16.mxu0 %v3102
        %5119 = vmatmul.mubr.bf16.gmra.mrb[0].mxu0 %v3101
        %v5120 = vpop.f32.mrb[0].mxu0
        %v5121 = vadd.f32 %v3538, %v5120
        %v5122 = vpop.f32.mrb[0].mxu0
        %v5123 = vadd.f32 %v3542, %v5122
        %v5124 = vpop.f32.mrb[0].mxu0
        %v5125 = vadd.f32 %v3538, %v5124
        %v5126 = vpop.f32.mrb[0].mxu0
        %v5127 = vadd.f32 %v3542, %v5126
        %5128 = vmatprep.mubr.bf16.mxu0 %v3114
        %5129 = vmatmul.mubr.bf16.gmra.mrb[0].mxu0 %v3113
        %v5130 = vpop.f32.mrb[0].mxu0
        %v5131 = vadd.f32 %v3538, %v5130
        %v5132 = vpop.f32.mrb[0].mxu0
        %v5133 = vadd.f32 %v3542, %v5132
        %v5134 = vpop.f32.mrb[0].mxu0
        %v5135 = vadd.f32 %v3538, %v5134
        %v5136 = vpop.f32.mrb[0].mxu0
        %v5137 = vadd.f32 %v3542, %v5136
        %5138 = vmatprep.mubr.bf16.mxu0 %v3126
        %5139 = vmatmul.mubr.bf16.gmra.mrb[0].mxu0 %v3125
        %v5140 = vpop.f32.mrb[0].mxu0
        %v5141 = vadd.f32 %v3538, %v5140
        %v5142 = vpop.f32.mrb[0].mxu0
        %v5143 = vadd.f32 %v3542, %v5142
        %v5144 = vpop.f32.mrb[0].mxu0
        %v5145 = vadd.f32 %v3538, %v5144
        %v5146 = vpop.f32.mrb[0].mxu0
        %v5147 = vadd.f32 %v3542, %v5146
        %5148 = vmatprep.mubr.bf16.mxu0 %v3138
        %5149 = vmatmul.mubr.bf16.gmra.mrb[0].mxu0 %v3137
        %v5150 = vpop.f32.mrb[0].mxu0
        %v5151 = vadd.f32 %v3538, %v5150
        %v5152 = vpop.f32.mrb[0].mxu0
        %v5153 = vadd.f32 %v3542, %v5152
        %v5154 = vpop.f32.mrb[0].mxu0
        %v5155 = vadd.f32 %v3538, %v5154
        %v5156 = vpop.f32.mrb[0].mxu0
        %v5157 = vadd.f32 %v3542, %v5156
        %5158 = vdwg.mxu0
        %5159 = vmatprep.subr.bf16.mxu0 %v4559
        %5160 = vmatpush1.bf16.msra.mxu0 %v4558
        %5161 = vmatprep.subr.bf16.mxu0 %v4562
        %5162 = vmatpush1.bf16.msra.mxu0 %v4561
        %5163 = vmatprep.subr.bf16.mxu0 %v4565
        %5164 = vmatpush1.bf16.msra.mxu0 %v4564
        %5165 = vmatprep.subr.bf16.mxu0 %v4568
        %5166 = vmatpush1.bf16.msra.mxu0 %v4567
        %5167 = vmatprep.subr.bf16.mxu0 %v4571
        %5168 = vmatpush1.bf16.msra.mxu0 %v4570
        %5169 = vmatprep.subr.bf16.mxu0 %v4574
        %5170 = vmatpush1.bf16.msra.mxu0 %v4573
        %5171 = vmatprep.subr.bf16.mxu0 %v4577
        %5172 = vmatpush1.bf16.msra.mxu0 %v4576
        %5173 = vmatprep.subr.bf16.mxu0 %v4580
        %5174 = vmatpush1.bf16.msra.mxu0 %v4579
        %5175 = vmatprep.subr.bf16.mxu0 %v4583
        %5176 = vmatpush1.bf16.msra.mxu0 %v4582
        %5177 = vmatprep.subr.bf16.mxu0 %v4586
        %5178 = vmatpush1.bf16.msra.mxu0 %v4585
        %5179 = vmatprep.subr.bf16.mxu0 %v4589
        %5180 = vmatpush1.bf16.msra.mxu0 %v4588
        %5181 = vmatprep.subr.bf16.mxu0 %v4592
        %5182 = vmatpush1.bf16.msra.mxu0 %v4591
        %5183 = vmatprep.subr.bf16.mxu0 %v4595
        %5184 = vmatpush1.bf16.msra.mxu0 %v4594
        %5185 = vmatprep.subr.bf16.mxu0 %v4598
        %5186 = vmatpush1.bf16.msra.mxu0 %v4597
        %5187 = vmatprep.subr.bf16.mxu0 %v4601
        %5188 = vmatpush1.bf16.msra.mxu0 %v4600
        %5189 = vmatprep.subr.bf16.mxu0 %v4604
        %5190 = vmatpush1.bf16.msra.mxu0 %v4603
        %5191 = vmatprep.mubr.bf16.mxu0 %v3104
        %5192 = vmatmul.mubr.bf16.gmra.mrb[0].mxu0 %v3103
        %v5193 = vpop.f32.mrb[0].mxu0
        %v5194 = vadd.f32 %v5121, %v5193
        %v5195 = vpop.f32.mrb[0].mxu0
        %v5196 = vadd.f32 %v5123, %v5195
        %v5197 = vpop.f32.mrb[0].mxu0
        %v5198 = vadd.f32 %v5125, %v5197
        %v5199 = vpop.f32.mrb[0].mxu0
        %v5200 = vadd.f32 %v5127, %v5199
        %5201 = vmatprep.mubr.bf16.mxu0 %v3116
        %5202 = vmatmul.mubr.bf16.gmra.mrb[0].mxu0 %v3115
        %v5203 = vpop.f32.mrb[0].mxu0
        %v5204 = vadd.f32 %v5131, %v5203
        %v5205 = vpop.f32.mrb[0].mxu0
        %v5206 = vadd.f32 %v5133, %v5205
        %v5207 = vpop.f32.mrb[0].mxu0
        %v5208 = vadd.f32 %v5135, %v5207
        %v5209 = vpop.f32.mrb[0].mxu0
        %v5210 = vadd.f32 %v5137, %v5209
        %5211 = vmatprep.mubr.bf16.mxu0 %v3128
        %5212 = vmatmul.mubr.bf16.gmra.mrb[0].mxu0 %v3127
        %v5213 = vpop.f32.mrb[0].mxu0
        %v5214 = vadd.f32 %v5141, %v5213
        %v5215 = vpop.f32.mrb[0].mxu0
        %v5216 = vadd.f32 %v5143, %v5215
        %v5217 = vpop.f32.mrb[0].mxu0
        %v5218 = vadd.f32 %v5145, %v5217
        %v5219 = vpop.f32.mrb[0].mxu0
        %v5220 = vadd.f32 %v5147, %v5219
        %5221 = vmatprep.mubr.bf16.mxu0 %v3140
        %5222 = vmatmul.mubr.bf16.gmra.mrb[0].mxu0 %v3139
        %v5223 = vpop.f32.mrb[0].mxu0
        %v5224 = vadd.f32 %v5151, %v5223
        %v5225 = vpop.f32.mrb[0].mxu0
        %v5226 = vadd.f32 %v5153, %v5225
        %v5227 = vpop.f32.mrb[0].mxu0
        %v5228 = vadd.f32 %v5155, %v5227
        %v5229 = vpop.f32.mrb[0].mxu0
        %v5230 = vadd.f32 %v5157, %v5229
        %5231 = vdwg.mxu0
        %5232 = vmatprep.subr.bf16.mxu0 %v4607
        %5233 = vmatpush1.bf16.msra.mxu0 %v4606
        %5234 = vmatprep.subr.bf16.mxu0 %v4610
        %5235 = vmatpush1.bf16.msra.mxu0 %v4609
        %5236 = vmatprep.subr.bf16.mxu0 %v4613
        %5237 = vmatpush1.bf16.msra.mxu0 %v4612
        %5238 = vmatprep.subr.bf16.mxu0 %v4616
        %5239 = vmatpush1.bf16.msra.mxu0 %v4615
        %5240 = vmatprep.subr.bf16.mxu0 %v4619
        %5241 = vmatpush1.bf16.msra.mxu0 %v4618
        %5242 = vmatprep.subr.bf16.mxu0 %v4622
        %5243 = vmatpush1.bf16.msra.mxu0 %v4621
        %5244 = vmatprep.subr.bf16.mxu0 %v4625
        %5245 = vmatpush1.bf16.msra.mxu0 %v4624
        %5246 = vmatprep.subr.bf16.mxu0 %v4628
        %5247 = vmatpush1.bf16.msra.mxu0 %v4627
        %5248 = vmatprep.subr.bf16.mxu0 %v4631
        %5249 = vmatpush1.bf16.msra.mxu0 %v4630
        %5250 = vmatprep.subr.bf16.mxu0 %v4634
        %5251 = vmatpush1.bf16.msra.mxu0 %v4633
        %5252 = vmatprep.subr.bf16.mxu0 %v4637
        %5253 = vmatpush1.bf16.msra.mxu0 %v4636
        %5254 = vmatprep.subr.bf16.mxu0 %v4640
        %5255 = vmatpush1.bf16.msra.mxu0 %v4639
        %5256 = vmatprep.subr.bf16.mxu0 %v4643
        %5257 = vmatpush1.bf16.msra.mxu0 %v4642
        %5258 = vmatprep.subr.bf16.mxu0 %v4646
        %5259 = vmatpush1.bf16.msra.mxu0 %v4645
        %5260 = vmatprep.subr.bf16.mxu0 %v4649
        %5261 = vmatpush1.bf16.msra.mxu0 %v4648
        %5262 = vmatprep.subr.bf16.mxu0 %v4652
        %5263 = vmatpush1.bf16.msra.mxu0 %v4651
        %5264 = vmatprep.mubr.bf16.mxu0 %v3106
        %5265 = vmatmul.mubr.bf16.gmra.mrb[0].mxu0 %v3105
        %v5266 = vpop.f32.mrb[0].mxu0
        %v5267 = vadd.f32 %v5194, %v5266
        %v5268 = vpop.f32.mrb[0].mxu0
        %v5269 = vadd.f32 %v5196, %v5268
        %v5270 = vpop.f32.mrb[0].mxu0
        %v5271 = vadd.f32 %v5198, %v5270
        %v5272 = vpop.f32.mrb[0].mxu0
        %v5273 = vadd.f32 %v5200, %v5272
        %5274 = vmatprep.mubr.bf16.mxu0 %v3118
        %5275 = vmatmul.mubr.bf16.gmra.mrb[0].mxu0 %v3117
        %v5276 = vpop.f32.mrb[0].mxu0
        %v5277 = vadd.f32 %v5204, %v5276
        %v5278 = vpop.f32.mrb[0].mxu0
        %v5279 = vadd.f32 %v5206, %v5278
        %v5280 = vpop.f32.mrb[0].mxu0
        %v5281 = vadd.f32 %v5208, %v5280
        %v5282 = vpop.f32.mrb[0].mxu0
        %v5283 = vadd.f32 %v5210, %v5282
        %5284 = vmatprep.mubr.bf16.mxu0 %v3130
        %5285 = vmatmul.mubr.bf16.gmra.mrb[0].mxu0 %v3129
        %v5286 = vpop.f32.mrb[0].mxu0
        %v5287 = vadd.f32 %v5214, %v5286
        %v5288 = vpop.f32.mrb[0].mxu0
        %v5289 = vadd.f32 %v5216, %v5288
        %v5290 = vpop.f32.mrb[0].mxu0
        %v5291 = vadd.f32 %v5218, %v5290
        %v5292 = vpop.f32.mrb[0].mxu0
        %v5293 = vadd.f32 %v5220, %v5292
        %5294 = vmatprep.mubr.bf16.mxu0 %v3142
        %5295 = vmatmul.mubr.bf16.gmra.mrb[0].mxu0 %v3141
        %v5296 = vpop.f32.mrb[0].mxu0
        %v5297 = vadd.f32 %v5224, %v5296
        %v5298 = vpop.f32.mrb[0].mxu0
        %v5299 = vadd.f32 %v5226, %v5298
        %v5300 = vpop.f32.mrb[0].mxu0
        %v5301 = vadd.f32 %v5228, %v5300
        %v5302 = vpop.f32.mrb[0].mxu0
        %v5303 = vadd.f32 %v5230, %v5302
        %5304 = vdwg.mxu0
        %5305 = vmatprep.subr.bf16.mxu0 %v4655
        %5306 = vmatpush1.bf16.msra.mxu0 %v4654
        %5307 = vmatprep.subr.bf16.mxu0 %v4658
        %5308 = vmatpush1.bf16.msra.mxu0 %v4657
        %5309 = vmatprep.subr.bf16.mxu0 %v4661
        %5310 = vmatpush1.bf16.msra.mxu0 %v4660
        %5311 = vmatprep.subr.bf16.mxu0 %v4664
        %5312 = vmatpush1.bf16.msra.mxu0 %v4663
        %5313 = vmatprep.subr.bf16.mxu0 %v4667
        %5314 = vmatpush1.bf16.msra.mxu0 %v4666
        %5315 = vmatprep.subr.bf16.mxu0 %v4670
        %5316 = vmatpush1.bf16.msra.mxu0 %v4669
        %5317 = vmatprep.subr.bf16.mxu0 %v4673
        %5318 = vmatpush1.bf16.msra.mxu0 %v4672
        %5319 = vmatprep.subr.bf16.mxu0 %v4676
        %5320 = vmatpush1.bf16.msra.mxu0 %v4675
        %5321 = vmatprep.subr.bf16.mxu0 %v4679
        %5322 = vmatpush1.bf16.msra.mxu0 %v4678
        %5323 = vmatprep.subr.bf16.mxu0 %v4682
        %5324 = vmatpush1.bf16.msra.mxu0 %v4681
        %5325 = vmatprep.subr.bf16.mxu0 %v4685
        %5326 = vmatpush1.bf16.msra.mxu0 %v4684
        %5327 = vmatprep.subr.bf16.mxu0 %v4688
        %5328 = vmatpush1.bf16.msra.mxu0 %v4687
        %5329 = vmatprep.subr.bf16.mxu0 %v4691
        %5330 = vmatpush1.bf16.msra.mxu0 %v4690
        %5331 = vmatprep.subr.bf16.mxu0 %v4694
        %5332 = vmatpush1.bf16.msra.mxu0 %v4693
        %5333 = vmatprep.subr.bf16.mxu0 %v4697
        %5334 = vmatpush1.bf16.msra.mxu0 %v4696
        %5335 = vmatprep.subr.bf16.mxu0 %v4700
        %5336 = vmatpush1.bf16.msra.mxu0 %v4699
        %5337 = vmatprep.mubr.bf16.mxu0 %v3108
        %5338 = vmatmul.mubr.bf16.gmra.mrb[0].mxu0 %v3107
        %v5339 = vpop.f32.mrb[0].mxu0
        %v5340 = vadd.f32 %v5267, %v5339
        %v5341 = vpop.f32.mrb[0].mxu0
        %v5342 = vadd.f32 %v5269, %v5341
        %v5343 = vpop.f32.mrb[0].mxu0
        %v5344 = vadd.f32 %v5271, %v5343
        %v5345 = vpop.f32.mrb[0].mxu0
        %v5346 = vadd.f32 %v5273, %v5345
        %5347 = vmatprep.mubr.bf16.mxu0 %v3120
        %5348 = vmatmul.mubr.bf16.gmra.mrb[0].mxu0 %v3119
        %v5349 = vpop.f32.mrb[0].mxu0
        %v5350 = vadd.f32 %v5277, %v5349
        %v5351 = vpop.f32.mrb[0].mxu0
        %v5352 = vadd.f32 %v5279, %v5351
        %v5353 = vpop.f32.mrb[0].mxu0
        %v5354 = vadd.f32 %v5281, %v5353
        %v5355 = vpop.f32.mrb[0].mxu0
        %v5356 = vadd.f32 %v5283, %v5355
        %5357 = vmatprep.mubr.bf16.mxu0 %v3132
        %5358 = vmatmul.mubr.bf16.gmra.mrb[0].mxu0 %v3131
        %v5359 = vpop.f32.mrb[0].mxu0
        %v5360 = vadd.f32 %v5287, %v5359
        %v5361 = vpop.f32.mrb[0].mxu0
        %v5362 = vadd.f32 %v5289, %v5361
        %v5363 = vpop.f32.mrb[0].mxu0
        %v5364 = vadd.f32 %v5291, %v5363
        %v5365 = vpop.f32.mrb[0].mxu0
        %v5366 = vadd.f32 %v5293, %v5365
        %5367 = vmatprep.mubr.bf16.mxu0 %v3144
        %5368 = vmatmul.mubr.bf16.gmra.mrb[0].mxu0 %v3143
        %v5369 = vpop.f32.mrb[0].mxu0
        %v5370 = vadd.f32 %v5297, %v5369
        %v5371 = vpop.f32.mrb[0].mxu0
        %v5372 = vadd.f32 %v5299, %v5371
        %v5373 = vpop.f32.mrb[0].mxu0
        %v5374 = vadd.f32 %v5301, %v5373
        %v5375 = vpop.f32.mrb[0].mxu0
        %v5376 = vadd.f32 %v5303, %v5375
        %5377 = vdwg.mxu0
        %5378 = vmatprep.subr.bf16.mxu0 %v4703
        %5379 = vmatpush1.bf16.msra.mxu0 %v4702
        %5380 = vmatprep.subr.bf16.mxu0 %v4706
        %5381 = vmatpush1.bf16.msra.mxu0 %v4705
        %5382 = vmatprep.subr.bf16.mxu0 %v4709
        %5383 = vmatpush1.bf16.msra.mxu0 %v4708
        %5384 = vmatprep.subr.bf16.mxu0 %v4712
        %5385 = vmatpush1.bf16.msra.mxu0 %v4711
        %5386 = vmatprep.subr.bf16.mxu0 %v4715
        %5387 = vmatpush1.bf16.msra.mxu0 %v4714
        %5388 = vmatprep.subr.bf16.mxu0 %v4718
        %5389 = vmatpush1.bf16.msra.mxu0 %v4717
        %5390 = vmatprep.subr.bf16.mxu0 %v4721
        %5391 = vmatpush1.bf16.msra.mxu0 %v4720
        %5392 = vmatprep.subr.bf16.mxu0 %v4724
        %5393 = vmatpush1.bf16.msra.mxu0 %v4723
        %5394 = vmatprep.subr.bf16.mxu0 %v4727
        %5395 = vmatpush1.bf16.msra.mxu0 %v4726
        %5396 = vmatprep.subr.bf16.mxu0 %v4730
        %5397 = vmatpush1.bf16.msra.mxu0 %v4729
        %5398 = vmatprep.subr.bf16.mxu0 %v4733
        %5399 = vmatpush1.bf16.msra.mxu0 %v4732
        %5400 = vmatprep.subr.bf16.mxu0 %v4736
        %5401 = vmatpush1.bf16.msra.mxu0 %v4735
        %5402 = vmatprep.subr.bf16.mxu0 %v4739
        %5403 = vmatpush1.bf16.msra.mxu0 %v4738
        %5404 = vmatprep.subr.bf16.mxu0 %v4742
        %5405 = vmatpush1.bf16.msra.mxu0 %v4741
        %5406 = vmatprep.subr.bf16.mxu0 %v4745
        %5407 = vmatpush1.bf16.msra.mxu0 %v4744
        %5408 = vmatprep.subr.bf16.mxu0 %v4748
        %5409 = vmatpush1.bf16.msra.mxu0 %v4747
        %5410 = vmatprep.mubr.bf16.mxu0 %v3110
        %5411 = vmatmul.mubr.bf16.gmra.mrb[0].mxu0 %v3109
        %v5412 = vpop.f32.mrb[0].mxu0
        %v5413 = vadd.f32 %v5340, %v5412
        %v5414 = vpop.f32.mrb[0].mxu0
        %v5415 = vadd.f32 %v5342, %v5414
        %v5416 = vpop.f32.mrb[0].mxu0
        %v5417 = vadd.f32 %v5344, %v5416
        %v5418 = vpop.f32.mrb[0].mxu0
        %v5419 = vadd.f32 %v5346, %v5418
        %5420 = vmatprep.mubr.bf16.mxu0 %v3122
        %5421 = vmatmul.mubr.bf16.gmra.mrb[0].mxu0 %v3121
        %v5422 = vpop.f32.mrb[0].mxu0
        %v5423 = vadd.f32 %v5350, %v5422
        %v5424 = vpop.f32.mrb[0].mxu0
        %v5425 = vadd.f32 %v5352, %v5424
        %v5426 = vpop.f32.mrb[0].mxu0
        %v5427 = vadd.f32 %v5354, %v5426
        %v5428 = vpop.f32.mrb[0].mxu0
        %v5429 = vadd.f32 %v5356, %v5428
        %5430 = vmatprep.mubr.bf16.mxu0 %v3134
        %5431 = vmatmul.mubr.bf16.gmra.mrb[0].mxu0 %v3133
        %v5432 = vpop.f32.mrb[0].mxu0
        %v5433 = vadd.f32 %v5360, %v5432
        %v5434 = vpop.f32.mrb[0].mxu0
        %v5435 = vadd.f32 %v5362, %v5434
        %v5436 = vpop.f32.mrb[0].mxu0
        %v5437 = vadd.f32 %v5364, %v5436
        %v5438 = vpop.f32.mrb[0].mxu0
        %v5439 = vadd.f32 %v5366, %v5438
        %5440 = vmatprep.mubr.bf16.mxu0 %v3146
        %5441 = vmatmul.mubr.bf16.gmra.mrb[0].mxu0 %v3145
        %v5442 = vpop.f32.mrb[0].mxu0
        %v5443 = vadd.f32 %v5370, %v5442
        %v5444 = vpop.f32.mrb[0].mxu0
        %v5445 = vadd.f32 %v5372, %v5444
        %v5446 = vpop.f32.mrb[0].mxu0
        %v5447 = vadd.f32 %v5374, %v5446
        %v5448 = vpop.f32.mrb[0].mxu0
        %v5449 = vadd.f32 %v5376, %v5448
        %5450 = vdwg.mxu0
        %5451 = vmatprep.subr.bf16.mxu0 %v4751
        %5452 = vmatpush1.bf16.msra.mxu0 %v4750
        %5453 = vmatprep.subr.bf16.mxu0 %v4754
        %5454 = vmatpush1.bf16.msra.mxu0 %v4753
        %5455 = vmatprep.subr.bf16.mxu0 %v4757
        %5456 = vmatpush1.bf16.msra.mxu0 %v4756
        %5457 = vmatprep.subr.bf16.mxu0 %v4760
        %5458 = vmatpush1.bf16.msra.mxu0 %v4759
        %5459 = vmatprep.subr.bf16.mxu0 %v4763
        %5460 = vmatpush1.bf16.msra.mxu0 %v4762
        %5461 = vmatprep.subr.bf16.mxu0 %v4766
        %5462 = vmatpush1.bf16.msra.mxu0 %v4765
        %5463 = vmatprep.subr.bf16.mxu0 %v4769
        %5464 = vmatpush1.bf16.msra.mxu0 %v4768
        %5465 = vmatprep.subr.bf16.mxu0 %v4772
        %5466 = vmatpush1.bf16.msra.mxu0 %v4771
        %5467 = vmatprep.subr.bf16.mxu0 %v4775
        %5468 = vmatpush1.bf16.msra.mxu0 %v4774
        %5469 = vmatprep.subr.bf16.mxu0 %v4778
        %5470 = vmatpush1.bf16.msra.mxu0 %v4777
        %5471 = vmatprep.subr.bf16.mxu0 %v4781
        %5472 = vmatpush1.bf16.msra.mxu0 %v4780
        %5473 = vmatprep.subr.bf16.mxu0 %v4784
        %5474 = vmatpush1.bf16.msra.mxu0 %v4783
        %5475 = vmatprep.subr.bf16.mxu0 %v4787
        %5476 = vmatpush1.bf16.msra.mxu0 %v4786
        %5477 = vmatprep.subr.bf16.mxu0 %v4790
        %5478 = vmatpush1.bf16.msra.mxu0 %v4789
        %5479 = vmatprep.subr.bf16.mxu0 %v4793
        %5480 = vmatpush1.bf16.msra.mxu0 %v4792
        %5481 = vmatprep.subr.bf16.mxu0 %v4796
        %5482 = vmatpush1.bf16.msra.mxu0 %v4795
        %5483 = vmatprep.mubr.bf16.mxu0 %v3112
        %5484 = vmatmul.mubr.bf16.gmra.mrb[0].mxu0 %v3111
        %v5485 = vpop.f32.mrb[0].mxu0
        %v5486 = vadd.f32 %v5413, %v5485
        %v5487 = vpop.f32.mrb[0].mxu0
        %v5488 = vadd.f32 %v5415, %v5487
        %v5489 = vpop.f32.mrb[0].mxu0
        %v5490 = vadd.f32 %v5417, %v5489
        %v5491 = vpop.f32.mrb[0].mxu0
        %v5492 = vadd.f32 %v5419, %v5491
        %5493 = vmatprep.mubr.bf16.mxu0 %v3124
        %5494 = vmatmul.mubr.bf16.gmra.mrb[0].mxu0 %v3123
        %v5495 = vpop.f32.mrb[0].mxu0
        %v5496 = vadd.f32 %v5423, %v5495
        %v5497 = vpop.f32.mrb[0].mxu0
        %v5498 = vadd.f32 %v5425, %v5497
        %v5499 = vpop.f32.mrb[0].mxu0
        %v5500 = vadd.f32 %v5427, %v5499
        %v5501 = vpop.f32.mrb[0].mxu0
        %v5502 = vadd.f32 %v5429, %v5501
        %5503 = vmatprep.mubr.bf16.mxu0 %v3136
        %5504 = vmatmul.mubr.bf16.gmra.mrb[0].mxu0 %v3135
        %v5505 = vpop.f32.mrb[0].mxu0
        %v5506 = vadd.f32 %v5433, %v5505
        %v5507 = vpop.f32.mrb[0].mxu0
        %v5508 = vadd.f32 %v5435, %v5507
        %v5509 = vpop.f32.mrb[0].mxu0
        %v5510 = vadd.f32 %v5437, %v5509
        %v5511 = vpop.f32.mrb[0].mxu0
        %v5512 = vadd.f32 %v5439, %v5511
        %5513 = vmatprep.mubr.bf16.mxu0 %v3148
        %5514 = vmatmul.mubr.bf16.gmra.mrb[0].mxu0 %v3147
        %v5515 = vpop.f32.mrb[0].mxu0
        %v5516 = vadd.f32 %v5443, %v5515
        %v5517 = vpop.f32.mrb[0].mxu0
        %v5518 = vadd.f32 %v5445, %v5517
        %v5519 = vpop.f32.mrb[0].mxu0
        %v5520 = vadd.f32 %v5447, %v5519
        %v5521 = vpop.f32.mrb[0].mxu0
        %v5522 = vadd.f32 %v5449, %v5521
        %5523 = vdwg.mxu0
        %5524 = vmatprep.subr.bf16.mxu0 0
        %5525 = vmatpush1.bf16.msra.mxu0 %v4512
        %5526 = vmatprep.subr.bf16.mxu0 0
        %5527 = vmatpush1.bf16.msra.mxu0 %v4515
        %5528 = vmatprep.subr.bf16.mxu0 0
        %5529 = vmatpush1.bf16.msra.mxu0 %v4518
        %5530 = vmatprep.subr.bf16.mxu0 0
        %5531 = vmatpush1.bf16.msra.mxu0 %v4521
        %5532 = vmatprep.subr.bf16.mxu0 0
        %5533 = vmatpush1.bf16.msra.mxu0 %v4524
        %5534 = vmatprep.subr.bf16.mxu0 0
        %5535 = vmatpush1.bf16.msra.mxu0 %v4527
        %5536 = vmatprep.subr.bf16.mxu0 0
        %5537 = vmatpush1.bf16.msra.mxu0 %v4530
        %5538 = vmatprep.subr.bf16.mxu0 0
        %5539 = vmatpush1.bf16.msra.mxu0 %v4533
        %5540 = vmatprep.subr.bf16.mxu0 0
        %5541 = vmatpush1.bf16.msra.mxu0 %v4536
        %5542 = vmatprep.subr.bf16.mxu0 0
        %5543 = vmatpush1.bf16.msra.mxu0 %v4539
        %5544 = vmatprep.subr.bf16.mxu0 0
        %5545 = vmatpush1.bf16.msra.mxu0 %v4542
        %5546 = vmatprep.subr.bf16.mxu0 0
        %5547 = vmatpush1.bf16.msra.mxu0 %v4545
        %5548 = vmatprep.subr.bf16.mxu0 0
        %5549 = vmatpush1.bf16.msra.mxu0 %v4548
        %5550 = vmatprep.subr.bf16.mxu0 0
        %5551 = vmatpush1.bf16.msra.mxu0 %v4551
        %5552 = vmatprep.subr.bf16.mxu0 0
        %5553 = vmatpush1.bf16.msra.mxu0 %v4554
        %5554 = vmatprep.subr.bf16.mxu0 0
        %5555 = vmatpush1.bf16.msra.mxu0 %v4557
        %5556 = vmatprep.mubr.bf16.mxu0 %v3102
        %5557 = vmatmul.mubr.bf16.gmra.mrb[0].mxu0 %v3101
        %v5558 = vpop.f32.mrb[0].mxu0
        %v5559 = vadd.f32 %v3546, %v5558
        %v5560 = vpop.f32.mrb[0].mxu0
        %v5561 = vpop.f32.mrb[0].mxu0
        %v5562 = vadd.f32 %v3546, %v5561
        %v5563 = vpop.f32.mrb[0].mxu0
        %5564 = vmatprep.mubr.bf16.mxu0 %v3114
        %5565 = vmatmul.mubr.bf16.gmra.mrb[0].mxu0 %v3113
        %v5566 = vpop.f32.mrb[0].mxu0
        %v5567 = vadd.f32 %v3546, %v5566
        %v5568 = vpop.f32.mrb[0].mxu0
        %v5569 = vpop.f32.mrb[0].mxu0
        %v5570 = vadd.f32 %v3546, %v5569
        %v5571 = vpop.f32.mrb[0].mxu0
        %5572 = vmatprep.mubr.bf16.mxu0 %v3126
        %5573 = vmatmul.mubr.bf16.gmra.mrb[0].mxu0 %v3125
        %v5574 = vpop.f32.mrb[0].mxu0
        %v5575 = vadd.f32 %v3546, %v5574
        %v5576 = vpop.f32.mrb[0].mxu0
        %v5577 = vpop.f32.mrb[0].mxu0
        %v5578 = vadd.f32 %v3546, %v5577
        %v5579 = vpop.f32.mrb[0].mxu0
        %5580 = vmatprep.mubr.bf16.mxu0 %v3138
        %5581 = vmatmul.mubr.bf16.gmra.mrb[0].mxu0 %v3137
        %v5582 = vpop.f32.mrb[0].mxu0
        %v5583 = vadd.f32 %v3546, %v5582
        %v5584 = vpop.f32.mrb[0].mxu0
        %v5585 = vpop.f32.mrb[0].mxu0
        %v5586 = vadd.f32 %v3546, %v5585
        %v5587 = vpop.f32.mrb[0].mxu0
        %5588 = vdwg.mxu0
        %5589 = vmatprep.subr.bf16.mxu0 0
        %5590 = vmatpush1.bf16.msra.mxu0 %v4560
        %5591 = vmatprep.subr.bf16.mxu0 0
        %5592 = vmatpush1.bf16.msra.mxu0 %v4563
        %5593 = vmatprep.subr.bf16.mxu0 0
        %5594 = vmatpush1.bf16.msra.mxu0 %v4566
        %5595 = vmatprep.subr.bf16.mxu0 0
        %5596 = vmatpush1.bf16.msra.mxu0 %v4569
        %5597 = vmatprep.subr.bf16.mxu0 0
        %5598 = vmatpush1.bf16.msra.mxu0 %v4572
        %5599 = vmatprep.subr.bf16.mxu0 0
        %5600 = vmatpush1.bf16.msra.mxu0 %v4575
        %5601 = vmatprep.subr.bf16.mxu0 0
        %5602 = vmatpush1.bf16.msra.mxu0 %v4578
        %5603 = vmatprep.subr.bf16.mxu0 0
        %5604 = vmatpush1.bf16.msra.mxu0 %v4581
        %5605 = vmatprep.subr.bf16.mxu0 0
        %5606 = vmatpush1.bf16.msra.mxu0 %v4584
        %5607 = vmatprep.subr.bf16.mxu0 0
        %5608 = vmatpush1.bf16.msra.mxu0 %v4587
        %5609 = vmatprep.subr.bf16.mxu0 0
        %5610 = vmatpush1.bf16.msra.mxu0 %v4590
        %5611 = vmatprep.subr.bf16.mxu0 0
        %5612 = vmatpush1.bf16.msra.mxu0 %v4593
        %5613 = vmatprep.subr.bf16.mxu0 0
        %5614 = vmatpush1.bf16.msra.mxu0 %v4596
        %5615 = vmatprep.subr.bf16.mxu0 0
        %5616 = vmatpush1.bf16.msra.mxu0 %v4599
        %5617 = vmatprep.subr.bf16.mxu0 0
        %5618 = vmatpush1.bf16.msra.mxu0 %v4602
        %5619 = vmatprep.subr.bf16.mxu0 0
        %5620 = vmatpush1.bf16.msra.mxu0 %v4605
        %5621 = vmatprep.mubr.bf16.mxu0 %v3104
        %5622 = vmatmul.mubr.bf16.gmra.mrb[0].mxu0 %v3103
        %v5623 = vpop.f32.mrb[0].mxu0
        %v5624 = vadd.f32 %v5559, %v5623
        %v5625 = vpop.f32.mrb[0].mxu0
        %v5626 = vpop.f32.mrb[0].mxu0
        %v5627 = vadd.f32 %v5562, %v5626
        %v5628 = vpop.f32.mrb[0].mxu0
        %5629 = vmatprep.mubr.bf16.mxu0 %v3116
        %5630 = vmatmul.mubr.bf16.gmra.mrb[0].mxu0 %v3115
        %v5631 = vpop.f32.mrb[0].mxu0
        %v5632 = vadd.f32 %v5567, %v5631
        %v5633 = vpop.f32.mrb[0].mxu0
        %v5634 = vpop.f32.mrb[0].mxu0
        %v5635 = vadd.f32 %v5570, %v5634
        %v5636 = vpop.f32.mrb[0].mxu0
        %5637 = vmatprep.mubr.bf16.mxu0 %v3128
        %5638 = vmatmul.mubr.bf16.gmra.mrb[0].mxu0 %v3127
        %v5639 = vpop.f32.mrb[0].mxu0
        %v5640 = vadd.f32 %v5575, %v5639
        %v5641 = vpop.f32.mrb[0].mxu0
        %v5642 = vpop.f32.mrb[0].mxu0
        %v5643 = vadd.f32 %v5578, %v5642
        %v5644 = vpop.f32.mrb[0].mxu0
        %5645 = vmatprep.mubr.bf16.mxu0 %v3140
        %5646 = vmatmul.mubr.bf16.gmra.mrb[0].mxu0 %v3139
        %v5647 = vpop.f32.mrb[0].mxu0
        %v5648 = vadd.f32 %v5583, %v5647
        %v5649 = vpop.f32.mrb[0].mxu0
        %v5650 = vpop.f32.mrb[0].mxu0
        %v5651 = vadd.f32 %v5586, %v5650
        %v5652 = vpop.f32.mrb[0].mxu0
        %5653 = vdwg.mxu0
        %5654 = vmatprep.subr.bf16.mxu0 0
        %5655 = vmatpush1.bf16.msra.mxu0 %v4608
        %5656 = vmatprep.subr.bf16.mxu0 0
        %5657 = vmatpush1.bf16.msra.mxu0 %v4611
        %5658 = vmatprep.subr.bf16.mxu0 0
        %5659 = vmatpush1.bf16.msra.mxu0 %v4614
        %5660 = vmatprep.subr.bf16.mxu0 0
        %5661 = vmatpush1.bf16.msra.mxu0 %v4617
        %5662 = vmatprep.subr.bf16.mxu0 0
        %5663 = vmatpush1.bf16.msra.mxu0 %v4620
        %5664 = vmatprep.subr.bf16.mxu0 0
        %5665 = vmatpush1.bf16.msra.mxu0 %v4623
        %5666 = vmatprep.subr.bf16.mxu0 0
        %5667 = vmatpush1.bf16.msra.mxu0 %v4626
        %5668 = vmatprep.subr.bf16.mxu0 0
        %5669 = vmatpush1.bf16.msra.mxu0 %v4629
        %5670 = vmatprep.subr.bf16.mxu0 0
        %5671 = vmatpush1.bf16.msra.mxu0 %v4632
        %5672 = vmatprep.subr.bf16.mxu0 0
        %5673 = vmatpush1.bf16.msra.mxu0 %v4635
        %5674 = vmatprep.subr.bf16.mxu0 0
        %5675 = vmatpush1.bf16.msra.mxu0 %v4638
        %5676 = vmatprep.subr.bf16.mxu0 0
        %5677 = vmatpush1.bf16.msra.mxu0 %v4641
        %5678 = vmatprep.subr.bf16.mxu0 0
        %5679 = vmatpush1.bf16.msra.mxu0 %v4644
        %5680 = vmatprep.subr.bf16.mxu0 0
        %5681 = vmatpush1.bf16.msra.mxu0 %v4647
        %5682 = vmatprep.subr.bf16.mxu0 0
        %5683 = vmatpush1.bf16.msra.mxu0 %v4650
        %5684 = vmatprep.subr.bf16.mxu0 0
        %5685 = vmatpush1.bf16.msra.mxu0 %v4653
        %5686 = vmatprep.mubr.bf16.mxu0 %v3106
        %5687 = vmatmul.mubr.bf16.gmra.mrb[0].mxu0 %v3105
        %v5688 = vpop.f32.mrb[0].mxu0
        %v5689 = vadd.f32 %v5624, %v5688
        %v5690 = vpop.f32.mrb[0].mxu0
        %v5691 = vpop.f32.mrb[0].mxu0
        %v5692 = vadd.f32 %v5627, %v5691
        %v5693 = vpop.f32.mrb[0].mxu0
        %5694 = vmatprep.mubr.bf16.mxu0 %v3118
        %5695 = vmatmul.mubr.bf16.gmra.mrb[0].mxu0 %v3117
        %v5696 = vpop.f32.mrb[0].mxu0
        %v5697 = vadd.f32 %v5632, %v5696
        %v5698 = vpop.f32.mrb[0].mxu0
        %v5699 = vpop.f32.mrb[0].mxu0
        %v5700 = vadd.f32 %v5635, %v5699
        %v5701 = vpop.f32.mrb[0].mxu0
        %5702 = vmatprep.mubr.bf16.mxu0 %v3130
        %5703 = vmatmul.mubr.bf16.gmra.mrb[0].mxu0 %v3129
        %v5704 = vpop.f32.mrb[0].mxu0
        %v5705 = vadd.f32 %v5640, %v5704
        %v5706 = vpop.f32.mrb[0].mxu0
        %v5707 = vpop.f32.mrb[0].mxu0
        %v5708 = vadd.f32 %v5643, %v5707
        %v5709 = vpop.f32.mrb[0].mxu0
        %5710 = vmatprep.mubr.bf16.mxu0 %v3142
        %5711 = vmatmul.mubr.bf16.gmra.mrb[0].mxu0 %v3141
        %v5712 = vpop.f32.mrb[0].mxu0
        %v5713 = vadd.f32 %v5648, %v5712
        %v5714 = vpop.f32.mrb[0].mxu0
        %v5715 = vpop.f32.mrb[0].mxu0
        %v5716 = vadd.f32 %v5651, %v5715
        %v5717 = vpop.f32.mrb[0].mxu0
        %5718 = vdwg.mxu0
        %5719 = vmatprep.subr.bf16.mxu0 0
        %5720 = vmatpush1.bf16.msra.mxu0 %v4656
        %5721 = vmatprep.subr.bf16.mxu0 0
        %5722 = vmatpush1.bf16.msra.mxu0 %v4659
        %5723 = vmatprep.subr.bf16.mxu0 0
        %5724 = vmatpush1.bf16.msra.mxu0 %v4662
        %5725 = vmatprep.subr.bf16.mxu0 0
        %5726 = vmatpush1.bf16.msra.mxu0 %v4665
        %5727 = vmatprep.subr.bf16.mxu0 0
        %5728 = vmatpush1.bf16.msra.mxu0 %v4668
        %5729 = vmatprep.subr.bf16.mxu0 0
        %5730 = vmatpush1.bf16.msra.mxu0 %v4671
        %5731 = vmatprep.subr.bf16.mxu0 0
        %5732 = vmatpush1.bf16.msra.mxu0 %v4674
        %5733 = vmatprep.subr.bf16.mxu0 0
        %5734 = vmatpush1.bf16.msra.mxu0 %v4677
        %5735 = vmatprep.subr.bf16.mxu0 0
        %5736 = vmatpush1.bf16.msra.mxu0 %v4680
        %5737 = vmatprep.subr.bf16.mxu0 0
        %5738 = vmatpush1.bf16.msra.mxu0 %v4683
        %5739 = vmatprep.subr.bf16.mxu0 0
        %5740 = vmatpush1.bf16.msra.mxu0 %v4686
        %5741 = vmatprep.subr.bf16.mxu0 0
        %5742 = vmatpush1.bf16.msra.mxu0 %v4689
        %5743 = vmatprep.subr.bf16.mxu0 0
        %5744 = vmatpush1.bf16.msra.mxu0 %v4692
        %5745 = vmatprep.subr.bf16.mxu0 0
        %5746 = vmatpush1.bf16.msra.mxu0 %v4695
        %5747 = vmatprep.subr.bf16.mxu0 0
        %5748 = vmatpush1.bf16.msra.mxu0 %v4698
        %5749 = vmatprep.subr.bf16.mxu0 0
        %5750 = vmatpush1.bf16.msra.mxu0 %v4701
        %5751 = vmatprep.mubr.bf16.mxu0 %v3108
        %5752 = vmatmul.mubr.bf16.gmra.mrb[0].mxu0 %v3107
        %v5753 = vpop.f32.mrb[0].mxu0
        %v5754 = vadd.f32 %v5689, %v5753
        %v5755 = vpop.f32.mrb[0].mxu0
        %v5756 = vpop.f32.mrb[0].mxu0
        %v5757 = vadd.f32 %v5692, %v5756
        %v5758 = vpop.f32.mrb[0].mxu0
        %5759 = vmatprep.mubr.bf16.mxu0 %v3120
        %5760 = vmatmul.mubr.bf16.gmra.mrb[0].mxu0 %v3119
        %v5761 = vpop.f32.mrb[0].mxu0
        %v5762 = vadd.f32 %v5697, %v5761
        %v5763 = vpop.f32.mrb[0].mxu0
        %v5764 = vpop.f32.mrb[0].mxu0
        %v5765 = vadd.f32 %v5700, %v5764
        %v5766 = vpop.f32.mrb[0].mxu0
        %5767 = vmatprep.mubr.bf16.mxu0 %v3132
        %5768 = vmatmul.mubr.bf16.gmra.mrb[0].mxu0 %v3131
        %v5769 = vpop.f32.mrb[0].mxu0
        %v5770 = vadd.f32 %v5705, %v5769
        %v5771 = vpop.f32.mrb[0].mxu0
        %v5772 = vpop.f32.mrb[0].mxu0
        %v5773 = vadd.f32 %v5708, %v5772
        %v5774 = vpop.f32.mrb[0].mxu0
        %5775 = vmatprep.mubr.bf16.mxu0 %v3144
        %5776 = vmatmul.mubr.bf16.gmra.mrb[0].mxu0 %v3143
        %v5777 = vpop.f32.mrb[0].mxu0
        %v5778 = vadd.f32 %v5713, %v5777
        %v5779 = vpop.f32.mrb[0].mxu0
        %v5780 = vpop.f32.mrb[0].mxu0
        %v5781 = vadd.f32 %v5716, %v5780
        %v5782 = vpop.f32.mrb[0].mxu0
        %5783 = vdwg.mxu0
        %5784 = vmatprep.subr.bf16.mxu0 0
        %5785 = vmatpush1.bf16.msra.mxu0 %v4704
        %5786 = vmatprep.subr.bf16.mxu0 0
        %5787 = vmatpush1.bf16.msra.mxu0 %v4707
        %5788 = vmatprep.subr.bf16.mxu0 0
        %5789 = vmatpush1.bf16.msra.mxu0 %v4710
        %5790 = vmatprep.subr.bf16.mxu0 0
        %5791 = vmatpush1.bf16.msra.mxu0 %v4713
        %5792 = vmatprep.subr.bf16.mxu0 0
        %5793 = vmatpush1.bf16.msra.mxu0 %v4716
        %5794 = vmatprep.subr.bf16.mxu0 0
        %5795 = vmatpush1.bf16.msra.mxu0 %v4719
        %5796 = vmatprep.subr.bf16.mxu0 0
        %5797 = vmatpush1.bf16.msra.mxu0 %v4722
        %5798 = vmatprep.subr.bf16.mxu0 0
        %5799 = vmatpush1.bf16.msra.mxu0 %v4725
        %5800 = vmatprep.subr.bf16.mxu0 0
        %5801 = vmatpush1.bf16.msra.mxu0 %v4728
        %5802 = vmatprep.subr.bf16.mxu0 0
        %5803 = vmatpush1.bf16.msra.mxu0 %v4731
        %5804 = vmatprep.subr.bf16.mxu0 0
        %5805 = vmatpush1.bf16.msra.mxu0 %v4734
        %5806 = vmatprep.subr.bf16.mxu0 0
        %5807 = vmatpush1.bf16.msra.mxu0 %v4737
        %5808 = vmatprep.subr.bf16.mxu0 0
        %5809 = vmatpush1.bf16.msra.mxu0 %v4740
        %5810 = vmatprep.subr.bf16.mxu0 0
        %5811 = vmatpush1.bf16.msra.mxu0 %v4743
        %5812 = vmatprep.subr.bf16.mxu0 0
        %5813 = vmatpush1.bf16.msra.mxu0 %v4746
        %5814 = vmatprep.subr.bf16.mxu0 0
        %5815 = vmatpush1.bf16.msra.mxu0 %v4749
        %5816 = vmatprep.mubr.bf16.mxu0 %v3110
        %5817 = vmatmul.mubr.bf16.gmra.mrb[0].mxu0 %v3109
        %v5818 = vpop.f32.mrb[0].mxu0
        %v5819 = vadd.f32 %v5754, %v5818
        %v5820 = vpop.f32.mrb[0].mxu0
        %v5821 = vpop.f32.mrb[0].mxu0
        %v5822 = vadd.f32 %v5757, %v5821
        %v5823 = vpop.f32.mrb[0].mxu0
        %5824 = vmatprep.mubr.bf16.mxu0 %v3122
        %5825 = vmatmul.mubr.bf16.gmra.mrb[0].mxu0 %v3121
        %v5826 = vpop.f32.mrb[0].mxu0
        %v5827 = vadd.f32 %v5762, %v5826
        %v5828 = vpop.f32.mrb[0].mxu0
        %v5829 = vpop.f32.mrb[0].mxu0
        %v5830 = vadd.f32 %v5765, %v5829
        %v5831 = vpop.f32.mrb[0].mxu0
        %5832 = vmatprep.mubr.bf16.mxu0 %v3134
        %5833 = vmatmul.mubr.bf16.gmra.mrb[0].mxu0 %v3133
        %v5834 = vpop.f32.mrb[0].mxu0
        %v5835 = vadd.f32 %v5770, %v5834
        %v5836 = vpop.f32.mrb[0].mxu0
        %v5837 = vpop.f32.mrb[0].mxu0
        %v5838 = vadd.f32 %v5773, %v5837
        %v5839 = vpop.f32.mrb[0].mxu0
        %5840 = vmatprep.mubr.bf16.mxu0 %v3146
        %5841 = vmatmul.mubr.bf16.gmra.mrb[0].mxu0 %v3145
        %v5842 = vpop.f32.mrb[0].mxu0
        %v5843 = vadd.f32 %v5778, %v5842
        %v5844 = vpop.f32.mrb[0].mxu0
        %v5845 = vpop.f32.mrb[0].mxu0
        %v5846 = vadd.f32 %v5781, %v5845
        %v5847 = vpop.f32.mrb[0].mxu0
        %5848 = vdwg.mxu0
        %5849 = vmatprep.subr.bf16.mxu0 0
        %5850 = vmatpush1.bf16.msra.mxu0 %v4752
        %5851 = vmatprep.subr.bf16.mxu0 0
        %5852 = vmatpush1.bf16.msra.mxu0 %v4755
        %5853 = vmatprep.subr.bf16.mxu0 0
        %5854 = vmatpush1.bf16.msra.mxu0 %v4758
        %5855 = vmatprep.subr.bf16.mxu0 0
        %5856 = vmatpush1.bf16.msra.mxu0 %v4761
        %5857 = vmatprep.subr.bf16.mxu0 0
        %5858 = vmatpush1.bf16.msra.mxu0 %v4764
        %5859 = vmatprep.subr.bf16.mxu0 0
        %5860 = vmatpush1.bf16.msra.mxu0 %v4767
        %5861 = vmatprep.subr.bf16.mxu0 0
        %5862 = vmatpush1.bf16.msra.mxu0 %v4770
        %5863 = vmatprep.subr.bf16.mxu0 0
        %5864 = vmatpush1.bf16.msra.mxu0 %v4773
        %5865 = vmatprep.subr.bf16.mxu0 0
        %5866 = vmatpush1.bf16.msra.mxu0 %v4776
        %5867 = vmatprep.subr.bf16.mxu0 0
        %5868 = vmatpush1.bf16.msra.mxu0 %v4779
        %5869 = vmatprep.subr.bf16.mxu0 0
        %5870 = vmatpush1.bf16.msra.mxu0 %v4782
        %5871 = vmatprep.subr.bf16.mxu0 0
        %5872 = vmatpush1.bf16.msra.mxu0 %v4785
        %5873 = vmatprep.subr.bf16.mxu0 0
        %5874 = vmatpush1.bf16.msra.mxu0 %v4788
        %5875 = vmatprep.subr.bf16.mxu0 0
        %5876 = vmatpush1.bf16.msra.mxu0 %v4791
        %5877 = vmatprep.subr.bf16.mxu0 0
        %5878 = vmatpush1.bf16.msra.mxu0 %v4794
        %5879 = vmatprep.subr.bf16.mxu0 0
        %5880 = vmatpush1.bf16.msra.mxu0 %v4797
        %5881 = vmatprep.mubr.bf16.mxu0 %v3112
        %5882 = vmatmul.mubr.bf16.gmra.mrb[0].mxu0 %v3111
        %v5883 = vpop.f32.mrb[0].mxu0
        %v5884 = vadd.f32 %v5819, %v5883
        %v5885 = vpop.f32.mrb[0].mxu0
        %v5886 = vpop.f32.mrb[0].mxu0
        %v5887 = vadd.f32 %v5822, %v5886
        %v5888 = vpop.f32.mrb[0].mxu0
        %5889 = vmatprep.mubr.bf16.mxu0 %v3124
        %5890 = vmatmul.mubr.bf16.gmra.mrb[0].mxu0 %v3123
        %v5891 = vpop.f32.mrb[0].mxu0
        %v5892 = vadd.f32 %v5827, %v5891
        %v5893 = vpop.f32.mrb[0].mxu0
        %v5894 = vpop.f32.mrb[0].mxu0
        %v5895 = vadd.f32 %v5830, %v5894
        %v5896 = vpop.f32.mrb[0].mxu0
        %5897 = vmatprep.mubr.bf16.mxu0 %v3136
        %5898 = vmatmul.mubr.bf16.gmra.mrb[0].mxu0 %v3135
        %v5899 = vpop.f32.mrb[0].mxu0
        %v5900 = vadd.f32 %v5835, %v5899
        %v5901 = vpop.f32.mrb[0].mxu0
        %v5902 = vpop.f32.mrb[0].mxu0
        %v5903 = vadd.f32 %v5838, %v5902
        %v5904 = vpop.f32.mrb[0].mxu0
        %5905 = vmatprep.mubr.bf16.mxu0 %v3148
        %5906 = vmatmul.mubr.bf16.gmra.mrb[0].mxu0 %v3147
        %v5907 = vpop.f32.mrb[0].mxu0
        %v5908 = vadd.f32 %v5843, %v5907
        %v5909 = vpop.f32.mrb[0].mxu0
        %v5910 = vpop.f32.mrb[0].mxu0
        %v5911 = vadd.f32 %v5846, %v5910
        %v5912 = vpop.f32.mrb[0].mxu0
        %5913 = vdwg.mxu0
        %5914 = vst [vmem:[%s297] sm:$0xff] %v5486
        %5915 = vst [vmem:[%s297 + $0x8] sm:$0xff] %v5488
        %5916 = vst [vmem:[%s297 + $0x10] sm:$0xff] %v5884
        %5917 = vst [vmem:[%s297 + $0x18] sm:$0xff] %v5490
        %5918 = vst [vmem:[%s297 + $0x20] sm:$0xff] %v5492
        %5919 = vst [vmem:[%s297 + $0x28] sm:$0xff] %v5887
        %5920 = vst [vmem:[%s297 + $0x30] sm:$0xff] %v5496
        %5921 = vst [vmem:[%s297 + $0x38] sm:$0xff] %v5498
        %5922 = vst [vmem:[%s297 + $0x40] sm:$0xff] %v5892
        %5923 = vst [vmem:[%s297 + $0x48] sm:$0xff] %v5500
        %5924 = vst [vmem:[%s297 + $0x50] sm:$0xff] %v5502
        %5925 = vst [vmem:[%s297 + $0x58] sm:$0xff] %v5895
        %5926 = vst [vmem:[%s297 + $0x60] sm:$0xff] %v5506
        %5927 = vst [vmem:[%s297 + $0x68] sm:$0xff] %v5508
        %5928 = vst [vmem:[%s297 + $0x70] sm:$0xff] %v5900
        %5929 = vst [vmem:[%s297 + $0x78] sm:$0xff] %v5510
        %5930 = vst [vmem:[%s297 + $0x80] sm:$0xff] %v5512
        %5931 = vst [vmem:[%s297 + $0x88] sm:$0xff] %v5903
        %5932 = vst [vmem:[%s297 + $0x90] sm:$0xff] %v5516
        %5933 = vst [vmem:[%s297 + $0x98] sm:$0xff] %v5518
        %5934 = vst [vmem:[%s297 + $0xa0] sm:$0xff] %v5908
        %5935 = vst [vmem:[%s297 + $0xa8] sm:$0xff] %v5520
        %5936 = vst [vmem:[%s297 + $0xb0] sm:$0xff] %v5522
        %5937 = vst [vmem:[%s297 + $0xb8] sm:$0xff] %v5911
        %s5938 = sand.u32 %s142, 1
        %s5939 = scalar_lea.sflag [#allocation4], %s5938
        %s5940 = sand.u32 %s142, 1
        %s5941 = smul.addr %s5940, 192
        %s5942 = scalar_lea.vmem [#allocation11], %s5941
        // Predicated region
        $region61: #{_feedforward_impl.1} parent=39 // pred_check
          %p5943 = pneg %p152
        $region62: #{_feedforward_impl.1} parent=39 // pred_check_branch
          %5945 = sbr.rel (%p5943) target = $region64
        $region63: #{_feedforward_impl.1} parent=39 // pred_region
          %s5946 = smul.u32 8, %s24
          %s5948 = ssub.s32 3072, 3072
          %5949 = vsyncadd %s5939, %s5948
          %s5950 = smul.addr %s5946, 3
          %s5951 = smul.addr %s5950, 128
          %s5952 = scalar_lea.hbm %s5, %s5951
          %s5953 = sshll.u32 %s5942, 4
          %s5954 = int_to_ptr.vmem [resolvable:$true] %s5953
          %5959 = dma.vmem_to_hbm [thread:$0]  %s5954, 3072, %s5952, %s5939, 384, 384, 24
        $region64: #{_feedforward_impl.1} parent=39 // pred_fallthru
          _
      $region40: #{_feedforward_impl.1} parent=5 // pred_fallthru
        _
      %p5960 = scmp.le.s32.totalorder 2, %s19
      // Predicated region
      $region65: #{_feedforward_impl.1} parent=5 // pred_check
        %p5961 = pneg %p5960
      $region66: #{_feedforward_impl.1} parent=5 // pred_check_branch
        %5963 = sbr.rel (%p5961) target = $region68
      $region67: #{_feedforward_impl.1} parent=5 // pred_region
        %s5964 = ssub.s32 %s19, 2
        // Predicated region
        $region69: #{_feedforward_impl.1} parent=67 // pred_check
          %p5965 = pneg %p158
        $region70: #{_feedforward_impl.1} parent=67 // pred_check_branch
          %5967 = sbr.rel (%p5965) target = $region72
        $region71: #{_feedforward_impl.1} parent=67 // pred_region
          %s5968 = sand.u32 %s143, 1
          %s5969 = scalar_lea.sflag [#allocation4], %s5968
          %s5970 = sand.u32 %s143, 1
          %s5971 = smul.addr %s5970, 192
          %s5972 = scalar_lea.vmem [#allocation11], %s5971
          %5973 = dma.done %s5969, 3072
        $region72: #{_feedforward_impl.1} parent=67 // pred_fallthru
          _
      $region68: #{_feedforward_impl.1} parent=5 // pred_fallthru
        _
    $region6: #{_feedforward_impl.1} parent=1 // loop_footer
      %s23 = sadd.s32 1, %s19
    $region7: #{_feedforward_impl.1} parent=1 // loop_footer_branch
      %18 = sbr.rel target = $region3
    $region8: #{_feedforward_impl.1} parent=1 // loop_exit
      _
    %5974 = vsyncpa [#allocation3], 1
    %s5975 = scalar_lea.sflag [#allocation3], 1
    %5976 = vsyncpa %s5975, 1
    %5977 = vsyncpa [#allocation6], 1
    %5978 = vsyncpa [#allocation9], 1
    %5979 = vsyncpa [#allocation4], 1
    %s5980 = scalar_lea.sflag [#allocation4], 1
    %5981 = vsyncpa %s5980, 1

</llo_original>
